<compile_context>
chip_gen: v7x
topology: tpu7x:2x2x1
jax: 0.10.0
libtpu: 0.0.40
codegen_flags: <defaults>
</compile_context>

<pallas_src>
import functools

import jax
import jax.numpy as jnp
from jax import lax
from jax.experimental import pallas as pl
from jax.experimental.pallas import tpu as pltpu

LANE = 128        # lane width of a vreg
SUBLANE = 8       # sublane count of a vreg
NEG_BIG = -1e30   # bias for padded output lanes -> exp() underflows to 0


def _round_up(x, m):
    return (x + m - 1) // m * m


# ---------------------------------------------------------------------------
# Fused kernel: sequential LSTM recurrence + per-chunk Linear/log_softmax.
# One grid step = (one batch tile, one chunk of `chunk` time steps).
# h/c carried across chunks in VMEM scratch; per-step hidden states are
# stashed in a VMEM slab and projected once per chunk in the epilogue
# (off the serial dependency chain, in MXU slack).
# ---------------------------------------------------------------------------
def _lstm_fused_kernel(xw_ref, whh_ref, h0_ref, c0_ref, wl_ref, bl_ref,
                       lp_ref, hN_ref, cN_ref,
                       h_scr, c_scr, hs_scr,
                       *, chunk, seq_len, hp, bt, masked, unroll, rec_dtype):
    c_idx = pl.program_id(1)
    n_chunks = pl.num_programs(1)

    @pl.when(c_idx == 0)
    def _():
        h_scr[...] = h0_ref[...]
        c_scr[...] = c0_ref[...]

    def make_step(apply_mask):
        def step(t, carry):
            h_in = h_scr[...]
            if rec_dtype != jnp.float32:
                # Large-Hp path (v7x VMEM / MXU throughput): bf16 operands,
                # f32 accumulate.
                h_in = h_in.astype(rec_dtype)
            gates = (jnp.dot(h_in, whh_ref[...],
                             preferred_element_type=jnp.float32)
                     + xw_ref[t])                                  # (Bt, 4*Hp)

            # Gate order i, f, g, o; each block is 128-lane aligned (width hp).
            i_g = jax.nn.sigmoid(gates[:, 0 * hp:1 * hp])
            f_g = jax.nn.sigmoid(gates[:, 1 * hp:2 * hp])
            g_g = jnp.tanh(gates[:, 2 * hp:3 * hp])
            o_g = jax.nn.sigmoid(gates[:, 3 * hp:4 * hp])

            c_new = f_g * c_scr[...] + i_g * g_g
            h_new = o_g * jnp.tanh(c_new)

            if apply_mask:  # only emitted for the last chunk when S was padded
                valid = (c_idx * chunk + t) < seq_len
                c_new = jnp.where(valid, c_new, c_scr[...])
                h_new = jnp.where(valid, h_new, h_scr[...])

            c_scr[...] = c_new
            h_scr[...] = h_new
            row = pl.multiple_of(t * bt, bt)       # sublane-aligned slab write
            hs_scr[pl.ds(row, bt), :] = h_new
            return carry
        return step

    if masked:
        # Masking selects only touch the serial critical path in the last
        # chunk; all other chunks run the mask-free body.
        is_last = c_idx == n_chunks - 1

        @pl.when(c_idx < n_chunks - 1)
        def _():
            lax.fori_loop(0, chunk, make_step(False), 0, unroll=unroll)

        @pl.when(is_last)
        def _():
            lax.fori_loop(0, chunk, make_step(True), 0, unroll=unroll)
    else:
        lax.fori_loop(0, chunk, make_step(False), 0, unroll=unroll)

    # ---- Fused projection + log_softmax epilogue (per chunk, lane-dense) ----
    # TODO(synk): for very large vocab O, tile this over Op with a two-pass
    # log-softmax instead of a single (chunk*Bt, Op) block.
    logits = (jnp.dot(hs_scr[...], wl_ref[...],
                      preferred_element_type=jnp.float32)
              + bl_ref[...])                                       # (Tc*Bt, Op)
    mx = jnp.max(logits, axis=-1, keepdims=True)
    shifted = logits - mx
    lse = jnp.log(jnp.sum(jnp.exp(shifted), axis=-1, keepdims=True))
    lp = shifted - lse
    lp_ref[...] = lp.reshape(lp_ref.shape).astype(lp_ref.dtype)

    # Final state; constant out-index across the chunk axis -> resident block,
    # only the last chunk writes it.
    @pl.when(c_idx == n_chunks - 1)
    def _():
        hN_ref[...] = h_scr[...]
        cN_ref[...] = c_scr[...]


def baseline_lstm_forward(input_ids, params, hidden_state=None, *,
                          time_chunk=32, rec_dtype=None):
    """input_ids: (B, S) int32 token ids in [0, input_size)."""
    B, S = input_ids.shape
    H = params["whh"].shape[0]
    O = params["wl"].shape[1]
    f32 = jnp.float32

    Bp = _round_up(max(B, 1), SUBLANE)       # pad batch to sublane count
    Hp = _round_up(max(H, 1), LANE)          # pad hidden to lane width
    Op = _round_up(max(O, 1), LANE)          # lane-dense output

    # Batch tiling: 2 tiles when they stay sublane-aligned -> the "parallel"
    # grid axis lets v7x run half the batch's recurrence per TensorCore.
    if Bp >= 2 * SUBLANE and Bp % (2 * SUBLANE) == 0:
        n_btiles = 2
    else:
        n_btiles = 1
    Bt = Bp // n_btiles

    Tc = min(S, time_chunk)                  # time steps per grid step (sweep)
    n_chunks = pl.cdiv(S, Tc)
    S_pad = n_chunks * Tc
    masked = (S_pad != S)

    # Bound vreg pressure: full unroll only while a gate is <= 2 vregs wide.
    unroll = True if Hp <= 256 else 4

    # Residency dtype of W_hh on the serial path: bf16 at large Hp (halves
    # VMEM residency on v7x's 64 MiB, faster MXU path), f32 otherwise.
    if rec_dtype is None:
        rec_dtype = f32 if Hp <= 512 else jnp.bfloat16

    def pad_gate_cols(w):
        # (..., 4H) -> (..., 4Hp): each gate block zero-padded from H to Hp
        parts = []
        for k in range(4):
            blk = w[..., k * H:(k + 1) * H]
            cfg = [(0, 0)] * (w.ndim - 1) + [(0, Hp - H)]
            parts.append(jnp.pad(blk, cfg))
        return jnp.concatenate(parts, axis=-1)

    # NOTE: weights are (I, 4H) / (H, 4H), gate order i,f,g,o.  Real torch
    # nn.LSTM checkpoints store (4H, I) / (4H, H) and need a transpose.
    wih_p = pad_gate_cols(params["wih"].astype(f32))                  # (I, 4Hp)
    b_p = pad_gate_cols(params["b"].astype(f32)).reshape(4 * Hp)      # (4Hp,)
    whh_p = pad_gate_cols(params["whh"].astype(f32))                  # (H, 4Hp)
    whh_p = jnp.pad(whh_p, ((0, Hp - H), (0, 0))).astype(rec_dtype)   # (Hp,4Hp)

    wl_p = jnp.pad(params["wl"].astype(f32), ((0, Hp - H), (0, Op - O)))
    if Op > O:
        bl_p = jnp.concatenate(
            [params["bl"].astype(f32).reshape(1, O),
             jnp.full((1, Op - O), NEG_BIG, f32)], axis=-1)
    else:
        bl_p = params["bl"].astype(f32).reshape(1, O)

    # One-hot embedding  ==>  x_t @ W_ih is just a row gather of W_ih.
    # (torch.squeeze(e) is a no-op for B, S > 1.)
    xw = jnp.take(wih_p, input_ids, axis=0) + b_p                     # (B, S, 4Hp)
    xw = jnp.transpose(xw, (1, 0, 2))                                 # (S, B, 4Hp)
    xw = jnp.pad(xw, ((0, S_pad - S), (0, Bp - B), (0, 0)))           # (S_pad, Bp, 4Hp)

    if hidden_state is None:
        h0 = jnp.zeros((Bp, Hp), f32)
        c0 = jnp.zeros((Bp, Hp), f32)
    else:
        h0_in, c0_in = hidden_state
        h0 = jnp.zeros((Bp, Hp), f32).at[:B, :H].set(
            h0_in.reshape(B, H).astype(f32))
        c0 = jnp.zeros((Bp, Hp), f32).at[:B, :H].set(
            c0_in.reshape(B, H).astype(f32))

    # Explicit VMEM budget (portable across v5e 16 MiB default scoped limit,
    # v6e 32 MiB default, v7x 64 MiB physical).
    rec_bytes = jnp.dtype(rec_dtype).itemsize
    est = (Hp * 4 * Hp * rec_bytes            # resident W_hh
           + (Hp * Op + Op) * 4               # resident W_l + b_l
           + 2 * Tc * Bt * 4 * Hp * 4         # xw chunk double buffer
           + 2 * Tc * Bt * Op * 4             # log-prob out double buffer
           + 8 * Bt * Hp * 4                  # h0/c0/hN/cN buffers
           + (Tc + 2) * Bt * Hp * 4)          # hs slab + h/c carry scratch
    vmem_limit = int(min(max(2 * est + (2 << 20), 32 << 20), 64 << 20))

    kernel = functools.partial(
        _lstm_fused_kernel,
        chunk=Tc, seq_len=S, hp=Hp, bt=Bt, masked=masked,
        unroll=unroll, rec_dtype=rec_dtype)

    lp, hN, cN = pl.pallas_call(
        kernel,
        out_shape=(jax.ShapeDtypeStruct((S_pad, Bp, Op), f32),
                   jax.ShapeDtypeStruct((Bp, Hp), f32),
                   jax.ShapeDtypeStruct((Bp, Hp), f32)),
        grid_spec=pltpu.PrefetchScalarGridSpec(
            num_scalar_prefetch=0,
            grid=(n_btiles, n_chunks),
            in_specs=[
                pl.BlockSpec((Tc, Bt, 4 * Hp), lambda b, c: (c, b, 0)),  # xW
                pl.BlockSpec((Hp, 4 * Hp), lambda b, c: (0, 0)),         # W_hh
                pl.BlockSpec((Bt, Hp), lambda b, c: (b, 0)),             # h0
                pl.BlockSpec((Bt, Hp), lambda b, c: (b, 0)),             # c0
                pl.BlockSpec((Hp, Op), lambda b, c: (0, 0)),             # W_l
                pl.BlockSpec((1, Op), lambda b, c: (0, 0)),              # b_l
            ],
            out_specs=(
                pl.BlockSpec((Tc, Bt, Op), lambda b, c: (c, b, 0)),      # log-probs
                pl.BlockSpec((Bt, Hp), lambda b, c: (b, 0)),             # h_n
                pl.BlockSpec((Bt, Hp), lambda b, c: (b, 0)),             # c_n
            ),
            scratch_shapes=[pltpu.VMEM((Bt, Hp), f32),                   # h carry
                            pltpu.VMEM((Bt, Hp), f32),                   # c carry
                            pltpu.VMEM((Tc * Bt, Hp), f32)],             # hs slab
        ),
        compiler_params=pltpu.CompilerParams(
            dimension_semantics=("parallel", "arbitrary"),  # batch || , time serial
            vmem_limit_bytes=vmem_limit),
    )(xw, whh_p, h0, c0, wl_p, bl_p)

    log_probs = lp[:S, :B, :O]
    log_probs = jnp.transpose(log_probs, (1, 0, 2))       # (B, S, O) batch_first
    hidden = (hN[:B, :H][None], cN[:B, :H][None])         # (num_layers=1, B, H)
    return log_probs, hidden


def init_params(key, input_size, hidden_size, output_size):
    """Deterministic init matching nn.LSTM / nn.Linear U(-1/sqrt(H), 1/sqrt(H))."""
    ks = jax.random.split(key, 6)
    bound = 1.0 / float(jnp.sqrt(float(hidden_size)))

    def u(k, shape):
        return jax.random.uniform(k, shape, jnp.float32, -bound, bound)

    wih = u(ks[0], (input_size, 4 * hidden_size))
    whh = u(ks[1], (hidden_size, 4 * hidden_size))
    b_ih = u(ks[2], (4 * hidden_size,))
    b_hh = u(ks[3], (4 * hidden_size,))
    wl = u(ks[4], (hidden_size, output_size))
    bl = u(ks[5], (output_size,))
    return dict(wih=wih, whh=whh, b=(b_ih + b_hh)[None, :],
                wl=wl, bl=bl[None, :])


def ref_forward(input_ids, params):
    """Pure-JAX reference (lax.scan LSTM) for correctness checking."""
    B, S = input_ids.shape
    I = params["wih"].shape[0]
    H = params["whh"].shape[0]
    hi = lax.Precision.HIGHEST
    e = jax.nn.one_hot(input_ids, I, dtype=jnp.float32)
    x = jnp.transpose(e, (1, 0, 2))
    h = jnp.zeros((B, H), jnp.float32)
    c = jnp.zeros((B, H), jnp.float32)

    def step(carry, xt):
        h, c = carry
        g = (jnp.dot(xt, params["wih"], precision=hi)
             + jnp.dot(h, params["whh"], precision=hi) + params["b"])
        i = jax.nn.sigmoid(g[:, :H])
        f = jax.nn.sigmoid(g[:, H:2 * H])
        gg = jnp.tanh(g[:, 2 * H:3 * H])
        o = jax.nn.sigmoid(g[:, 3 * H:])
        c = f * c + i * gg
        h = o * jnp.tanh(c)
        return (h, c), h

    (h, c), hs = lax.scan(step, (h, c), x)
    logits = jnp.dot(hs, params["wl"], precision=hi) + params["bl"]
    lp = jax.nn.log_softmax(logits, axis=-1)
    return jnp.transpose(lp, (1, 0, 2)), (h[None], c[None])


if __name__ == "__main__":
    key = jax.random.PRNGKey(0)
    k_param, k_data = jax.random.split(key)

    input_size, output_size, hidden_size = 10, 10, 32
    B, S = 2, 8

    params = init_params(k_param, input_size, hidden_size, output_size)
    input_ids = jax.random.randint(k_data, (B, S), 0, input_size, dtype=jnp.int32)

    fwd = jax.jit(lambda ids, p: baseline_lstm_forward(ids, p))
    log_probs, (hN, cN) = fwd(input_ids, params)
    jax.block_until_ready(log_probs)

    ref_lp, (ref_h, ref_c) = ref_forward(input_ids, params)
    assert jnp.allclose(log_probs, ref_lp, atol=5e-5, rtol=5e-5)
    assert jnp.allclose(hN, ref_h, atol=5e-5, rtol=5e-5)
    assert jnp.allclose(cN, ref_c, atol=5e-5, rtol=5e-5)

    print("KERNEL_OK")
</pallas_src>

<mosaic_0001>
module attributes {stable_mosaic.version = 11 : i64} {
  func.func @_lstm_fused_kernel(%arg0: i32, %arg1: i32, %arg2: memref<8x8x512xf32, #tpu.memory_space<vmem>>, %arg3: memref<128x512xf32, #tpu.memory_space<vmem>>, %arg4: memref<8x128xf32, #tpu.memory_space<vmem>>, %arg5: memref<8x128xf32, #tpu.memory_space<vmem>>, %arg6: memref<128x128xf32, #tpu.memory_space<vmem>>, %arg7: memref<1x128xf32, #tpu.memory_space<vmem>>, %arg8: memref<8x8x128xf32, #tpu.memory_space<vmem>>, %arg9: memref<8x128xf32, #tpu.memory_space<vmem>>, %arg10: memref<8x128xf32, #tpu.memory_space<vmem>>, %arg11: memref<8x128xf32, #tpu.memory_space<vmem>>, %arg12: memref<8x128xf32, #tpu.memory_space<vmem>>, %arg13: memref<64x128xf32, #tpu.memory_space<vmem>>) attributes {dimension_semantics = [#tpu.dimension_semantics<parallel>, #tpu.dimension_semantics<arbitrary>], iteration_bounds = array<i64: 1, 1>, scalar_prefetch = 0 : i64, scratch_operands = 3 : i64, tpu.core_type = #tpu.core_type<tc>, window_params = [{transform_indices = @transform_0, window_bounds = array<i64: 8, 8, 512>}, {pipeline_mode = #tpu.pipeline_mode<synchronous>, transform_indices = @transform_1, window_bounds = array<i64: 128, 512>}, {transform_indices = @transform_2, window_bounds = array<i64: 8, 128>}, {transform_indices = @transform_3, window_bounds = array<i64: 8, 128>}, {pipeline_mode = #tpu.pipeline_mode<synchronous>, transform_indices = @transform_4, window_bounds = array<i64: 128, 128>}, {pipeline_mode = #tpu.pipeline_mode<synchronous>, transform_indices = @transform_5, window_bounds = array<i64: 1, 128>}, {transform_indices = @transform_6, window_bounds = array<i64: 8, 8, 128>}, {transform_indices = @transform_7, window_bounds = array<i64: 8, 128>}, {transform_indices = @transform_8, window_bounds = array<i64: 8, 128>}]} {
    %c0_i32 = arith.constant 0 : i32
    %0 = arith.cmpi eq, %arg1, %c0_i32 : i32
    %1 = arith.extui %0 : i1 to i32
    %c0_i32_0 = arith.constant 0 : i32
    %2 = arith.cmpi ne, %1, %c0_i32_0 : i32
    scf.if %2 {
      %c0_158 = arith.constant 0 : index
      %c0_159 = arith.constant 0 : index
      %336 = vector.load %arg4[%c0_158, %c0_159] : memref<8x128xf32, #tpu.memory_space<vmem>>, vector<8x128xf32>
      %c0_160 = arith.constant 0 : index
      %c0_161 = arith.constant 0 : index
      %337 = vector.load %arg11[%c0_160, %c0_161] : memref<8x128xf32, #tpu.memory_space<vmem>>, vector<8x128xf32>
      tpu.vector_store %arg11[%c0_160, %c0_161], %336 {strides = array<i32>} : memref<8x128xf32, #tpu.memory_space<vmem>>, vector<8x128xf32>,
      %c0_162 = arith.constant 0 : index
      %c0_163 = arith.constant 0 : index
      %338 = vector.load %arg5[%c0_162, %c0_163] : memref<8x128xf32, #tpu.memory_space<vmem>>, vector<8x128xf32>
      %c0_164 = arith.constant 0 : index
      %c0_165 = arith.constant 0 : index
      %339 = vector.load %arg12[%c0_164, %c0_165] : memref<8x128xf32, #tpu.memory_space<vmem>>, vector<8x128xf32>
      tpu.vector_store %arg12[%c0_164, %c0_165], %338 {strides = array<i32>} : memref<8x128xf32, #tpu.memory_space<vmem>>, vector<8x128xf32>,
    } else {
    }
    %c0_i32_1 = arith.constant 0 : i32
    %c0 = arith.constant 0 : index
    %c0_2 = arith.constant 0 : index
    %3 = vector.load %arg11[%c0, %c0_2] : memref<8x128xf32, #tpu.memory_space<vmem>>, vector<8x128xf32>
    %c0_3 = arith.constant 0 : index
    %c0_4 = arith.constant 0 : index
    %4 = vector.load %arg3[%c0_3, %c0_4] : memref<128x512xf32, #tpu.memory_space<vmem>>, vector<128x512xf32>
    %cst = arith.constant dense<0.000000e+00> : vector<8x512xf32>
    %5 = tpu.matmul %3, %4, %cst {dimension_numbers = #tpu.dot_dimension_numbers<[1], [0], [0], [1], [0, 0, 1, 1], [], []>} : vector<8x128xf32>, vector<128x512xf32>, vector<8x512xf32> -> vector<8x512xf32>
    %6 = arith.index_cast %c0_i32_1 : i32 to index
    %c0_5 = arith.constant 0 : index
    %c0_6 = arith.constant 0 : index
    %7 = vector.load %arg2[%6, %c0_5, %c0_6] : memref<8x8x512xf32, #tpu.memory_space<vmem>>, vector<1x8x512xf32>
    %8 = vector.shape_cast %7 : vector<1x8x512xf32> to vector<8x512xf32>
    %9 = arith.addf %5, %8 : vector<8x512xf32>
    %10 = vector.extract_strided_slice %9 {offsets = [0, 0], sizes = [8, 128], strides = [1, 1]} : vector<8x512xf32> to vector<8x128xf32>
    %11 = arith.negf %10 : vector<8x128xf32>
    %12 = math.exp %11 : vector<8x128xf32>
    %cst_7 = arith.constant 1.000000e+00 : f32
    %13 = vector.broadcast %cst_7 : f32 to vector<8x128xf32>
    %14 = arith.addf %13, %12 : vector<8x128xf32>
    %15 = arith.divf %13, %14 : vector<8x128xf32>
    %16 = vector.extract_strided_slice %9 {offsets = [0, 128], sizes = [8, 128], strides = [1, 1]} : vector<8x512xf32> to vector<8x128xf32>
    %17 = arith.negf %16 : vector<8x128xf32>
    %18 = math.exp %17 : vector<8x128xf32>
    %cst_8 = arith.constant 1.000000e+00 : f32
    %19 = vector.broadcast %cst_8 : f32 to vector<8x128xf32>
    %20 = arith.addf %19, %18 : vector<8x128xf32>
    %21 = arith.divf %19, %20 : vector<8x128xf32>
    %22 = vector.extract_strided_slice %9 {offsets = [0, 256], sizes = [8, 128], strides = [1, 1]} : vector<8x512xf32> to vector<8x128xf32>
    %23 = math.tanh %22 : vector<8x128xf32>
    %24 = vector.extract_strided_slice %9 {offsets = [0, 384], sizes = [8, 128], strides = [1, 1]} : vector<8x512xf32> to vector<8x128xf32>
    %25 = arith.negf %24 : vector<8x128xf32>
    %26 = math.exp %25 : vector<8x128xf32>
    %cst_9 = arith.constant 1.000000e+00 : f32
    %27 = vector.broadcast %cst_9 : f32 to vector<8x128xf32>
    %28 = arith.addf %27, %26 : vector<8x128xf32>
    %29 = arith.divf %27, %28 : vector<8x128xf32>
    %c0_10 = arith.constant 0 : index
    %c0_11 = arith.constant 0 : index
    %30 = vector.load %arg12[%c0_10, %c0_11] : memref<8x128xf32, #tpu.memory_space<vmem>>, vector<8x128xf32>
    %31 = arith.mulf %21, %30 : vector<8x128xf32>
    %32 = arith.mulf %15, %23 : vector<8x128xf32>
    %33 = arith.addf %31, %32 : vector<8x128xf32>
    %34 = math.tanh %33 : vector<8x128xf32>
    %35 = arith.mulf %29, %34 : vector<8x128xf32>
    %c0_12 = arith.constant 0 : index
    %c0_13 = arith.constant 0 : index
    %36 = vector.load %arg12[%c0_12, %c0_13] : memref<8x128xf32, #tpu.memory_space<vmem>>, vector<8x128xf32>
    tpu.vector_store %arg12[%c0_12, %c0_13], %33 {strides = array<i32>} : memref<8x128xf32, #tpu.memory_space<vmem>>, vector<8x128xf32>,
    %c0_14 = arith.constant 0 : index
    %c0_15 = arith.constant 0 : index
    %37 = vector.load %arg11[%c0_14, %c0_15] : memref<8x128xf32, #tpu.memory_space<vmem>>, vector<8x128xf32>
    tpu.vector_store %arg11[%c0_14, %c0_15], %35 {strides = array<i32>} : memref<8x128xf32, #tpu.memory_space<vmem>>, vector<8x128xf32>,
    %c8_i32 = arith.constant 8 : i32
    %38 = arith.muli %c0_i32_1, %c8_i32 : i32
    %39 = tpu.assume_multiple %38, 8 : i32
    %40 = arith.index_cast %39 : i32 to index
    %c0_16 = arith.constant 0 : index
    %41 = vector.load %arg13[%40, %c0_16] : memref<64x128xf32, #tpu.memory_space<vmem>>, vector<8x128xf32>
    tpu.vector_store %arg13[%40, %c0_16], %35 {strides = array<i32>} : memref<64x128xf32, #tpu.memory_space<vmem>>, vector<8x128xf32>,
    %c1_i32 = arith.constant 1 : i32
    %c0_17 = arith.constant 0 : index
    %c0_18 = arith.constant 0 : index
    %42 = vector.load %arg11[%c0_17, %c0_18] : memref<8x128xf32, #tpu.memory_space<vmem>>, vector<8x128xf32>
    %c0_19 = arith.constant 0 : index
    %c0_20 = arith.constant 0 : index
    %43 = vector.load %arg3[%c0_19, %c0_20] : memref<128x512xf32, #tpu.memory_space<vmem>>, vector<128x512xf32>
    %cst_21 = arith.constant dense<0.000000e+00> : vector<8x512xf32>
    %44 = tpu.matmul %42, %43, %cst_21 {dimension_numbers = #tpu.dot_dimension_numbers<[1], [0], [0], [1], [0, 0, 1, 1], [], []>} : vector<8x128xf32>, vector<128x512xf32>, vector<8x512xf32> -> vector<8x512xf32>
    %45 = arith.index_cast %c1_i32 : i32 to index
    %c0_22 = arith.constant 0 : index
    %c0_23 = arith.constant 0 : index
    %46 = vector.load %arg2[%45, %c0_22, %c0_23] : memref<8x8x512xf32, #tpu.memory_space<vmem>>, vector<1x8x512xf32>
    %47 = vector.shape_cast %46 : vector<1x8x512xf32> to vector<8x512xf32>
    %48 = arith.addf %44, %47 : vector<8x512xf32>
    %49 = vector.extract_strided_slice %48 {offsets = [0, 0], sizes = [8, 128], strides = [1, 1]} : vector<8x512xf32> to vector<8x128xf32>
    %50 = arith.negf %49 : vector<8x128xf32>
    %51 = math.exp %50 : vector<8x128xf32>
    %cst_24 = arith.constant 1.000000e+00 : f32
    %52 = vector.broadcast %cst_24 : f32 to vector<8x128xf32>
    %53 = arith.addf %52, %51 : vector<8x128xf32>
    %54 = arith.divf %52, %53 : vector<8x128xf32>
    %55 = vector.extract_strided_slice %48 {offsets = [0, 128], sizes = [8, 128], strides = [1, 1]} : vector<8x512xf32> to vector<8x128xf32>
    %56 = arith.negf %55 : vector<8x128xf32>
    %57 = math.exp %56 : vector<8x128xf32>
    %cst_25 = arith.constant 1.000000e+00 : f32
    %58 = vector.broadcast %cst_25 : f32 to vector<8x128xf32>
    %59 = arith.addf %58, %57 : vector<8x128xf32>
    %60 = arith.divf %58, %59 : vector<8x128xf32>
    %61 = vector.extract_strided_slice %48 {offsets = [0, 256], sizes = [8, 128], strides = [1, 1]} : vector<8x512xf32> to vector<8x128xf32>
    %62 = math.tanh %61 : vector<8x128xf32>
    %63 = vector.extract_strided_slice %48 {offsets = [0, 384], sizes = [8, 128], strides = [1, 1]} : vector<8x512xf32> to vector<8x128xf32>
    %64 = arith.negf %63 : vector<8x128xf32>
    %65 = math.exp %64 : vector<8x128xf32>
    %cst_26 = arith.constant 1.000000e+00 : f32
    %66 = vector.broadcast %cst_26 : f32 to vector<8x128xf32>
    %67 = arith.addf %66, %65 : vector<8x128xf32>
    %68 = arith.divf %66, %67 : vector<8x128xf32>
    %c0_27 = arith.constant 0 : index
    %c0_28 = arith.constant 0 : index
    %69 = vector.load %arg12[%c0_27, %c0_28] : memref<8x128xf32, #tpu.memory_space<vmem>>, vector<8x128xf32>
    %70 = arith.mulf %60, %69 : vector<8x128xf32>
    %71 = arith.mulf %54, %62 : vector<8x128xf32>
    %72 = arith.addf %70, %71 : vector<8x128xf32>
    %73 = math.tanh %72 : vector<8x128xf32>
    %74 = arith.mulf %68, %73 : vector<8x128xf32>
    %c0_29 = arith.constant 0 : index
    %c0_30 = arith.constant 0 : index
    %75 = vector.load %arg12[%c0_29, %c0_30] : memref<8x128xf32, #tpu.memory_space<vmem>>, vector<8x128xf32>
    tpu.vector_store %arg12[%c0_29, %c0_30], %72 {strides = array<i32>} : memref<8x128xf32, #tpu.memory_space<vmem>>, vector<8x128xf32>,
    %c0_31 = arith.constant 0 : index
    %c0_32 = arith.constant 0 : index
    %76 = vector.load %arg11[%c0_31, %c0_32] : memref<8x128xf32, #tpu.memory_space<vmem>>, vector<8x128xf32>
    tpu.vector_store %arg11[%c0_31, %c0_32], %74 {strides = array<i32>} : memref<8x128xf32, #tpu.memory_space<vmem>>, vector<8x128xf32>,
    %c8_i32_33 = arith.constant 8 : i32
    %77 = arith.muli %c1_i32, %c8_i32_33 : i32
    %78 = tpu.assume_multiple %77, 8 : i32
    %79 = arith.index_cast %78 : i32 to index
    %c0_34 = arith.constant 0 : index
    %80 = vector.load %arg13[%79, %c0_34] : memref<64x128xf32, #tpu.memory_space<vmem>>, vector<8x128xf32>
    tpu.vector_store %arg13[%79, %c0_34], %74 {strides = array<i32>} : memref<64x128xf32, #tpu.memory_space<vmem>>, vector<8x128xf32>,
    %c2_i32 = arith.constant 2 : i32
    %c0_35 = arith.constant 0 : index
    %c0_36 = arith.constant 0 : index
    %81 = vector.load %arg11[%c0_35, %c0_36] : memref<8x128xf32, #tpu.memory_space<vmem>>, vector<8x128xf32>
    %c0_37 = arith.constant 0 : index
    %c0_38 = arith.constant 0 : index
    %82 = vector.load %arg3[%c0_37, %c0_38] : memref<128x512xf32, #tpu.memory_space<vmem>>, vector<128x512xf32>
    %cst_39 = arith.constant dense<0.000000e+00> : vector<8x512xf32>
    %83 = tpu.matmul %81, %82, %cst_39 {dimension_numbers = #tpu.dot_dimension_numbers<[1], [0], [0], [1], [0, 0, 1, 1], [], []>} : vector<8x128xf32>, vector<128x512xf32>, vector<8x512xf32> -> vector<8x512xf32>
    %84 = arith.index_cast %c2_i32 : i32 to index
    %c0_40 = arith.constant 0 : index
    %c0_41 = arith.constant 0 : index
    %85 = vector.load %arg2[%84, %c0_40, %c0_41] : memref<8x8x512xf32, #tpu.memory_space<vmem>>, vector<1x8x512xf32>
    %86 = vector.shape_cast %85 : vector<1x8x512xf32> to vector<8x512xf32>
    %87 = arith.addf %83, %86 : vector<8x512xf32>
    %88 = vector.extract_strided_slice %87 {offsets = [0, 0], sizes = [8, 128], strides = [1, 1]} : vector<8x512xf32> to vector<8x128xf32>
    %89 = arith.negf %88 : vector<8x128xf32>
    %90 = math.exp %89 : vector<8x128xf32>
    %cst_42 = arith.constant 1.000000e+00 : f32
    %91 = vector.broadcast %cst_42 : f32 to vector<8x128xf32>
    %92 = arith.addf %91, %90 : vector<8x128xf32>
    %93 = arith.divf %91, %92 : vector<8x128xf32>
    %94 = vector.extract_strided_slice %87 {offsets = [0, 128], sizes = [8, 128], strides = [1, 1]} : vector<8x512xf32> to vector<8x128xf32>
    %95 = arith.negf %94 : vector<8x128xf32>
    %96 = math.exp %95 : vector<8x128xf32>
    %cst_43 = arith.constant 1.000000e+00 : f32
    %97 = vector.broadcast %cst_43 : f32 to vector<8x128xf32>
    %98 = arith.addf %97, %96 : vector<8x128xf32>
    %99 = arith.divf %97, %98 : vector<8x128xf32>
    %100 = vector.extract_strided_slice %87 {offsets = [0, 256], sizes = [8, 128], strides = [1, 1]} : vector<8x512xf32> to vector<8x128xf32>
    %101 = math.tanh %100 : vector<8x128xf32>
    %102 = vector.extract_strided_slice %87 {offsets = [0, 384], sizes = [8, 128], strides = [1, 1]} : vector<8x512xf32> to vector<8x128xf32>
    %103 = arith.negf %102 : vector<8x128xf32>
    %104 = math.exp %103 : vector<8x128xf32>
    %cst_44 = arith.constant 1.000000e+00 : f32
    %105 = vector.broadcast %cst_44 : f32 to vector<8x128xf32>
    %106 = arith.addf %105, %104 : vector<8x128xf32>
    %107 = arith.divf %105, %106 : vector<8x128xf32>
    %c0_45 = arith.constant 0 : index
    %c0_46 = arith.constant 0 : index
    %108 = vector.load %arg12[%c0_45, %c0_46] : memref<8x128xf32, #tpu.memory_space<vmem>>, vector<8x128xf32>
    %109 = arith.mulf %99, %108 : vector<8x128xf32>
    %110 = arith.mulf %93, %101 : vector<8x128xf32>
    %111 = arith.addf %109, %110 : vector<8x128xf32>
    %112 = math.tanh %111 : vector<8x128xf32>
    %113 = arith.mulf %107, %112 : vector<8x128xf32>
    %c0_47 = arith.constant 0 : index
    %c0_48 = arith.constant 0 : index
    %114 = vector.load %arg12[%c0_47, %c0_48] : memref<8x128xf32, #tpu.memory_space<vmem>>, vector<8x128xf32>
    tpu.vector_store %arg12[%c0_47, %c0_48], %111 {strides = array<i32>} : memref<8x128xf32, #tpu.memory_space<vmem>>, vector<8x128xf32>,
    %c0_49 = arith.constant 0 : index
    %c0_50 = arith.constant 0 : index
    %115 = vector.load %arg11[%c0_49, %c0_50] : memref<8x128xf32, #tpu.memory_space<vmem>>, vector<8x128xf32>
    tpu.vector_store %arg11[%c0_49, %c0_50], %113 {strides = array<i32>} : memref<8x128xf32, #tpu.memory_space<vmem>>, vector<8x128xf32>,
    %c8_i32_51 = arith.constant 8 : i32
    %116 = arith.muli %c2_i32, %c8_i32_51 : i32
    %117 = tpu.assume_multiple %116, 8 : i32
    %118 = arith.index_cast %117 : i32 to index
    %c0_52 = arith.constant 0 : index
    %119 = vector.load %arg13[%118, %c0_52] : memref<64x128xf32, #tpu.memory_space<vmem>>, vector<8x128xf32>
    tpu.vector_store %arg13[%118, %c0_52], %113 {strides = array<i32>} : memref<64x128xf32, #tpu.memory_space<vmem>>, vector<8x128xf32>,
    %c3_i32 = arith.constant 3 : i32
    %c0_53 = arith.constant 0 : index
    %c0_54 = arith.constant 0 : index
    %120 = vector.load %arg11[%c0_53, %c0_54] : memref<8x128xf32, #tpu.memory_space<vmem>>, vector<8x128xf32>
    %c0_55 = arith.constant 0 : index
    %c0_56 = arith.constant 0 : index
    %121 = vector.load %arg3[%c0_55, %c0_56] : memref<128x512xf32, #tpu.memory_space<vmem>>, vector<128x512xf32>
    %cst_57 = arith.constant dense<0.000000e+00> : vector<8x512xf32>
    %122 = tpu.matmul %120, %121, %cst_57 {dimension_numbers = #tpu.dot_dimension_numbers<[1], [0], [0], [1], [0, 0, 1, 1], [], []>} : vector<8x128xf32>, vector<128x512xf32>, vector<8x512xf32> -> vector<8x512xf32>
    %123 = arith.index_cast %c3_i32 : i32 to index
    %c0_58 = arith.constant 0 : index
    %c0_59 = arith.constant 0 : index
    %124 = vector.load %arg2[%123, %c0_58, %c0_59] : memref<8x8x512xf32, #tpu.memory_space<vmem>>, vector<1x8x512xf32>
    %125 = vector.shape_cast %124 : vector<1x8x512xf32> to vector<8x512xf32>
    %126 = arith.addf %122, %125 : vector<8x512xf32>
    %127 = vector.extract_strided_slice %126 {offsets = [0, 0], sizes = [8, 128], strides = [1, 1]} : vector<8x512xf32> to vector<8x128xf32>
    %128 = arith.negf %127 : vector<8x128xf32>
    %129 = math.exp %128 : vector<8x128xf32>
    %cst_60 = arith.constant 1.000000e+00 : f32
    %130 = vector.broadcast %cst_60 : f32 to vector<8x128xf32>
    %131 = arith.addf %130, %129 : vector<8x128xf32>
    %132 = arith.divf %130, %131 : vector<8x128xf32>
    %133 = vector.extract_strided_slice %126 {offsets = [0, 128], sizes = [8, 128], strides = [1, 1]} : vector<8x512xf32> to vector<8x128xf32>
    %134 = arith.negf %133 : vector<8x128xf32>
    %135 = math.exp %134 : vector<8x128xf32>
    %cst_61 = arith.constant 1.000000e+00 : f32
    %136 = vector.broadcast %cst_61 : f32 to vector<8x128xf32>
    %137 = arith.addf %136, %135 : vector<8x128xf32>
    %138 = arith.divf %136, %137 : vector<8x128xf32>
    %139 = vector.extract_strided_slice %126 {offsets = [0, 256], sizes = [8, 128], strides = [1, 1]} : vector<8x512xf32> to vector<8x128xf32>
    %140 = math.tanh %139 : vector<8x128xf32>
    %141 = vector.extract_strided_slice %126 {offsets = [0, 384], sizes = [8, 128], strides = [1, 1]} : vector<8x512xf32> to vector<8x128xf32>
    %142 = arith.negf %141 : vector<8x128xf32>
    %143 = math.exp %142 : vector<8x128xf32>
    %cst_62 = arith.constant 1.000000e+00 : f32
    %144 = vector.broadcast %cst_62 : f32 to vector<8x128xf32>
    %145 = arith.addf %144, %143 : vector<8x128xf32>
    %146 = arith.divf %144, %145 : vector<8x128xf32>
    %c0_63 = arith.constant 0 : index
    %c0_64 = arith.constant 0 : index
    %147 = vector.load %arg12[%c0_63, %c0_64] : memref<8x128xf32, #tpu.memory_space<vmem>>, vector<8x128xf32>
    %148 = arith.mulf %138, %147 : vector<8x128xf32>
    %149 = arith.mulf %132, %140 : vector<8x128xf32>
    %150 = arith.addf %148, %149 : vector<8x128xf32>
    %151 = math.tanh %150 : vector<8x128xf32>
    %152 = arith.mulf %146, %151 : vector<8x128xf32>
    %c0_65 = arith.constant 0 : index
    %c0_66 = arith.constant 0 : index
    %153 = vector.load %arg12[%c0_65, %c0_66] : memref<8x128xf32, #tpu.memory_space<vmem>>, vector<8x128xf32>
    tpu.vector_store %arg12[%c0_65, %c0_66], %150 {strides = array<i32>} : memref<8x128xf32, #tpu.memory_space<vmem>>, vector<8x128xf32>,
    %c0_67 = arith.constant 0 : index
    %c0_68 = arith.constant 0 : index
    %154 = vector.load %arg11[%c0_67, %c0_68] : memref<8x128xf32, #tpu.memory_space<vmem>>, vector<8x128xf32>
    tpu.vector_store %arg11[%c0_67, %c0_68], %152 {strides = array<i32>} : memref<8x128xf32, #tpu.memory_space<vmem>>, vector<8x128xf32>,
    %c8_i32_69 = arith.constant 8 : i32
    %155 = arith.muli %c3_i32, %c8_i32_69 : i32
    %156 = tpu.assume_multiple %155, 8 : i32
    %157 = arith.index_cast %156 : i32 to index
    %c0_70 = arith.constant 0 : index
    %158 = vector.load %arg13[%157, %c0_70] : memref<64x128xf32, #tpu.memory_space<vmem>>, vector<8x128xf32>
    tpu.vector_store %arg13[%157, %c0_70], %152 {strides = array<i32>} : memref<64x128xf32, #tpu.memory_space<vmem>>, vector<8x128xf32>,
    %c4_i32 = arith.constant 4 : i32
    %c0_71 = arith.constant 0 : index
    %c0_72 = arith.constant 0 : index
    %159 = vector.load %arg11[%c0_71, %c0_72] : memref<8x128xf32, #tpu.memory_space<vmem>>, vector<8x128xf32>
    %c0_73 = arith.constant 0 : index
    %c0_74 = arith.constant 0 : index
    %160 = vector.load %arg3[%c0_73, %c0_74] : memref<128x512xf32, #tpu.memory_space<vmem>>, vector<128x512xf32>
    %cst_75 = arith.constant dense<0.000000e+00> : vector<8x512xf32>
    %161 = tpu.matmul %159, %160, %cst_75 {dimension_numbers = #tpu.dot_dimension_numbers<[1], [0], [0], [1], [0, 0, 1, 1], [], []>} : vector<8x128xf32>, vector<128x512xf32>, vector<8x512xf32> -> vector<8x512xf32>
    %162 = arith.index_cast %c4_i32 : i32 to index
    %c0_76 = arith.constant 0 : index
    %c0_77 = arith.constant 0 : index
    %163 = vector.load %arg2[%162, %c0_76, %c0_77] : memref<8x8x512xf32, #tpu.memory_space<vmem>>, vector<1x8x512xf32>
    %164 = vector.shape_cast %163 : vector<1x8x512xf32> to vector<8x512xf32>
    %165 = arith.addf %161, %164 : vector<8x512xf32>
    %166 = vector.extract_strided_slice %165 {offsets = [0, 0], sizes = [8, 128], strides = [1, 1]} : vector<8x512xf32> to vector<8x128xf32>
    %167 = arith.negf %166 : vector<8x128xf32>
    %168 = math.exp %167 : vector<8x128xf32>
    %cst_78 = arith.constant 1.000000e+00 : f32
    %169 = vector.broadcast %cst_78 : f32 to vector<8x128xf32>
    %170 = arith.addf %169, %168 : vector<8x128xf32>
    %171 = arith.divf %169, %170 : vector<8x128xf32>
    %172 = vector.extract_strided_slice %165 {offsets = [0, 128], sizes = [8, 128], strides = [1, 1]} : vector<8x512xf32> to vector<8x128xf32>
    %173 = arith.negf %172 : vector<8x128xf32>
    %174 = math.exp %173 : vector<8x128xf32>
    %cst_79 = arith.constant 1.000000e+00 : f32
    %175 = vector.broadcast %cst_79 : f32 to vector<8x128xf32>
    %176 = arith.addf %175, %174 : vector<8x128xf32>
    %177 = arith.divf %175, %176 : vector<8x128xf32>
    %178 = vector.extract_strided_slice %165 {offsets = [0, 256], sizes = [8, 128], strides = [1, 1]} : vector<8x512xf32> to vector<8x128xf32>
    %179 = math.tanh %178 : vector<8x128xf32>
    %180 = vector.extract_strided_slice %165 {offsets = [0, 384], sizes = [8, 128], strides = [1, 1]} : vector<8x512xf32> to vector<8x128xf32>
    %181 = arith.negf %180 : vector<8x128xf32>
    %182 = math.exp %181 : vector<8x128xf32>
    %cst_80 = arith.constant 1.000000e+00 : f32
    %183 = vector.broadcast %cst_80 : f32 to vector<8x128xf32>
    %184 = arith.addf %183, %182 : vector<8x128xf32>
    %185 = arith.divf %183, %184 : vector<8x128xf32>
    %c0_81 = arith.constant 0 : index
    %c0_82 = arith.constant 0 : index
    %186 = vector.load %arg12[%c0_81, %c0_82] : memref<8x128xf32, #tpu.memory_space<vmem>>, vector<8x128xf32>
    %187 = arith.mulf %177, %186 : vector<8x128xf32>
    %188 = arith.mulf %171, %179 : vector<8x128xf32>
    %189 = arith.addf %187, %188 : vector<8x128xf32>
    %190 = math.tanh %189 : vector<8x128xf32>
    %191 = arith.mulf %185, %190 : vector<8x128xf32>
    %c0_83 = arith.constant 0 : index
    %c0_84 = arith.constant 0 : index
    %192 = vector.load %arg12[%c0_83, %c0_84] : memref<8x128xf32, #tpu.memory_space<vmem>>, vector<8x128xf32>
    tpu.vector_store %arg12[%c0_83, %c0_84], %189 {strides = array<i32>} : memref<8x128xf32, #tpu.memory_space<vmem>>, vector<8x128xf32>,
    %c0_85 = arith.constant 0 : index
    %c0_86 = arith.constant 0 : index
    %193 = vector.load %arg11[%c0_85, %c0_86] : memref<8x128xf32, #tpu.memory_space<vmem>>, vector<8x128xf32>
    tpu.vector_store %arg11[%c0_85, %c0_86], %191 {strides = array<i32>} : memref<8x128xf32, #tpu.memory_space<vmem>>, vector<8x128xf32>,
    %c8_i32_87 = arith.constant 8 : i32
    %194 = arith.muli %c4_i32, %c8_i32_87 : i32
    %195 = tpu.assume_multiple %194, 8 : i32
    %196 = arith.index_cast %195 : i32 to index
    %c0_88 = arith.constant 0 : index
    %197 = vector.load %arg13[%196, %c0_88] : memref<64x128xf32, #tpu.memory_space<vmem>>, vector<8x128xf32>
    tpu.vector_store %arg13[%196, %c0_88], %191 {strides = array<i32>} : memref<64x128xf32, #tpu.memory_space<vmem>>, vector<8x128xf32>,
    %c5_i32 = arith.constant 5 : i32
    %c0_89 = arith.constant 0 : index
    %c0_90 = arith.constant 0 : index
    %198 = vector.load %arg11[%c0_89, %c0_90] : memref<8x128xf32, #tpu.memory_space<vmem>>, vector<8x128xf32>
    %c0_91 = arith.constant 0 : index
    %c0_92 = arith.constant 0 : index
    %199 = vector.load %arg3[%c0_91, %c0_92] : memref<128x512xf32, #tpu.memory_space<vmem>>, vector<128x512xf32>
    %cst_93 = arith.constant dense<0.000000e+00> : vector<8x512xf32>
    %200 = tpu.matmul %198, %199, %cst_93 {dimension_numbers = #tpu.dot_dimension_numbers<[1], [0], [0], [1], [0, 0, 1, 1], [], []>} : vector<8x128xf32>, vector<128x512xf32>, vector<8x512xf32> -> vector<8x512xf32>
    %201 = arith.index_cast %c5_i32 : i32 to index
    %c0_94 = arith.constant 0 : index
    %c0_95 = arith.constant 0 : index
    %202 = vector.load %arg2[%201, %c0_94, %c0_95] : memref<8x8x512xf32, #tpu.memory_space<vmem>>, vector<1x8x512xf32>
    %203 = vector.shape_cast %202 : vector<1x8x512xf32> to vector<8x512xf32>
    %204 = arith.addf %200, %203 : vector<8x512xf32>
    %205 = vector.extract_strided_slice %204 {offsets = [0, 0], sizes = [8, 128], strides = [1, 1]} : vector<8x512xf32> to vector<8x128xf32>
    %206 = arith.negf %205 : vector<8x128xf32>
    %207 = math.exp %206 : vector<8x128xf32>
    %cst_96 = arith.constant 1.000000e+00 : f32
    %208 = vector.broadcast %cst_96 : f32 to vector<8x128xf32>
    %209 = arith.addf %208, %207 : vector<8x128xf32>
    %210 = arith.divf %208, %209 : vector<8x128xf32>
    %211 = vector.extract_strided_slice %204 {offsets = [0, 128], sizes = [8, 128], strides = [1, 1]} : vector<8x512xf32> to vector<8x128xf32>
    %212 = arith.negf %211 : vector<8x128xf32>
    %213 = math.exp %212 : vector<8x128xf32>
    %cst_97 = arith.constant 1.000000e+00 : f32
    %214 = vector.broadcast %cst_97 : f32 to vector<8x128xf32>
    %215 = arith.addf %214, %213 : vector<8x128xf32>
    %216 = arith.divf %214, %215 : vector<8x128xf32>
    %217 = vector.extract_strided_slice %204 {offsets = [0, 256], sizes = [8, 128], strides = [1, 1]} : vector<8x512xf32> to vector<8x128xf32>
    %218 = math.tanh %217 : vector<8x128xf32>
    %219 = vector.extract_strided_slice %204 {offsets = [0, 384], sizes = [8, 128], strides = [1, 1]} : vector<8x512xf32> to vector<8x128xf32>
    %220 = arith.negf %219 : vector<8x128xf32>
    %221 = math.exp %220 : vector<8x128xf32>
    %cst_98 = arith.constant 1.000000e+00 : f32
    %222 = vector.broadcast %cst_98 : f32 to vector<8x128xf32>
    %223 = arith.addf %222, %221 : vector<8x128xf32>
    %224 = arith.divf %222, %223 : vector<8x128xf32>
    %c0_99 = arith.constant 0 : index
    %c0_100 = arith.constant 0 : index
    %225 = vector.load %arg12[%c0_99, %c0_100] : memref<8x128xf32, #tpu.memory_space<vmem>>, vector<8x128xf32>
    %226 = arith.mulf %216, %225 : vector<8x128xf32>
    %227 = arith.mulf %210, %218 : vector<8x128xf32>
    %228 = arith.addf %226, %227 : vector<8x128xf32>
    %229 = math.tanh %228 : vector<8x128xf32>
    %230 = arith.mulf %224, %229 : vector<8x128xf32>
    %c0_101 = arith.constant 0 : index
    %c0_102 = arith.constant 0 : index
    %231 = vector.load %arg12[%c0_101, %c0_102] : memref<8x128xf32, #tpu.memory_space<vmem>>, vector<8x128xf32>
    tpu.vector_store %arg12[%c0_101, %c0_102], %228 {strides = array<i32>} : memref<8x128xf32, #tpu.memory_space<vmem>>, vector<8x128xf32>,
    %c0_103 = arith.constant 0 : index
    %c0_104 = arith.constant 0 : index
    %232 = vector.load %arg11[%c0_103, %c0_104] : memref<8x128xf32, #tpu.memory_space<vmem>>, vector<8x128xf32>
    tpu.vector_store %arg11[%c0_103, %c0_104], %230 {strides = array<i32>} : memref<8x128xf32, #tpu.memory_space<vmem>>, vector<8x128xf32>,
    %c8_i32_105 = arith.constant 8 : i32
    %233 = arith.muli %c5_i32, %c8_i32_105 : i32
    %234 = tpu.assume_multiple %233, 8 : i32
    %235 = arith.index_cast %234 : i32 to index
    %c0_106 = arith.constant 0 : index
    %236 = vector.load %arg13[%235, %c0_106] : memref<64x128xf32, #tpu.memory_space<vmem>>, vector<8x128xf32>
    tpu.vector_store %arg13[%235, %c0_106], %230 {strides = array<i32>} : memref<64x128xf32, #tpu.memory_space<vmem>>, vector<8x128xf32>,
    %c6_i32 = arith.constant 6 : i32
    %c0_107 = arith.constant 0 : index
    %c0_108 = arith.constant 0 : index
    %237 = vector.load %arg11[%c0_107, %c0_108] : memref<8x128xf32, #tpu.memory_space<vmem>>, vector<8x128xf32>
    %c0_109 = arith.constant 0 : index
    %c0_110 = arith.constant 0 : index
    %238 = vector.load %arg3[%c0_109, %c0_110] : memref<128x512xf32, #tpu.memory_space<vmem>>, vector<128x512xf32>
    %cst_111 = arith.constant dense<0.000000e+00> : vector<8x512xf32>
    %239 = tpu.matmul %237, %238, %cst_111 {dimension_numbers = #tpu.dot_dimension_numbers<[1], [0], [0], [1], [0, 0, 1, 1], [], []>} : vector<8x128xf32>, vector<128x512xf32>, vector<8x512xf32> -> vector<8x512xf32>
    %240 = arith.index_cast %c6_i32 : i32 to index
    %c0_112 = arith.constant 0 : index
    %c0_113 = arith.constant 0 : index
    %241 = vector.load %arg2[%240, %c0_112, %c0_113] : memref<8x8x512xf32, #tpu.memory_space<vmem>>, vector<1x8x512xf32>
    %242 = vector.shape_cast %241 : vector<1x8x512xf32> to vector<8x512xf32>
    %243 = arith.addf %239, %242 : vector<8x512xf32>
    %244 = vector.extract_strided_slice %243 {offsets = [0, 0], sizes = [8, 128], strides = [1, 1]} : vector<8x512xf32> to vector<8x128xf32>
    %245 = arith.negf %244 : vector<8x128xf32>
    %246 = math.exp %245 : vector<8x128xf32>
    %cst_114 = arith.constant 1.000000e+00 : f32
    %247 = vector.broadcast %cst_114 : f32 to vector<8x128xf32>
    %248 = arith.addf %247, %246 : vector<8x128xf32>
    %249 = arith.divf %247, %248 : vector<8x128xf32>
    %250 = vector.extract_strided_slice %243 {offsets = [0, 128], sizes = [8, 128], strides = [1, 1]} : vector<8x512xf32> to vector<8x128xf32>
    %251 = arith.negf %250 : vector<8x128xf32>
    %252 = math.exp %251 : vector<8x128xf32>
    %cst_115 = arith.constant 1.000000e+00 : f32
    %253 = vector.broadcast %cst_115 : f32 to vector<8x128xf32>
    %254 = arith.addf %253, %252 : vector<8x128xf32>
    %255 = arith.divf %253, %254 : vector<8x128xf32>
    %256 = vector.extract_strided_slice %243 {offsets = [0, 256], sizes = [8, 128], strides = [1, 1]} : vector<8x512xf32> to vector<8x128xf32>
    %257 = math.tanh %256 : vector<8x128xf32>
    %258 = vector.extract_strided_slice %243 {offsets = [0, 384], sizes = [8, 128], strides = [1, 1]} : vector<8x512xf32> to vector<8x128xf32>
    %259 = arith.negf %258 : vector<8x128xf32>
    %260 = math.exp %259 : vector<8x128xf32>
    %cst_116 = arith.constant 1.000000e+00 : f32
    %261 = vector.broadcast %cst_116 : f32 to vector<8x128xf32>
    %262 = arith.addf %261, %260 : vector<8x128xf32>
    %263 = arith.divf %261, %262 : vector<8x128xf32>
    %c0_117 = arith.constant 0 : index
    %c0_118 = arith.constant 0 : index
    %264 = vector.load %arg12[%c0_117, %c0_118] : memref<8x128xf32, #tpu.memory_space<vmem>>, vector<8x128xf32>
    %265 = arith.mulf %255, %264 : vector<8x128xf32>
    %266 = arith.mulf %249, %257 : vector<8x128xf32>
    %267 = arith.addf %265, %266 : vector<8x128xf32>
    %268 = math.tanh %267 : vector<8x128xf32>
    %269 = arith.mulf %263, %268 : vector<8x128xf32>
    %c0_119 = arith.constant 0 : index
    %c0_120 = arith.constant 0 : index
    %270 = vector.load %arg12[%c0_119, %c0_120] : memref<8x128xf32, #tpu.memory_space<vmem>>, vector<8x128xf32>
    tpu.vector_store %arg12[%c0_119, %c0_120], %267 {strides = array<i32>} : memref<8x128xf32, #tpu.memory_space<vmem>>, vector<8x128xf32>,
    %c0_121 = arith.constant 0 : index
    %c0_122 = arith.constant 0 : index
    %271 = vector.load %arg11[%c0_121, %c0_122] : memref<8x128xf32, #tpu.memory_space<vmem>>, vector<8x128xf32>
    tpu.vector_store %arg11[%c0_121, %c0_122], %269 {strides = array<i32>} : memref<8x128xf32, #tpu.memory_space<vmem>>, vector<8x128xf32>,
    %c8_i32_123 = arith.constant 8 : i32
    %272 = arith.muli %c6_i32, %c8_i32_123 : i32
    %273 = tpu.assume_multiple %272, 8 : i32
    %274 = arith.index_cast %273 : i32 to index
    %c0_124 = arith.constant 0 : index
    %275 = vector.load %arg13[%274, %c0_124] : memref<64x128xf32, #tpu.memory_space<vmem>>, vector<8x128xf32>
    tpu.vector_store %arg13[%274, %c0_124], %269 {strides = array<i32>} : memref<64x128xf32, #tpu.memory_space<vmem>>, vector<8x128xf32>,
    %c7_i32 = arith.constant 7 : i32
    %c0_125 = arith.constant 0 : index
    %c0_126 = arith.constant 0 : index
    %276 = vector.load %arg11[%c0_125, %c0_126] : memref<8x128xf32, #tpu.memory_space<vmem>>, vector<8x128xf32>
    %c0_127 = arith.constant 0 : index
    %c0_128 = arith.constant 0 : index
    %277 = vector.load %arg3[%c0_127, %c0_128] : memref<128x512xf32, #tpu.memory_space<vmem>>, vector<128x512xf32>
    %cst_129 = arith.constant dense<0.000000e+00> : vector<8x512xf32>
    %278 = tpu.matmul %276, %277, %cst_129 {dimension_numbers = #tpu.dot_dimension_numbers<[1], [0], [0], [1], [0, 0, 1, 1], [], []>} : vector<8x128xf32>, vector<128x512xf32>, vector<8x512xf32> -> vector<8x512xf32>
    %279 = arith.index_cast %c7_i32 : i32 to index
    %c0_130 = arith.constant 0 : index
    %c0_131 = arith.constant 0 : index
    %280 = vector.load %arg2[%279, %c0_130, %c0_131] : memref<8x8x512xf32, #tpu.memory_space<vmem>>, vector<1x8x512xf32>
    %281 = vector.shape_cast %280 : vector<1x8x512xf32> to vector<8x512xf32>
    %282 = arith.addf %278, %281 : vector<8x512xf32>
    %283 = vector.extract_strided_slice %282 {offsets = [0, 0], sizes = [8, 128], strides = [1, 1]} : vector<8x512xf32> to vector<8x128xf32>
    %284 = arith.negf %283 : vector<8x128xf32>
    %285 = math.exp %284 : vector<8x128xf32>
    %cst_132 = arith.constant 1.000000e+00 : f32
    %286 = vector.broadcast %cst_132 : f32 to vector<8x128xf32>
    %287 = arith.addf %286, %285 : vector<8x128xf32>
    %288 = arith.divf %286, %287 : vector<8x128xf32>
    %289 = vector.extract_strided_slice %282 {offsets = [0, 128], sizes = [8, 128], strides = [1, 1]} : vector<8x512xf32> to vector<8x128xf32>
    %290 = arith.negf %289 : vector<8x128xf32>
    %291 = math.exp %290 : vector<8x128xf32>
    %cst_133 = arith.constant 1.000000e+00 : f32
    %292 = vector.broadcast %cst_133 : f32 to vector<8x128xf32>
    %293 = arith.addf %292, %291 : vector<8x128xf32>
    %294 = arith.divf %292, %293 : vector<8x128xf32>
    %295 = vector.extract_strided_slice %282 {offsets = [0, 256], sizes = [8, 128], strides = [1, 1]} : vector<8x512xf32> to vector<8x128xf32>
    %296 = math.tanh %295 : vector<8x128xf32>
    %297 = vector.extract_strided_slice %282 {offsets = [0, 384], sizes = [8, 128], strides = [1, 1]} : vector<8x512xf32> to vector<8x128xf32>
    %298 = arith.negf %297 : vector<8x128xf32>
    %299 = math.exp %298 : vector<8x128xf32>
    %cst_134 = arith.constant 1.000000e+00 : f32
    %300 = vector.broadcast %cst_134 : f32 to vector<8x128xf32>
    %301 = arith.addf %300, %299 : vector<8x128xf32>
    %302 = arith.divf %300, %301 : vector<8x128xf32>
    %c0_135 = arith.constant 0 : index
    %c0_136 = arith.constant 0 : index
    %303 = vector.load %arg12[%c0_135, %c0_136] : memref<8x128xf32, #tpu.memory_space<vmem>>, vector<8x128xf32>
    %304 = arith.mulf %294, %303 : vector<8x128xf32>
    %305 = arith.mulf %288, %296 : vector<8x128xf32>
    %306 = arith.addf %304, %305 : vector<8x128xf32>
    %307 = math.tanh %306 : vector<8x128xf32>
    %308 = arith.mulf %302, %307 : vector<8x128xf32>
    %c0_137 = arith.constant 0 : index
    %c0_138 = arith.constant 0 : index
    %309 = vector.load %arg12[%c0_137, %c0_138] : memref<8x128xf32, #tpu.memory_space<vmem>>, vector<8x128xf32>
    tpu.vector_store %arg12[%c0_137, %c0_138], %306 {strides = array<i32>} : memref<8x128xf32, #tpu.memory_space<vmem>>, vector<8x128xf32>,
    %c0_139 = arith.constant 0 : index
    %c0_140 = arith.constant 0 : index
    %310 = vector.load %arg11[%c0_139, %c0_140] : memref<8x128xf32, #tpu.memory_space<vmem>>, vector<8x128xf32>
    tpu.vector_store %arg11[%c0_139, %c0_140], %308 {strides = array<i32>} : memref<8x128xf32, #tpu.memory_space<vmem>>, vector<8x128xf32>,
    %c8_i32_141 = arith.constant 8 : i32
    %311 = arith.muli %c7_i32, %c8_i32_141 : i32
    %312 = tpu.assume_multiple %311, 8 : i32
    %313 = arith.index_cast %312 : i32 to index
    %c0_142 = arith.constant 0 : index
    %314 = vector.load %arg13[%313, %c0_142] : memref<64x128xf32, #tpu.memory_space<vmem>>, vector<8x128xf32>
    tpu.vector_store %arg13[%313, %c0_142], %308 {strides = array<i32>} : memref<64x128xf32, #tpu.memory_space<vmem>>, vector<8x128xf32>,
    %c8_i32_143 = arith.constant 8 : i32
    %c0_144 = arith.constant 0 : index
    %c0_145 = arith.constant 0 : index
    %315 = vector.load %arg13[%c0_144, %c0_145] : memref<64x128xf32, #tpu.memory_space<vmem>>, vector<64x128xf32>
    %c0_146 = arith.constant 0 : index
    %c0_147 = arith.constant 0 : index
    %316 = vector.load %arg6[%c0_146, %c0_147] : memref<128x128xf32, #tpu.memory_space<vmem>>, vector<128x128xf32>
    %cst_148 = arith.constant dense<0.000000e+00> : vector<64x128xf32>
    %317 = tpu.matmul %315, %316, %cst_148 {dimension_numbers = #tpu.dot_dimension_numbers<[1], [0], [0], [1], [0, 0, 1, 1], [], []>} : vector<64x128xf32>, vector<128x128xf32>, vector<64x128xf32> -> vector<64x128xf32>
    %c0_149 = arith.constant 0 : index
    %c0_150 = arith.constant 0 : index
    %318 = vector.load %arg7[%c0_149, %c0_150] : memref<1x128xf32, #tpu.memory_space<vmem>>, vector<1x128xf32>
    %319 = vector.broadcast %318 : vector<1x128xf32> to vector<64x128xf32>
    %320 = arith.addf %317, %319 : vector<64x128xf32>
    %cst_151 = arith.constant dense<0xFF800000> : vector<64xf32>
    %321 = vector.multi_reduction <maximumf>, %320, %cst_151 [1] : vector<64x128xf32> to vector<64xf32>
    %322 = vector.shape_cast %321 : vector<64xf32> to vector<64x1xf32>
    %323 = vector.broadcast %322 : vector<64x1xf32> to vector<64x128xf32>
    %324 = arith.subf %320, %323 : vector<64x128xf32>
    %325 = math.exp %324 : vector<64x128xf32>
    %cst_152 = arith.constant dense<0.000000e+00> : vector<64xf32>
    %326 = vector.multi_reduction <add>, %325, %cst_152 [1] : vector<64x128xf32> to vector<64xf32>
    %327 = vector.shape_cast %326 : vector<64xf32> to vector<64x1xf32>
    %328 = math.log %327 : vector<64x1xf32>
    %329 = vector.broadcast %328 : vector<64x1xf32> to vector<64x128xf32>
    %330 = arith.subf %324, %329 : vector<64x128xf32>
    %331 = vector.shape_cast %330 : vector<64x128xf32> to vector<8x8x128xf32>
    %c0_153 = arith.constant 0 : index
    %c0_154 = arith.constant 0 : index
    %c0_155 = arith.constant 0 : index
    %332 = vector.load %arg8[%c0_153, %c0_154, %c0_155] : memref<8x8x128xf32, #tpu.memory_space<vmem>>, vector<8x8x128xf32>
    tpu.vector_store %arg8[%c0_153, %c0_154, %c0_155], %331 {strides = array<i32>} : memref<8x8x128xf32, #tpu.memory_space<vmem>>, vector<8x8x128xf32>,
    %c0_i32_156 = arith.constant 0 : i32
    %333 = arith.cmpi eq, %arg1, %c0_i32_156 : i32
    %334 = arith.extui %333 : i1 to i32
    %c0_i32_157 = arith.constant 0 : i32
    %335 = arith.cmpi ne, %334, %c0_i32_157 : i32
    scf.if %335 {
      %c0_158 = arith.constant 0 : index
      %c0_159 = arith.constant 0 : index
      %336 = vector.load %arg11[%c0_158, %c0_159] : memref<8x128xf32, #tpu.memory_space<vmem>>, vector<8x128xf32>
      %c0_160 = arith.constant 0 : index
      %c0_161 = arith.constant 0 : index
      %337 = vector.load %arg9[%c0_160, %c0_161] : memref<8x128xf32, #tpu.memory_space<vmem>>, vector<8x128xf32>
      tpu.vector_store %arg9[%c0_160, %c0_161], %336 {strides = array<i32>} : memref<8x128xf32, #tpu.memory_space<vmem>>, vector<8x128xf32>,
      %c0_162 = arith.constant 0 : index
      %c0_163 = arith.constant 0 : index
      %338 = vector.load %arg12[%c0_162, %c0_163] : memref<8x128xf32, #tpu.memory_space<vmem>>, vector<8x128xf32>
      %c0_164 = arith.constant 0 : index
      %c0_165 = arith.constant 0 : index
      %339 = vector.load %arg10[%c0_164, %c0_165] : memref<8x128xf32, #tpu.memory_space<vmem>>, vector<8x128xf32>
      tpu.vector_store %arg10[%c0_164, %c0_165], %338 {strides = array<i32>} : memref<8x128xf32, #tpu.memory_space<vmem>>, vector<8x128xf32>,
    } else {
    }
    return
  }
  func.func @transform_0(%arg0: i32, %arg1: i32) -> (i32, i32, i32) {
    %c0_i32 = arith.constant 0 : i32
    %c0_i32_0 = arith.constant 0 : i32
    return %arg1, %arg0, %c0_i32 : i32, i32, i32
  }
  func.func @transform_1(%arg0: i32, %arg1: i32) -> (i32, i32) {
    %c0_i32 = arith.constant 0 : i32
    %c0_i32_0 = arith.constant 0 : i32
    %c0_i32_1 = arith.constant 0 : i32
    return %c0_i32, %c0_i32_0 : i32, i32
  }
  func.func @transform_2(%arg0: i32, %arg1: i32) -> (i32, i32) {
    %c0_i32 = arith.constant 0 : i32
    %c0_i32_0 = arith.constant 0 : i32
    return %arg0, %c0_i32 : i32, i32
  }
  func.func @transform_3(%arg0: i32, %arg1: i32) -> (i32, i32) {
    %c0_i32 = arith.constant 0 : i32
    %c0_i32_0 = arith.constant 0 : i32
    return %arg0, %c0_i32 : i32, i32
  }
  func.func @transform_4(%arg0: i32, %arg1: i32) -> (i32, i32) {
    %c0_i32 = arith.constant 0 : i32
    %c0_i32_0 = arith.constant 0 : i32
    %c0_i32_1 = arith.constant 0 : i32
    return %c0_i32, %c0_i32_0 : i32, i32
  }
  func.func @transform_5(%arg0: i32, %arg1: i32) -> (i32, i32) {
    %c0_i32 = arith.constant 0 : i32
    %c0_i32_0 = arith.constant 0 : i32
    %c0_i32_1 = arith.constant 0 : i32
    return %c0_i32, %c0_i32_0 : i32, i32
  }
  func.func @transform_6(%arg0: i32, %arg1: i32) -> (i32, i32, i32) {
    %c0_i32 = arith.constant 0 : i32
    %c0_i32_0 = arith.constant 0 : i32
    return %arg1, %arg0, %c0_i32 : i32, i32, i32
  }
  func.func @transform_7(%arg0: i32, %arg1: i32) -> (i32, i32) {
    %c0_i32 = arith.constant 0 : i32
    %c0_i32_0 = arith.constant 0 : i32
    return %arg0, %c0_i32 : i32, i32
  }
  func.func @transform_8(%arg0: i32, %arg1: i32) -> (i32, i32) {
    %c0_i32 = arith.constant 0 : i32
    %c0_i32_0 = arith.constant 0 : i32
    return %arg0, %c0_i32 : i32, i32
  }
}

</mosaic_0001>

<llo_original>
// kernel: _lambda_.1
$region0: #{_lambda_.1}
  #allocation0 [shape = 'u32[]', space=smem, size = 0x4, offset = 0x4, fixed_abs, tag = 'smem constant byte address 0x4 - core index']
  #allocation1 [shape = 'u32[144,128]{1,0:T(1,128)}', space=vmem, size = 0x12000, scoped, tag = 'internal scratch']
  #allocation2 [shape = 'f32[8,128]{1,0:T(8,128)}', space=vmem, size = 0x1000, scoped, tag = 'scratch operand']
  #allocation3 [shape = 'f32[8,128]{1,0:T(8,128)}', space=vmem, size = 0x1000, scoped, tag = 'scratch operand']
  #allocation4 [shape = 'f32[64,128]{1,0:T(8,128)}', space=vmem, size = 0x8000, scoped, tag = 'scratch operand']
  %s0 = inlined_call_operand.vmem [shape: f32[8,8,512], index: 0, kind: input, shape index: {}]
  %s1 = inlined_call_operand.vmem [shape: f32[128,512], index: 1, kind: input, shape index: {}]
  %s2 = inlined_call_operand.vmem [shape: f32[8,128], index: 2, kind: input, shape index: {}, may-alias: {2,3}]
  %s3 = inlined_call_operand.vmem [shape: f32[8,128], index: 3, kind: input, shape index: {}, may-alias: {2,3}]
  %s4 = inlined_call_operand.vmem [shape: f32[128,128], index: 4, kind: input, shape index: {}]
  %s5 = inlined_call_operand.vmem [shape: f32[1,128], index: 5, kind: input, shape index: {}]
  %s6 = inlined_call_operand.vmem [shape: f32[8,8,128], index: 6, kind: output, shape index: {0}]
  %s7 = inlined_call_operand.vmem [shape: f32[8,128], index: 7, kind: output, shape index: {1}]
  %s8 = inlined_call_operand.vmem [shape: f32[8,128], index: 8, kind: output, shape index: {2}]
  %9 = xla_tuple %s6, %s7, %s8
  %s10 = sld [smem:[#allocation0]]
  $region58: #{_lambda_.1} parent=0
    _
  %s12 = ssub.s32 1, %s10
  %s13 = scalar_select 0, %s12, %s10
  // Predicated region
  $region2: #{_lambda_.1} parent=0 // pred_check
    _
  $region3: #{_lambda_.1} parent=0 // pred_check_branch
    %15 = sbr.rel (0) target = $region5
  $region4: #{_lambda_.1} parent=0 // pred_region
    _
  $region5: #{_lambda_.1} parent=0 // pred_fallthru
    _
  // Predicated region
  $region6: #{_lambda_.1} parent=0 // pred_check
    _
  $region7: #{_lambda_.1} parent=0 // pred_check_branch
    %17 = sbr.rel (0) target = $region9
  $region8: #{_lambda_.1} parent=0 // pred_region
    _
  $region9: #{_lambda_.1} parent=0 // pred_fallthru
    _
  // Predicated region
  $region10: #{_lambda_.1} parent=0 // pred_check
    _
  $region11: #{_lambda_.1} parent=0 // pred_check_branch
    %19 = sbr.rel (0) target = $region13
  $region12: #{_lambda_.1} parent=0 // pred_region
    _
  $region13: #{_lambda_.1} parent=0 // pred_fallthru
    _
  // Predicated region
  $region14: #{_lambda_.1} parent=0 // pred_check
    _
  $region15: #{_lambda_.1} parent=0 // pred_check_branch
    %21 = sbr.rel (0) target = $region17
  $region16: #{_lambda_.1} parent=0 // pred_region
    _
  $region17: #{_lambda_.1} parent=0 // pred_fallthru
    _
  // Predicated region
  $region18: #{_lambda_.1} parent=0 // pred_check
    _
  $region19: #{_lambda_.1} parent=0 // pred_check_branch
    %23 = sbr.rel (0) target = $region21
  $region20: #{_lambda_.1} parent=0 // pred_region
    _
  $region21: #{_lambda_.1} parent=0 // pred_fallthru
    _
  // Predicated region
  $region22: #{_lambda_.1} parent=0 // pred_check
    _
  $region23: #{_lambda_.1} parent=0 // pred_check_branch
    %25 = sbr.rel (0) target = $region25
  $region24: #{_lambda_.1} parent=0 // pred_region
    _
  $region25: #{_lambda_.1} parent=0 // pred_fallthru
    _
  %p26 = scmp.eq.s32.totalorder 0, 0
  // Predicated region
  $region26: #{_lambda_.1} parent=0 // pred_check
    %p27 = pneg %p26
  $region27: #{_lambda_.1} parent=0 // pred_check_branch
    %29 = sbr.rel (%p27) target = $region29
  $region28: #{_lambda_.1} parent=0 // pred_region
    %v30 = vld [vmem:[%s2] sm:$0xff]
    %31 = vst [vmem:[#allocation2] sm:$0xff] %v30
    %v32 = vld [vmem:[%s3] sm:$0xff]
    %33 = vst [vmem:[#allocation3] sm:$0xff] %v32
  $region29: #{_lambda_.1} parent=0 // pred_fallthru
    _
  %v34 = vld [vmem:[#allocation2] sm:$0xff]
  %v35 = vld [vmem:[%s1] sm:$0xff]
  %v36 = vld [vmem:[%s1 + $0x8] sm:$0xff]
  %v37 = vld [vmem:[%s1 + $0x10] sm:$0xff]
  %v38 = vld [vmem:[%s1 + $0x18] sm:$0xff]
  %v39 = vld [vmem:[%s1 + $0x20] sm:$0xff]
  %v40 = vld [vmem:[%s1 + $0x28] sm:$0xff]
  %v41 = vld [vmem:[%s1 + $0x30] sm:$0xff]
  %v42 = vld [vmem:[%s1 + $0x38] sm:$0xff]
  %v43 = vld [vmem:[%s1 + $0x40] sm:$0xff]
  %v44 = vld [vmem:[%s1 + $0x48] sm:$0xff]
  %v45 = vld [vmem:[%s1 + $0x50] sm:$0xff]
  %v46 = vld [vmem:[%s1 + $0x58] sm:$0xff]
  %v47 = vld [vmem:[%s1 + $0x60] sm:$0xff]
  %v48 = vld [vmem:[%s1 + $0x68] sm:$0xff]
  %v49 = vld [vmem:[%s1 + $0x70] sm:$0xff]
  %v50 = vld [vmem:[%s1 + $0x78] sm:$0xff]
  %v51 = vld [vmem:[%s1 + $0x80] sm:$0xff]
  %v52 = vld [vmem:[%s1 + $0x88] sm:$0xff]
  %v53 = vld [vmem:[%s1 + $0x90] sm:$0xff]
  %v54 = vld [vmem:[%s1 + $0x98] sm:$0xff]
  %v55 = vld [vmem:[%s1 + $0xa0] sm:$0xff]
  %v56 = vld [vmem:[%s1 + $0xa8] sm:$0xff]
  %v57 = vld [vmem:[%s1 + $0xb0] sm:$0xff]
  %v58 = vld [vmem:[%s1 + $0xb8] sm:$0xff]
  %v59 = vld [vmem:[%s1 + $0xc0] sm:$0xff]
  %v60 = vld [vmem:[%s1 + $0xc8] sm:$0xff]
  %v61 = vld [vmem:[%s1 + $0xd0] sm:$0xff]
  %v62 = vld [vmem:[%s1 + $0xd8] sm:$0xff]
  %v63 = vld [vmem:[%s1 + $0xe0] sm:$0xff]
  %v64 = vld [vmem:[%s1 + $0xe8] sm:$0xff]
  %v65 = vld [vmem:[%s1 + $0xf0] sm:$0xff]
  %v66 = vld [vmem:[%s1 + $0xf8] sm:$0xff]
  %v67 = vld [vmem:[%s1 + $0x100] sm:$0xff]
  %v68 = vld [vmem:[%s1 + $0x108] sm:$0xff]
  %v69 = vld [vmem:[%s1 + $0x110] sm:$0xff]
  %v70 = vld [vmem:[%s1 + $0x118] sm:$0xff]
  %v71 = vld [vmem:[%s1 + $0x120] sm:$0xff]
  %v72 = vld [vmem:[%s1 + $0x128] sm:$0xff]
  %v73 = vld [vmem:[%s1 + $0x130] sm:$0xff]
  %v74 = vld [vmem:[%s1 + $0x138] sm:$0xff]
  %v75 = vld [vmem:[%s1 + $0x140] sm:$0xff]
  %v76 = vld [vmem:[%s1 + $0x148] sm:$0xff]
  %v77 = vld [vmem:[%s1 + $0x150] sm:$0xff]
  %v78 = vld [vmem:[%s1 + $0x158] sm:$0xff]
  %v79 = vld [vmem:[%s1 + $0x160] sm:$0xff]
  %v80 = vld [vmem:[%s1 + $0x168] sm:$0xff]
  %v81 = vld [vmem:[%s1 + $0x170] sm:$0xff]
  %v82 = vld [vmem:[%s1 + $0x178] sm:$0xff]
  %v83 = vld [vmem:[%s1 + $0x180] sm:$0xff]
  %v84 = vld [vmem:[%s1 + $0x188] sm:$0xff]
  %v85 = vld [vmem:[%s1 + $0x190] sm:$0xff]
  %v86 = vld [vmem:[%s1 + $0x198] sm:$0xff]
  %v87 = vld [vmem:[%s1 + $0x1a0] sm:$0xff]
  %v88 = vld [vmem:[%s1 + $0x1a8] sm:$0xff]
  %v89 = vld [vmem:[%s1 + $0x1b0] sm:$0xff]
  %v90 = vld [vmem:[%s1 + $0x1b8] sm:$0xff]
  %v91 = vld [vmem:[%s1 + $0x1c0] sm:$0xff]
  %v92 = vld [vmem:[%s1 + $0x1c8] sm:$0xff]
  %v93 = vld [vmem:[%s1 + $0x1d0] sm:$0xff]
  %v94 = vld [vmem:[%s1 + $0x1d8] sm:$0xff]
  %v95 = vld [vmem:[%s1 + $0x1e0] sm:$0xff]
  %v96 = vld [vmem:[%s1 + $0x1e8] sm:$0xff]
  %v97 = vld [vmem:[%s1 + $0x1f0] sm:$0xff]
  %v98 = vld [vmem:[%s1 + $0x1f8] sm:$0xff]
  %v99 = vld [vmem:[%s0] sm:$0xff]
  %v100 = vld [vmem:[%s0 + $0x8] sm:$0xff]
  %v101 = vld [vmem:[%s0 + $0x10] sm:$0xff]
  %v102 = vld [vmem:[%s0 + $0x18] sm:$0xff]
  %103 = vmatprep.subr.mxu0 %v36
  %104 = vmatpush1.msra.mxu0 %v35
  %105 = vmatprep.subr.mxu0 %v40
  %106 = vmatpush1.msra.mxu0 %v39
  %107 = vmatprep.subr.mxu0 %v44
  %108 = vmatpush1.msra.mxu0 %v43
  %109 = vmatprep.subr.mxu0 %v48
  %110 = vmatpush1.msra.mxu0 %v47
  %111 = vmatprep.subr.mxu0 %v52
  %112 = vmatpush1.msra.mxu0 %v51
  %113 = vmatprep.subr.mxu0 %v56
  %114 = vmatpush1.msra.mxu0 %v55
  %115 = vmatprep.subr.mxu0 %v60
  %116 = vmatpush1.msra.mxu0 %v59
  %117 = vmatprep.subr.mxu0 %v64
  %118 = vmatpush1.msra.mxu0 %v63
  %119 = vmatprep.subr.mxu0 %v68
  %120 = vmatpush1.msra.mxu0 %v67
  %121 = vmatprep.subr.mxu0 %v72
  %122 = vmatpush1.msra.mxu0 %v71
  %123 = vmatprep.subr.mxu0 %v76
  %124 = vmatpush1.msra.mxu0 %v75
  %125 = vmatprep.subr.mxu0 %v80
  %126 = vmatpush1.msra.mxu0 %v79
  %127 = vmatprep.subr.mxu0 %v84
  %128 = vmatpush1.msra.mxu0 %v83
  %129 = vmatprep.subr.mxu0 %v88
  %130 = vmatpush1.msra.mxu0 %v87
  %131 = vmatprep.subr.mxu0 %v92
  %132 = vmatpush1.msra.mxu0 %v91
  %133 = vmatprep.subr.mxu0 %v96
  %134 = vmatpush1.msra.mxu0 %v95
  %135 = vmatprep.subr.mxu0 0.0
  %136 = vmatpush1.msra.mxu0 0.0
  %137 = vmatprep.subr.mxu0 0.0
  %138 = vmatpush1.msra.mxu0 0.0
  %139 = vmatprep.subr.mxu0 0.0
  %140 = vmatpush1.msra.mxu0 0.0
  %141 = vmatprep.subr.mxu0 0.0
  %142 = vmatpush1.msra.mxu0 0.0
  %143 = vmatprep.subr.mxu0 0.0
  %144 = vmatpush1.msra.mxu0 0.0
  %145 = vmatprep.subr.mxu0 0.0
  %146 = vmatpush1.msra.mxu0 0.0
  %147 = vmatprep.subr.mxu0 0.0
  %148 = vmatpush1.msra.mxu0 0.0
  %149 = vmatprep.subr.mxu0 0.0
  %150 = vmatpush1.msra.mxu0 0.0
  %151 = vmatprep.subr.mxu0 0.0
  %152 = vmatpush1.msra.mxu0 0.0
  %153 = vmatprep.subr.mxu0 0.0
  %154 = vmatpush1.msra.mxu0 0.0
  %155 = vmatprep.subr.mxu0 0.0
  %156 = vmatpush1.msra.mxu0 0.0
  %157 = vmatprep.subr.mxu0 0.0
  %158 = vmatpush1.msra.mxu0 0.0
  %159 = vmatprep.subr.mxu0 0.0
  %160 = vmatpush1.msra.mxu0 0.0
  %161 = vmatprep.subr.mxu0 0.0
  %162 = vmatpush1.msra.mxu0 0.0
  %163 = vmatprep.subr.mxu0 0.0
  %164 = vmatpush1.msra.mxu0 0.0
  %165 = vmatprep.subr.mxu0 0.0
  %166 = vmatpush1.msra.mxu0 0.0
  %167 = vmatprep.mubr.f32.mxu0 0.0
  %168 = vmatmul.mubr.f32.gmra.mrb[0].mxu0 %v34
  %v169 = vpop.f32.mrb[0].mxu0
  %v170 = vadd.f32 %v99, %v169
  %v171 = vpop.f32.mrb[0].mxu0
  %v172 = vadd.f32 %v100, %v171
  %173 = vdwg.mxu0
  %174 = vmatprep.subr.mxu0 %v38
  %175 = vmatpush1.msra.mxu0 %v37
  %176 = vmatprep.subr.mxu0 %v42
  %177 = vmatpush1.msra.mxu0 %v41
  %178 = vmatprep.subr.mxu0 %v46
  %179 = vmatpush1.msra.mxu0 %v45
  %180 = vmatprep.subr.mxu0 %v50
  %181 = vmatpush1.msra.mxu0 %v49
  %182 = vmatprep.subr.mxu0 %v54
  %183 = vmatpush1.msra.mxu0 %v53
  %184 = vmatprep.subr.mxu0 %v58
  %185 = vmatpush1.msra.mxu0 %v57
  %186 = vmatprep.subr.mxu0 %v62
  %187 = vmatpush1.msra.mxu0 %v61
  %188 = vmatprep.subr.mxu0 %v66
  %189 = vmatpush1.msra.mxu0 %v65
  %190 = vmatprep.subr.mxu0 %v70
  %191 = vmatpush1.msra.mxu0 %v69
  %192 = vmatprep.subr.mxu0 %v74
  %193 = vmatpush1.msra.mxu0 %v73
  %194 = vmatprep.subr.mxu0 %v78
  %195 = vmatpush1.msra.mxu0 %v77
  %196 = vmatprep.subr.mxu0 %v82
  %197 = vmatpush1.msra.mxu0 %v81
  %198 = vmatprep.subr.mxu0 %v86
  %199 = vmatpush1.msra.mxu0 %v85
  %200 = vmatprep.subr.mxu0 %v90
  %201 = vmatpush1.msra.mxu0 %v89
  %202 = vmatprep.subr.mxu0 %v94
  %203 = vmatpush1.msra.mxu0 %v93
  %204 = vmatprep.subr.mxu0 %v98
  %205 = vmatpush1.msra.mxu0 %v97
  %206 = vmatprep.subr.mxu0 0.0
  %207 = vmatpush1.msra.mxu0 0.0
  %208 = vmatprep.subr.mxu0 0.0
  %209 = vmatpush1.msra.mxu0 0.0
  %210 = vmatprep.subr.mxu0 0.0
  %211 = vmatpush1.msra.mxu0 0.0
  %212 = vmatprep.subr.mxu0 0.0
  %213 = vmatpush1.msra.mxu0 0.0
  %214 = vmatprep.subr.mxu0 0.0
  %215 = vmatpush1.msra.mxu0 0.0
  %216 = vmatprep.subr.mxu0 0.0
  %217 = vmatpush1.msra.mxu0 0.0
  %218 = vmatprep.subr.mxu0 0.0
  %219 = vmatpush1.msra.mxu0 0.0
  %220 = vmatprep.subr.mxu0 0.0
  %221 = vmatpush1.msra.mxu0 0.0
  %222 = vmatprep.subr.mxu0 0.0
  %223 = vmatpush1.msra.mxu0 0.0
  %224 = vmatprep.subr.mxu0 0.0
  %225 = vmatpush1.msra.mxu0 0.0
  %226 = vmatprep.subr.mxu0 0.0
  %227 = vmatpush1.msra.mxu0 0.0
  %228 = vmatprep.subr.mxu0 0.0
  %229 = vmatpush1.msra.mxu0 0.0
  %230 = vmatprep.subr.mxu0 0.0
  %231 = vmatpush1.msra.mxu0 0.0
  %232 = vmatprep.subr.mxu0 0.0
  %233 = vmatpush1.msra.mxu0 0.0
  %234 = vmatprep.subr.mxu0 0.0
  %235 = vmatpush1.msra.mxu0 0.0
  %236 = vmatprep.subr.mxu0 0.0
  %237 = vmatpush1.msra.mxu0 0.0
  %238 = vmatprep.mubr.f32.mxu0 0.0
  %239 = vmatmul.mubr.f32.gmra.mrb[0].mxu0 %v34
  %v240 = vpop.f32.mrb[0].mxu0
  %v241 = vadd.f32 %v101, %v240
  %v242 = vpop.f32.mrb[0].mxu0
  %v243 = vadd.f32 %v102, %v242
  %244 = vdwg.mxu0
  %v245 = vxor.u32 %v170, 2147483648
  %v246 = vmul.f32 %v245, 1.442695
  %v247 = vpow.pop %v246
  %v248 = vadd.f32 %v247, 1.0
  %v249 = vrcp.pop %v248
  %v250 = vmul.f32 1.0, %v249
  %v251 = vxor.u32 %v172, 2147483648
  %v252 = vmul.f32 %v251, 1.442695
  %v253 = vpow.pop %v252
  %v254 = vadd.f32 %v253, 1.0
  %v255 = vrcp.pop %v254
  %v256 = vmul.f32 1.0, %v255
  %v257 = vtanh.pop %v241
  %v258 = vxor.u32 %v243, 2147483648
  %v259 = vmul.f32 %v258, 1.442695
  %v260 = vpow.pop %v259
  %v261 = vadd.f32 %v260, 1.0
  %v262 = vrcp.pop %v261
  %v263 = vmul.f32 1.0, %v262
  %v264 = vld [vmem:[#allocation3] sm:$0xff]
  %v265 = vmul.f32 %v256, %v264
  %v266 = vmul.f32 %v250, %v257
  %v267 = vadd.f32 %v265, %v266
  %v268 = vtanh.pop %v267
  %v269 = vmul.f32 %v263, %v268
  %270 = vst [vmem:[#allocation3] sm:$0xff] %v267
  %271 = vst [vmem:[#allocation2] sm:$0xff] %v269
  %272 = vst [vmem:[#allocation4] sm:$0xff] %v269
  %v273 = vld [vmem:[#allocation2] sm:$0xff]
  %v274 = vld [vmem:[%s1] sm:$0xff]
  %v275 = vld [vmem:[%s1 + $0x8] sm:$0xff]
  %v276 = vld [vmem:[%s1 + $0x10] sm:$0xff]
  %v277 = vld [vmem:[%s1 + $0x18] sm:$0xff]
  %v278 = vld [vmem:[%s1 + $0x20] sm:$0xff]
  %v279 = vld [vmem:[%s1 + $0x28] sm:$0xff]
  %v280 = vld [vmem:[%s1 + $0x30] sm:$0xff]
  %v281 = vld [vmem:[%s1 + $0x38] sm:$0xff]
  %v282 = vld [vmem:[%s1 + $0x40] sm:$0xff]
  %v283 = vld [vmem:[%s1 + $0x48] sm:$0xff]
  %v284 = vld [vmem:[%s1 + $0x50] sm:$0xff]
  %v285 = vld [vmem:[%s1 + $0x58] sm:$0xff]
  %v286 = vld [vmem:[%s1 + $0x60] sm:$0xff]
  %v287 = vld [vmem:[%s1 + $0x68] sm:$0xff]
  %v288 = vld [vmem:[%s1 + $0x70] sm:$0xff]
  %v289 = vld [vmem:[%s1 + $0x78] sm:$0xff]
  %v290 = vld [vmem:[%s1 + $0x80] sm:$0xff]
  %v291 = vld [vmem:[%s1 + $0x88] sm:$0xff]
  %v292 = vld [vmem:[%s1 + $0x90] sm:$0xff]
  %v293 = vld [vmem:[%s1 + $0x98] sm:$0xff]
  %v294 = vld [vmem:[%s1 + $0xa0] sm:$0xff]
  %v295 = vld [vmem:[%s1 + $0xa8] sm:$0xff]
  %v296 = vld [vmem:[%s1 + $0xb0] sm:$0xff]
  %v297 = vld [vmem:[%s1 + $0xb8] sm:$0xff]
  %v298 = vld [vmem:[%s1 + $0xc0] sm:$0xff]
  %v299 = vld [vmem:[%s1 + $0xc8] sm:$0xff]
  %v300 = vld [vmem:[%s1 + $0xd0] sm:$0xff]
  %v301 = vld [vmem:[%s1 + $0xd8] sm:$0xff]
  %v302 = vld [vmem:[%s1 + $0xe0] sm:$0xff]
  %v303 = vld [vmem:[%s1 + $0xe8] sm:$0xff]
  %v304 = vld [vmem:[%s1 + $0xf0] sm:$0xff]
  %v305 = vld [vmem:[%s1 + $0xf8] sm:$0xff]
  %v306 = vld [vmem:[%s1 + $0x100] sm:$0xff]
  %v307 = vld [vmem:[%s1 + $0x108] sm:$0xff]
  %v308 = vld [vmem:[%s1 + $0x110] sm:$0xff]
  %v309 = vld [vmem:[%s1 + $0x118] sm:$0xff]
  %v310 = vld [vmem:[%s1 + $0x120] sm:$0xff]
  %v311 = vld [vmem:[%s1 + $0x128] sm:$0xff]
  %v312 = vld [vmem:[%s1 + $0x130] sm:$0xff]
  %v313 = vld [vmem:[%s1 + $0x138] sm:$0xff]
  %v314 = vld [vmem:[%s1 + $0x140] sm:$0xff]
  %v315 = vld [vmem:[%s1 + $0x148] sm:$0xff]
  %v316 = vld [vmem:[%s1 + $0x150] sm:$0xff]
  %v317 = vld [vmem:[%s1 + $0x158] sm:$0xff]
  %v318 = vld [vmem:[%s1 + $0x160] sm:$0xff]
  %v319 = vld [vmem:[%s1 + $0x168] sm:$0xff]
  %v320 = vld [vmem:[%s1 + $0x170] sm:$0xff]
  %v321 = vld [vmem:[%s1 + $0x178] sm:$0xff]
  %v322 = vld [vmem:[%s1 + $0x180] sm:$0xff]
  %v323 = vld [vmem:[%s1 + $0x188] sm:$0xff]
  %v324 = vld [vmem:[%s1 + $0x190] sm:$0xff]
  %v325 = vld [vmem:[%s1 + $0x198] sm:$0xff]
  %v326 = vld [vmem:[%s1 + $0x1a0] sm:$0xff]
  %v327 = vld [vmem:[%s1 + $0x1a8] sm:$0xff]
  %v328 = vld [vmem:[%s1 + $0x1b0] sm:$0xff]
  %v329 = vld [vmem:[%s1 + $0x1b8] sm:$0xff]
  %v330 = vld [vmem:[%s1 + $0x1c0] sm:$0xff]
  %v331 = vld [vmem:[%s1 + $0x1c8] sm:$0xff]
  %v332 = vld [vmem:[%s1 + $0x1d0] sm:$0xff]
  %v333 = vld [vmem:[%s1 + $0x1d8] sm:$0xff]
  %v334 = vld [vmem:[%s1 + $0x1e0] sm:$0xff]
  %v335 = vld [vmem:[%s1 + $0x1e8] sm:$0xff]
  %v336 = vld [vmem:[%s1 + $0x1f0] sm:$0xff]
  %v337 = vld [vmem:[%s1 + $0x1f8] sm:$0xff]
  %s338 = scalar_lea.vmem %s0, 32
  %v339 = vld [vmem:[%s338] sm:$0xff]
  %v340 = vld [vmem:[%s338 + $0x8] sm:$0xff]
  %v341 = vld [vmem:[%s338 + $0x10] sm:$0xff]
  %v342 = vld [vmem:[%s338 + $0x18] sm:$0xff]
  %343 = vmatprep.subr.mxu0 %v275
  %344 = vmatpush1.msra.mxu0 %v274
  %345 = vmatprep.subr.mxu0 %v279
  %346 = vmatpush1.msra.mxu0 %v278
  %347 = vmatprep.subr.mxu0 %v283
  %348 = vmatpush1.msra.mxu0 %v282
  %349 = vmatprep.subr.mxu0 %v287
  %350 = vmatpush1.msra.mxu0 %v286
  %351 = vmatprep.subr.mxu0 %v291
  %352 = vmatpush1.msra.mxu0 %v290
  %353 = vmatprep.subr.mxu0 %v295
  %354 = vmatpush1.msra.mxu0 %v294
  %355 = vmatprep.subr.mxu0 %v299
  %356 = vmatpush1.msra.mxu0 %v298
  %357 = vmatprep.subr.mxu0 %v303
  %358 = vmatpush1.msra.mxu0 %v302
  %359 = vmatprep.subr.mxu0 %v307
  %360 = vmatpush1.msra.mxu0 %v306
  %361 = vmatprep.subr.mxu0 %v311
  %362 = vmatpush1.msra.mxu0 %v310
  %363 = vmatprep.subr.mxu0 %v315
  %364 = vmatpush1.msra.mxu0 %v314
  %365 = vmatprep.subr.mxu0 %v319
  %366 = vmatpush1.msra.mxu0 %v318
  %367 = vmatprep.subr.mxu0 %v323
  %368 = vmatpush1.msra.mxu0 %v322
  %369 = vmatprep.subr.mxu0 %v327
  %370 = vmatpush1.msra.mxu0 %v326
  %371 = vmatprep.subr.mxu0 %v331
  %372 = vmatpush1.msra.mxu0 %v330
  %373 = vmatprep.subr.mxu0 %v335
  %374 = vmatpush1.msra.mxu0 %v334
  %375 = vmatprep.subr.mxu0 0.0
  %376 = vmatpush1.msra.mxu0 0.0
  %377 = vmatprep.subr.mxu0 0.0
  %378 = vmatpush1.msra.mxu0 0.0
  %379 = vmatprep.subr.mxu0 0.0
  %380 = vmatpush1.msra.mxu0 0.0
  %381 = vmatprep.subr.mxu0 0.0
  %382 = vmatpush1.msra.mxu0 0.0
  %383 = vmatprep.subr.mxu0 0.0
  %384 = vmatpush1.msra.mxu0 0.0
  %385 = vmatprep.subr.mxu0 0.0
  %386 = vmatpush1.msra.mxu0 0.0
  %387 = vmatprep.subr.mxu0 0.0
  %388 = vmatpush1.msra.mxu0 0.0
  %389 = vmatprep.subr.mxu0 0.0
  %390 = vmatpush1.msra.mxu0 0.0
  %391 = vmatprep.subr.mxu0 0.0
  %392 = vmatpush1.msra.mxu0 0.0
  %393 = vmatprep.subr.mxu0 0.0
  %394 = vmatpush1.msra.mxu0 0.0
  %395 = vmatprep.subr.mxu0 0.0
  %396 = vmatpush1.msra.mxu0 0.0
  %397 = vmatprep.subr.mxu0 0.0
  %398 = vmatpush1.msra.mxu0 0.0
  %399 = vmatprep.subr.mxu0 0.0
  %400 = vmatpush1.msra.mxu0 0.0
  %401 = vmatprep.subr.mxu0 0.0
  %402 = vmatpush1.msra.mxu0 0.0
  %403 = vmatprep.subr.mxu0 0.0
  %404 = vmatpush1.msra.mxu0 0.0
  %405 = vmatprep.subr.mxu0 0.0
  %406 = vmatpush1.msra.mxu0 0.0
  %407 = vmatprep.mubr.f32.mxu0 0.0
  %408 = vmatmul.mubr.f32.gmra.mrb[0].mxu0 %v273
  %v409 = vpop.f32.mrb[0].mxu0
  %v410 = vadd.f32 %v339, %v409
  %v411 = vpop.f32.mrb[0].mxu0
  %v412 = vadd.f32 %v340, %v411
  %413 = vdwg.mxu0
  %414 = vmatprep.subr.mxu0 %v277
  %415 = vmatpush1.msra.mxu0 %v276
  %416 = vmatprep.subr.mxu0 %v281
  %417 = vmatpush1.msra.mxu0 %v280
  %418 = vmatprep.subr.mxu0 %v285
  %419 = vmatpush1.msra.mxu0 %v284
  %420 = vmatprep.subr.mxu0 %v289
  %421 = vmatpush1.msra.mxu0 %v288
  %422 = vmatprep.subr.mxu0 %v293
  %423 = vmatpush1.msra.mxu0 %v292
  %424 = vmatprep.subr.mxu0 %v297
  %425 = vmatpush1.msra.mxu0 %v296
  %426 = vmatprep.subr.mxu0 %v301
  %427 = vmatpush1.msra.mxu0 %v300
  %428 = vmatprep.subr.mxu0 %v305
  %429 = vmatpush1.msra.mxu0 %v304
  %430 = vmatprep.subr.mxu0 %v309
  %431 = vmatpush1.msra.mxu0 %v308
  %432 = vmatprep.subr.mxu0 %v313
  %433 = vmatpush1.msra.mxu0 %v312
  %434 = vmatprep.subr.mxu0 %v317
  %435 = vmatpush1.msra.mxu0 %v316
  %436 = vmatprep.subr.mxu0 %v321
  %437 = vmatpush1.msra.mxu0 %v320
  %438 = vmatprep.subr.mxu0 %v325
  %439 = vmatpush1.msra.mxu0 %v324
  %440 = vmatprep.subr.mxu0 %v329
  %441 = vmatpush1.msra.mxu0 %v328
  %442 = vmatprep.subr.mxu0 %v333
  %443 = vmatpush1.msra.mxu0 %v332
  %444 = vmatprep.subr.mxu0 %v337
  %445 = vmatpush1.msra.mxu0 %v336
  %446 = vmatprep.subr.mxu0 0.0
  %447 = vmatpush1.msra.mxu0 0.0
  %448 = vmatprep.subr.mxu0 0.0
  %449 = vmatpush1.msra.mxu0 0.0
  %450 = vmatprep.subr.mxu0 0.0
  %451 = vmatpush1.msra.mxu0 0.0
  %452 = vmatprep.subr.mxu0 0.0
  %453 = vmatpush1.msra.mxu0 0.0
  %454 = vmatprep.subr.mxu0 0.0
  %455 = vmatpush1.msra.mxu0 0.0
  %456 = vmatprep.subr.mxu0 0.0
  %457 = vmatpush1.msra.mxu0 0.0
  %458 = vmatprep.subr.mxu0 0.0
  %459 = vmatpush1.msra.mxu0 0.0
  %460 = vmatprep.subr.mxu0 0.0
  %461 = vmatpush1.msra.mxu0 0.0
  %462 = vmatprep.subr.mxu0 0.0
  %463 = vmatpush1.msra.mxu0 0.0
  %464 = vmatprep.subr.mxu0 0.0
  %465 = vmatpush1.msra.mxu0 0.0
  %466 = vmatprep.subr.mxu0 0.0
  %467 = vmatpush1.msra.mxu0 0.0
  %468 = vmatprep.subr.mxu0 0.0
  %469 = vmatpush1.msra.mxu0 0.0
  %470 = vmatprep.subr.mxu0 0.0
  %471 = vmatpush1.msra.mxu0 0.0
  %472 = vmatprep.subr.mxu0 0.0
  %473 = vmatpush1.msra.mxu0 0.0
  %474 = vmatprep.subr.mxu0 0.0
  %475 = vmatpush1.msra.mxu0 0.0
  %476 = vmatprep.subr.mxu0 0.0
  %477 = vmatpush1.msra.mxu0 0.0
  %478 = vmatprep.mubr.f32.mxu0 0.0
  %479 = vmatmul.mubr.f32.gmra.mrb[0].mxu0 %v273
  %v480 = vpop.f32.mrb[0].mxu0
  %v481 = vadd.f32 %v341, %v480
  %v482 = vpop.f32.mrb[0].mxu0
  %v483 = vadd.f32 %v342, %v482
  %484 = vdwg.mxu0
  %v485 = vxor.u32 %v410, 2147483648
  %v486 = vmul.f32 %v485, 1.442695
  %v487 = vpow.pop %v486
  %v488 = vadd.f32 %v487, 1.0
  %v489 = vrcp.pop %v488
  %v490 = vmul.f32 1.0, %v489
  %v491 = vxor.u32 %v412, 2147483648
  %v492 = vmul.f32 %v491, 1.442695
  %v493 = vpow.pop %v492
  %v494 = vadd.f32 %v493, 1.0
  %v495 = vrcp.pop %v494
  %v496 = vmul.f32 1.0, %v495
  %v497 = vtanh.pop %v481
  %v498 = vxor.u32 %v483, 2147483648
  %v499 = vmul.f32 %v498, 1.442695
  %v500 = vpow.pop %v499
  %v501 = vadd.f32 %v500, 1.0
  %v502 = vrcp.pop %v501
  %v503 = vmul.f32 1.0, %v502
  %v504 = vld [vmem:[#allocation3] sm:$0xff]
  %v505 = vmul.f32 %v496, %v504
  %v506 = vmul.f32 %v490, %v497
  %v507 = vadd.f32 %v505, %v506
  %v508 = vtanh.pop %v507
  %v509 = vmul.f32 %v503, %v508
  %510 = vst [vmem:[#allocation3] sm:$0xff] %v507
  %511 = vst [vmem:[#allocation2] sm:$0xff] %v509
  %s512 = scalar_lea.vmem [#allocation4], 8
  %513 = vst [vmem:[%s512] sm:$0xff] %v509
  %v514 = vld [vmem:[#allocation2] sm:$0xff]
  %v515 = vld [vmem:[%s1] sm:$0xff]
  %v516 = vld [vmem:[%s1 + $0x8] sm:$0xff]
  %v517 = vld [vmem:[%s1 + $0x10] sm:$0xff]
  %v518 = vld [vmem:[%s1 + $0x18] sm:$0xff]
  %v519 = vld [vmem:[%s1 + $0x20] sm:$0xff]
  %v520 = vld [vmem:[%s1 + $0x28] sm:$0xff]
  %v521 = vld [vmem:[%s1 + $0x30] sm:$0xff]
  %v522 = vld [vmem:[%s1 + $0x38] sm:$0xff]
  %v523 = vld [vmem:[%s1 + $0x40] sm:$0xff]
  %v524 = vld [vmem:[%s1 + $0x48] sm:$0xff]
  %v525 = vld [vmem:[%s1 + $0x50] sm:$0xff]
  %v526 = vld [vmem:[%s1 + $0x58] sm:$0xff]
  %v527 = vld [vmem:[%s1 + $0x60] sm:$0xff]
  %v528 = vld [vmem:[%s1 + $0x68] sm:$0xff]
  %v529 = vld [vmem:[%s1 + $0x70] sm:$0xff]
  %v530 = vld [vmem:[%s1 + $0x78] sm:$0xff]
  %v531 = vld [vmem:[%s1 + $0x80] sm:$0xff]
  %v532 = vld [vmem:[%s1 + $0x88] sm:$0xff]
  %v533 = vld [vmem:[%s1 + $0x90] sm:$0xff]
  %v534 = vld [vmem:[%s1 + $0x98] sm:$0xff]
  %v535 = vld [vmem:[%s1 + $0xa0] sm:$0xff]
  %v536 = vld [vmem:[%s1 + $0xa8] sm:$0xff]
  %v537 = vld [vmem:[%s1 + $0xb0] sm:$0xff]
  %v538 = vld [vmem:[%s1 + $0xb8] sm:$0xff]
  %v539 = vld [vmem:[%s1 + $0xc0] sm:$0xff]
  %v540 = vld [vmem:[%s1 + $0xc8] sm:$0xff]
  %v541 = vld [vmem:[%s1 + $0xd0] sm:$0xff]
  %v542 = vld [vmem:[%s1 + $0xd8] sm:$0xff]
  %v543 = vld [vmem:[%s1 + $0xe0] sm:$0xff]
  %v544 = vld [vmem:[%s1 + $0xe8] sm:$0xff]
  %v545 = vld [vmem:[%s1 + $0xf0] sm:$0xff]
  %v546 = vld [vmem:[%s1 + $0xf8] sm:$0xff]
  %v547 = vld [vmem:[%s1 + $0x100] sm:$0xff]
  %v548 = vld [vmem:[%s1 + $0x108] sm:$0xff]
  %v549 = vld [vmem:[%s1 + $0x110] sm:$0xff]
  %v550 = vld [vmem:[%s1 + $0x118] sm:$0xff]
  %v551 = vld [vmem:[%s1 + $0x120] sm:$0xff]
  %v552 = vld [vmem:[%s1 + $0x128] sm:$0xff]
  %v553 = vld [vmem:[%s1 + $0x130] sm:$0xff]
  %v554 = vld [vmem:[%s1 + $0x138] sm:$0xff]
  %v555 = vld [vmem:[%s1 + $0x140] sm:$0xff]
  %v556 = vld [vmem:[%s1 + $0x148] sm:$0xff]
  %v557 = vld [vmem:[%s1 + $0x150] sm:$0xff]
  %v558 = vld [vmem:[%s1 + $0x158] sm:$0xff]
  %v559 = vld [vmem:[%s1 + $0x160] sm:$0xff]
  %v560 = vld [vmem:[%s1 + $0x168] sm:$0xff]
  %v561 = vld [vmem:[%s1 + $0x170] sm:$0xff]
  %v562 = vld [vmem:[%s1 + $0x178] sm:$0xff]
  %v563 = vld [vmem:[%s1 + $0x180] sm:$0xff]
  %v564 = vld [vmem:[%s1 + $0x188] sm:$0xff]
  %v565 = vld [vmem:[%s1 + $0x190] sm:$0xff]
  %v566 = vld [vmem:[%s1 + $0x198] sm:$0xff]
  %v567 = vld [vmem:[%s1 + $0x1a0] sm:$0xff]
  %v568 = vld [vmem:[%s1 + $0x1a8] sm:$0xff]
  %v569 = vld [vmem:[%s1 + $0x1b0] sm:$0xff]
  %v570 = vld [vmem:[%s1 + $0x1b8] sm:$0xff]
  %v571 = vld [vmem:[%s1 + $0x1c0] sm:$0xff]
  %v572 = vld [vmem:[%s1 + $0x1c8] sm:$0xff]
  %v573 = vld [vmem:[%s1 + $0x1d0] sm:$0xff]
  %v574 = vld [vmem:[%s1 + $0x1d8] sm:$0xff]
  %v575 = vld [vmem:[%s1 + $0x1e0] sm:$0xff]
  %v576 = vld [vmem:[%s1 + $0x1e8] sm:$0xff]
  %v577 = vld [vmem:[%s1 + $0x1f0] sm:$0xff]
  %v578 = vld [vmem:[%s1 + $0x1f8] sm:$0xff]
  %s579 = scalar_lea.vmem %s0, 64
  %v580 = vld [vmem:[%s579] sm:$0xff]
  %v581 = vld [vmem:[%s579 + $0x8] sm:$0xff]
  %v582 = vld [vmem:[%s579 + $0x10] sm:$0xff]
  %v583 = vld [vmem:[%s579 + $0x18] sm:$0xff]
  %584 = vmatprep.subr.mxu0 %v516
  %585 = vmatpush1.msra.mxu0 %v515
  %586 = vmatprep.subr.mxu0 %v520
  %587 = vmatpush1.msra.mxu0 %v519
  %588 = vmatprep.subr.mxu0 %v524
  %589 = vmatpush1.msra.mxu0 %v523
  %590 = vmatprep.subr.mxu0 %v528
  %591 = vmatpush1.msra.mxu0 %v527
  %592 = vmatprep.subr.mxu0 %v532
  %593 = vmatpush1.msra.mxu0 %v531
  %594 = vmatprep.subr.mxu0 %v536
  %595 = vmatpush1.msra.mxu0 %v535
  %596 = vmatprep.subr.mxu0 %v540
  %597 = vmatpush1.msra.mxu0 %v539
  %598 = vmatprep.subr.mxu0 %v544
  %599 = vmatpush1.msra.mxu0 %v543
  %600 = vmatprep.subr.mxu0 %v548
  %601 = vmatpush1.msra.mxu0 %v547
  %602 = vmatprep.subr.mxu0 %v552
  %603 = vmatpush1.msra.mxu0 %v551
  %604 = vmatprep.subr.mxu0 %v556
  %605 = vmatpush1.msra.mxu0 %v555
  %606 = vmatprep.subr.mxu0 %v560
  %607 = vmatpush1.msra.mxu0 %v559
  %608 = vmatprep.subr.mxu0 %v564
  %609 = vmatpush1.msra.mxu0 %v563
  %610 = vmatprep.subr.mxu0 %v568
  %611 = vmatpush1.msra.mxu0 %v567
  %612 = vmatprep.subr.mxu0 %v572
  %613 = vmatpush1.msra.mxu0 %v571
  %614 = vmatprep.subr.mxu0 %v576
  %615 = vmatpush1.msra.mxu0 %v575
  %616 = vmatprep.subr.mxu0 0.0
  %617 = vmatpush1.msra.mxu0 0.0
  %618 = vmatprep.subr.mxu0 0.0
  %619 = vmatpush1.msra.mxu0 0.0
  %620 = vmatprep.subr.mxu0 0.0
  %621 = vmatpush1.msra.mxu0 0.0
  %622 = vmatprep.subr.mxu0 0.0
  %623 = vmatpush1.msra.mxu0 0.0
  %624 = vmatprep.subr.mxu0 0.0
  %625 = vmatpush1.msra.mxu0 0.0
  %626 = vmatprep.subr.mxu0 0.0
  %627 = vmatpush1.msra.mxu0 0.0
  %628 = vmatprep.subr.mxu0 0.0
  %629 = vmatpush1.msra.mxu0 0.0
  %630 = vmatprep.subr.mxu0 0.0
  %631 = vmatpush1.msra.mxu0 0.0
  %632 = vmatprep.subr.mxu0 0.0
  %633 = vmatpush1.msra.mxu0 0.0
  %634 = vmatprep.subr.mxu0 0.0
  %635 = vmatpush1.msra.mxu0 0.0
  %636 = vmatprep.subr.mxu0 0.0
  %637 = vmatpush1.msra.mxu0 0.0
  %638 = vmatprep.subr.mxu0 0.0
  %639 = vmatpush1.msra.mxu0 0.0
  %640 = vmatprep.subr.mxu0 0.0
  %641 = vmatpush1.msra.mxu0 0.0
  %642 = vmatprep.subr.mxu0 0.0
  %643 = vmatpush1.msra.mxu0 0.0
  %644 = vmatprep.subr.mxu0 0.0
  %645 = vmatpush1.msra.mxu0 0.0
  %646 = vmatprep.subr.mxu0 0.0
  %647 = vmatpush1.msra.mxu0 0.0
  %648 = vmatprep.mubr.f32.mxu0 0.0
  %649 = vmatmul.mubr.f32.gmra.mrb[0].mxu0 %v514
  %v650 = vpop.f32.mrb[0].mxu0
  %v651 = vadd.f32 %v580, %v650
  %v652 = vpop.f32.mrb[0].mxu0
  %v653 = vadd.f32 %v581, %v652
  %654 = vdwg.mxu0
  %655 = vmatprep.subr.mxu0 %v518
  %656 = vmatpush1.msra.mxu0 %v517
  %657 = vmatprep.subr.mxu0 %v522
  %658 = vmatpush1.msra.mxu0 %v521
  %659 = vmatprep.subr.mxu0 %v526
  %660 = vmatpush1.msra.mxu0 %v525
  %661 = vmatprep.subr.mxu0 %v530
  %662 = vmatpush1.msra.mxu0 %v529
  %663 = vmatprep.subr.mxu0 %v534
  %664 = vmatpush1.msra.mxu0 %v533
  %665 = vmatprep.subr.mxu0 %v538
  %666 = vmatpush1.msra.mxu0 %v537
  %667 = vmatprep.subr.mxu0 %v542
  %668 = vmatpush1.msra.mxu0 %v541
  %669 = vmatprep.subr.mxu0 %v546
  %670 = vmatpush1.msra.mxu0 %v545
  %671 = vmatprep.subr.mxu0 %v550
  %672 = vmatpush1.msra.mxu0 %v549
  %673 = vmatprep.subr.mxu0 %v554
  %674 = vmatpush1.msra.mxu0 %v553
  %675 = vmatprep.subr.mxu0 %v558
  %676 = vmatpush1.msra.mxu0 %v557
  %677 = vmatprep.subr.mxu0 %v562
  %678 = vmatpush1.msra.mxu0 %v561
  %679 = vmatprep.subr.mxu0 %v566
  %680 = vmatpush1.msra.mxu0 %v565
  %681 = vmatprep.subr.mxu0 %v570
  %682 = vmatpush1.msra.mxu0 %v569
  %683 = vmatprep.subr.mxu0 %v574
  %684 = vmatpush1.msra.mxu0 %v573
  %685 = vmatprep.subr.mxu0 %v578
  %686 = vmatpush1.msra.mxu0 %v577
  %687 = vmatprep.subr.mxu0 0.0
  %688 = vmatpush1.msra.mxu0 0.0
  %689 = vmatprep.subr.mxu0 0.0
  %690 = vmatpush1.msra.mxu0 0.0
  %691 = vmatprep.subr.mxu0 0.0
  %692 = vmatpush1.msra.mxu0 0.0
  %693 = vmatprep.subr.mxu0 0.0
  %694 = vmatpush1.msra.mxu0 0.0
  %695 = vmatprep.subr.mxu0 0.0
  %696 = vmatpush1.msra.mxu0 0.0
  %697 = vmatprep.subr.mxu0 0.0
  %698 = vmatpush1.msra.mxu0 0.0
  %699 = vmatprep.subr.mxu0 0.0
  %700 = vmatpush1.msra.mxu0 0.0
  %701 = vmatprep.subr.mxu0 0.0
  %702 = vmatpush1.msra.mxu0 0.0
  %703 = vmatprep.subr.mxu0 0.0
  %704 = vmatpush1.msra.mxu0 0.0
  %705 = vmatprep.subr.mxu0 0.0
  %706 = vmatpush1.msra.mxu0 0.0
  %707 = vmatprep.subr.mxu0 0.0
  %708 = vmatpush1.msra.mxu0 0.0
  %709 = vmatprep.subr.mxu0 0.0
  %710 = vmatpush1.msra.mxu0 0.0
  %711 = vmatprep.subr.mxu0 0.0
  %712 = vmatpush1.msra.mxu0 0.0
  %713 = vmatprep.subr.mxu0 0.0
  %714 = vmatpush1.msra.mxu0 0.0
  %715 = vmatprep.subr.mxu0 0.0
  %716 = vmatpush1.msra.mxu0 0.0
  %717 = vmatprep.subr.mxu0 0.0
  %718 = vmatpush1.msra.mxu0 0.0
  %719 = vmatprep.mubr.f32.mxu0 0.0
  %720 = vmatmul.mubr.f32.gmra.mrb[0].mxu0 %v514
  %v721 = vpop.f32.mrb[0].mxu0
  %v722 = vadd.f32 %v582, %v721
  %v723 = vpop.f32.mrb[0].mxu0
  %v724 = vadd.f32 %v583, %v723
  %725 = vdwg.mxu0
  %v726 = vxor.u32 %v651, 2147483648
  %v727 = vmul.f32 %v726, 1.442695
  %v728 = vpow.pop %v727
  %v729 = vadd.f32 %v728, 1.0
  %v730 = vrcp.pop %v729
  %v731 = vmul.f32 1.0, %v730
  %v732 = vxor.u32 %v653, 2147483648
  %v733 = vmul.f32 %v732, 1.442695
  %v734 = vpow.pop %v733
  %v735 = vadd.f32 %v734, 1.0
  %v736 = vrcp.pop %v735
  %v737 = vmul.f32 1.0, %v736
  %v738 = vtanh.pop %v722
  %v739 = vxor.u32 %v724, 2147483648
  %v740 = vmul.f32 %v739, 1.442695
  %v741 = vpow.pop %v740
  %v742 = vadd.f32 %v741, 1.0
  %v743 = vrcp.pop %v742
  %v744 = vmul.f32 1.0, %v743
  %v745 = vld [vmem:[#allocation3] sm:$0xff]
  %v746 = vmul.f32 %v737, %v745
  %v747 = vmul.f32 %v731, %v738
  %v748 = vadd.f32 %v746, %v747
  %v749 = vtanh.pop %v748
  %v750 = vmul.f32 %v744, %v749
  %751 = vst [vmem:[#allocation3] sm:$0xff] %v748
  %752 = vst [vmem:[#allocation2] sm:$0xff] %v750
  %s753 = scalar_lea.vmem [#allocation4], 16
  %754 = vst [vmem:[%s753] sm:$0xff] %v750
  %v755 = vld [vmem:[#allocation2] sm:$0xff]
  %v756 = vld [vmem:[%s1] sm:$0xff]
  %v757 = vld [vmem:[%s1 + $0x8] sm:$0xff]
  %v758 = vld [vmem:[%s1 + $0x10] sm:$0xff]
  %v759 = vld [vmem:[%s1 + $0x18] sm:$0xff]
  %v760 = vld [vmem:[%s1 + $0x20] sm:$0xff]
  %v761 = vld [vmem:[%s1 + $0x28] sm:$0xff]
  %v762 = vld [vmem:[%s1 + $0x30] sm:$0xff]
  %v763 = vld [vmem:[%s1 + $0x38] sm:$0xff]
  %v764 = vld [vmem:[%s1 + $0x40] sm:$0xff]
  %v765 = vld [vmem:[%s1 + $0x48] sm:$0xff]
  %v766 = vld [vmem:[%s1 + $0x50] sm:$0xff]
  %v767 = vld [vmem:[%s1 + $0x58] sm:$0xff]
  %v768 = vld [vmem:[%s1 + $0x60] sm:$0xff]
  %v769 = vld [vmem:[%s1 + $0x68] sm:$0xff]
  %v770 = vld [vmem:[%s1 + $0x70] sm:$0xff]
  %v771 = vld [vmem:[%s1 + $0x78] sm:$0xff]
  %v772 = vld [vmem:[%s1 + $0x80] sm:$0xff]
  %v773 = vld [vmem:[%s1 + $0x88] sm:$0xff]
  %v774 = vld [vmem:[%s1 + $0x90] sm:$0xff]
  %v775 = vld [vmem:[%s1 + $0x98] sm:$0xff]
  %v776 = vld [vmem:[%s1 + $0xa0] sm:$0xff]
  %v777 = vld [vmem:[%s1 + $0xa8] sm:$0xff]
  %v778 = vld [vmem:[%s1 + $0xb0] sm:$0xff]
  %v779 = vld [vmem:[%s1 + $0xb8] sm:$0xff]
  %v780 = vld [vmem:[%s1 + $0xc0] sm:$0xff]
  %v781 = vld [vmem:[%s1 + $0xc8] sm:$0xff]
  %v782 = vld [vmem:[%s1 + $0xd0] sm:$0xff]
  %v783 = vld [vmem:[%s1 + $0xd8] sm:$0xff]
  %v784 = vld [vmem:[%s1 + $0xe0] sm:$0xff]
  %v785 = vld [vmem:[%s1 + $0xe8] sm:$0xff]
  %v786 = vld [vmem:[%s1 + $0xf0] sm:$0xff]
  %v787 = vld [vmem:[%s1 + $0xf8] sm:$0xff]
  %v788 = vld [vmem:[%s1 + $0x100] sm:$0xff]
  %v789 = vld [vmem:[%s1 + $0x108] sm:$0xff]
  %v790 = vld [vmem:[%s1 + $0x110] sm:$0xff]
  %v791 = vld [vmem:[%s1 + $0x118] sm:$0xff]
  %v792 = vld [vmem:[%s1 + $0x120] sm:$0xff]
  %v793 = vld [vmem:[%s1 + $0x128] sm:$0xff]
  %v794 = vld [vmem:[%s1 + $0x130] sm:$0xff]
  %v795 = vld [vmem:[%s1 + $0x138] sm:$0xff]
  %v796 = vld [vmem:[%s1 + $0x140] sm:$0xff]
  %v797 = vld [vmem:[%s1 + $0x148] sm:$0xff]
  %v798 = vld [vmem:[%s1 + $0x150] sm:$0xff]
  %v799 = vld [vmem:[%s1 + $0x158] sm:$0xff]
  %v800 = vld [vmem:[%s1 + $0x160] sm:$0xff]
  %v801 = vld [vmem:[%s1 + $0x168] sm:$0xff]
  %v802 = vld [vmem:[%s1 + $0x170] sm:$0xff]
  %v803 = vld [vmem:[%s1 + $0x178] sm:$0xff]
  %v804 = vld [vmem:[%s1 + $0x180] sm:$0xff]
  %v805 = vld [vmem:[%s1 + $0x188] sm:$0xff]
  %v806 = vld [vmem:[%s1 + $0x190] sm:$0xff]
  %v807 = vld [vmem:[%s1 + $0x198] sm:$0xff]
  %v808 = vld [vmem:[%s1 + $0x1a0] sm:$0xff]
  %v809 = vld [vmem:[%s1 + $0x1a8] sm:$0xff]
  %v810 = vld [vmem:[%s1 + $0x1b0] sm:$0xff]
  %v811 = vld [vmem:[%s1 + $0x1b8] sm:$0xff]
  %v812 = vld [vmem:[%s1 + $0x1c0] sm:$0xff]
  %v813 = vld [vmem:[%s1 + $0x1c8] sm:$0xff]
  %v814 = vld [vmem:[%s1 + $0x1d0] sm:$0xff]
  %v815 = vld [vmem:[%s1 + $0x1d8] sm:$0xff]
  %v816 = vld [vmem:[%s1 + $0x1e0] sm:$0xff]
  %v817 = vld [vmem:[%s1 + $0x1e8] sm:$0xff]
  %v818 = vld [vmem:[%s1 + $0x1f0] sm:$0xff]
  %v819 = vld [vmem:[%s1 + $0x1f8] sm:$0xff]
  %s820 = scalar_lea.vmem %s0, 96
  %v821 = vld [vmem:[%s820] sm:$0xff]
  %v822 = vld [vmem:[%s820 + $0x8] sm:$0xff]
  %v823 = vld [vmem:[%s820 + $0x10] sm:$0xff]
  %v824 = vld [vmem:[%s820 + $0x18] sm:$0xff]
  %825 = vmatprep.subr.mxu0 %v757
  %826 = vmatpush1.msra.mxu0 %v756
  %827 = vmatprep.subr.mxu0 %v761
  %828 = vmatpush1.msra.mxu0 %v760
  %829 = vmatprep.subr.mxu0 %v765
  %830 = vmatpush1.msra.mxu0 %v764
  %831 = vmatprep.subr.mxu0 %v769
  %832 = vmatpush1.msra.mxu0 %v768
  %833 = vmatprep.subr.mxu0 %v773
  %834 = vmatpush1.msra.mxu0 %v772
  %835 = vmatprep.subr.mxu0 %v777
  %836 = vmatpush1.msra.mxu0 %v776
  %837 = vmatprep.subr.mxu0 %v781
  %838 = vmatpush1.msra.mxu0 %v780
  %839 = vmatprep.subr.mxu0 %v785
  %840 = vmatpush1.msra.mxu0 %v784
  %841 = vmatprep.subr.mxu0 %v789
  %842 = vmatpush1.msra.mxu0 %v788
  %843 = vmatprep.subr.mxu0 %v793
  %844 = vmatpush1.msra.mxu0 %v792
  %845 = vmatprep.subr.mxu0 %v797
  %846 = vmatpush1.msra.mxu0 %v796
  %847 = vmatprep.subr.mxu0 %v801
  %848 = vmatpush1.msra.mxu0 %v800
  %849 = vmatprep.subr.mxu0 %v805
  %850 = vmatpush1.msra.mxu0 %v804
  %851 = vmatprep.subr.mxu0 %v809
  %852 = vmatpush1.msra.mxu0 %v808
  %853 = vmatprep.subr.mxu0 %v813
  %854 = vmatpush1.msra.mxu0 %v812
  %855 = vmatprep.subr.mxu0 %v817
  %856 = vmatpush1.msra.mxu0 %v816
  %857 = vmatprep.subr.mxu0 0.0
  %858 = vmatpush1.msra.mxu0 0.0
  %859 = vmatprep.subr.mxu0 0.0
  %860 = vmatpush1.msra.mxu0 0.0
  %861 = vmatprep.subr.mxu0 0.0
  %862 = vmatpush1.msra.mxu0 0.0
  %863 = vmatprep.subr.mxu0 0.0
  %864 = vmatpush1.msra.mxu0 0.0
  %865 = vmatprep.subr.mxu0 0.0
  %866 = vmatpush1.msra.mxu0 0.0
  %867 = vmatprep.subr.mxu0 0.0
  %868 = vmatpush1.msra.mxu0 0.0
  %869 = vmatprep.subr.mxu0 0.0
  %870 = vmatpush1.msra.mxu0 0.0
  %871 = vmatprep.subr.mxu0 0.0
  %872 = vmatpush1.msra.mxu0 0.0
  %873 = vmatprep.subr.mxu0 0.0
  %874 = vmatpush1.msra.mxu0 0.0
  %875 = vmatprep.subr.mxu0 0.0
  %876 = vmatpush1.msra.mxu0 0.0
  %877 = vmatprep.subr.mxu0 0.0
  %878 = vmatpush1.msra.mxu0 0.0
  %879 = vmatprep.subr.mxu0 0.0
  %880 = vmatpush1.msra.mxu0 0.0
  %881 = vmatprep.subr.mxu0 0.0
  %882 = vmatpush1.msra.mxu0 0.0
  %883 = vmatprep.subr.mxu0 0.0
  %884 = vmatpush1.msra.mxu0 0.0
  %885 = vmatprep.subr.mxu0 0.0
  %886 = vmatpush1.msra.mxu0 0.0
  %887 = vmatprep.subr.mxu0 0.0
  %888 = vmatpush1.msra.mxu0 0.0
  %889 = vmatprep.mubr.f32.mxu0 0.0
  %890 = vmatmul.mubr.f32.gmra.mrb[0].mxu0 %v755
  %v891 = vpop.f32.mrb[0].mxu0
  %v892 = vadd.f32 %v821, %v891
  %v893 = vpop.f32.mrb[0].mxu0
  %v894 = vadd.f32 %v822, %v893
  %895 = vdwg.mxu0
  %896 = vmatprep.subr.mxu0 %v759
  %897 = vmatpush1.msra.mxu0 %v758
  %898 = vmatprep.subr.mxu0 %v763
  %899 = vmatpush1.msra.mxu0 %v762
  %900 = vmatprep.subr.mxu0 %v767
  %901 = vmatpush1.msra.mxu0 %v766
  %902 = vmatprep.subr.mxu0 %v771
  %903 = vmatpush1.msra.mxu0 %v770
  %904 = vmatprep.subr.mxu0 %v775
  %905 = vmatpush1.msra.mxu0 %v774
  %906 = vmatprep.subr.mxu0 %v779
  %907 = vmatpush1.msra.mxu0 %v778
  %908 = vmatprep.subr.mxu0 %v783
  %909 = vmatpush1.msra.mxu0 %v782
  %910 = vmatprep.subr.mxu0 %v787
  %911 = vmatpush1.msra.mxu0 %v786
  %912 = vmatprep.subr.mxu0 %v791
  %913 = vmatpush1.msra.mxu0 %v790
  %914 = vmatprep.subr.mxu0 %v795
  %915 = vmatpush1.msra.mxu0 %v794
  %916 = vmatprep.subr.mxu0 %v799
  %917 = vmatpush1.msra.mxu0 %v798
  %918 = vmatprep.subr.mxu0 %v803
  %919 = vmatpush1.msra.mxu0 %v802
  %920 = vmatprep.subr.mxu0 %v807
  %921 = vmatpush1.msra.mxu0 %v806
  %922 = vmatprep.subr.mxu0 %v811
  %923 = vmatpush1.msra.mxu0 %v810
  %924 = vmatprep.subr.mxu0 %v815
  %925 = vmatpush1.msra.mxu0 %v814
  %926 = vmatprep.subr.mxu0 %v819
  %927 = vmatpush1.msra.mxu0 %v818
  %928 = vmatprep.subr.mxu0 0.0
  %929 = vmatpush1.msra.mxu0 0.0
  %930 = vmatprep.subr.mxu0 0.0
  %931 = vmatpush1.msra.mxu0 0.0
  %932 = vmatprep.subr.mxu0 0.0
  %933 = vmatpush1.msra.mxu0 0.0
  %934 = vmatprep.subr.mxu0 0.0
  %935 = vmatpush1.msra.mxu0 0.0
  %936 = vmatprep.subr.mxu0 0.0
  %937 = vmatpush1.msra.mxu0 0.0
  %938 = vmatprep.subr.mxu0 0.0
  %939 = vmatpush1.msra.mxu0 0.0
  %940 = vmatprep.subr.mxu0 0.0
  %941 = vmatpush1.msra.mxu0 0.0
  %942 = vmatprep.subr.mxu0 0.0
  %943 = vmatpush1.msra.mxu0 0.0
  %944 = vmatprep.subr.mxu0 0.0
  %945 = vmatpush1.msra.mxu0 0.0
  %946 = vmatprep.subr.mxu0 0.0
  %947 = vmatpush1.msra.mxu0 0.0
  %948 = vmatprep.subr.mxu0 0.0
  %949 = vmatpush1.msra.mxu0 0.0
  %950 = vmatprep.subr.mxu0 0.0
  %951 = vmatpush1.msra.mxu0 0.0
  %952 = vmatprep.subr.mxu0 0.0
  %953 = vmatpush1.msra.mxu0 0.0
  %954 = vmatprep.subr.mxu0 0.0
  %955 = vmatpush1.msra.mxu0 0.0
  %956 = vmatprep.subr.mxu0 0.0
  %957 = vmatpush1.msra.mxu0 0.0
  %958 = vmatprep.subr.mxu0 0.0
  %959 = vmatpush1.msra.mxu0 0.0
  %960 = vmatprep.mubr.f32.mxu0 0.0
  %961 = vmatmul.mubr.f32.gmra.mrb[0].mxu0 %v755
  %v962 = vpop.f32.mrb[0].mxu0
  %v963 = vadd.f32 %v823, %v962
  %v964 = vpop.f32.mrb[0].mxu0
  %v965 = vadd.f32 %v824, %v964
  %966 = vdwg.mxu0
  %v967 = vxor.u32 %v892, 2147483648
  %v968 = vmul.f32 %v967, 1.442695
  %v969 = vpow.pop %v968
  %v970 = vadd.f32 %v969, 1.0
  %v971 = vrcp.pop %v970
  %v972 = vmul.f32 1.0, %v971
  %v973 = vxor.u32 %v894, 2147483648
  %v974 = vmul.f32 %v973, 1.442695
  %v975 = vpow.pop %v974
  %v976 = vadd.f32 %v975, 1.0
  %v977 = vrcp.pop %v976
  %v978 = vmul.f32 1.0, %v977
  %v979 = vtanh.pop %v963
  %v980 = vxor.u32 %v965, 2147483648
  %v981 = vmul.f32 %v980, 1.442695
  %v982 = vpow.pop %v981
  %v983 = vadd.f32 %v982, 1.0
  %v984 = vrcp.pop %v983
  %v985 = vmul.f32 1.0, %v984
  %v986 = vld [vmem:[#allocation3] sm:$0xff]
  %v987 = vmul.f32 %v978, %v986
  %v988 = vmul.f32 %v972, %v979
  %v989 = vadd.f32 %v987, %v988
  %v990 = vtanh.pop %v989
  %v991 = vmul.f32 %v985, %v990
  %992 = vst [vmem:[#allocation3] sm:$0xff] %v989
  %993 = vst [vmem:[#allocation2] sm:$0xff] %v991
  %s994 = scalar_lea.vmem [#allocation4], 24
  %995 = vst [vmem:[%s994] sm:$0xff] %v991
  %v996 = vld [vmem:[#allocation2] sm:$0xff]
  %v997 = vld [vmem:[%s1] sm:$0xff]
  %v998 = vld [vmem:[%s1 + $0x8] sm:$0xff]
  %v999 = vld [vmem:[%s1 + $0x10] sm:$0xff]
  %v1000 = vld [vmem:[%s1 + $0x18] sm:$0xff]
  %v1001 = vld [vmem:[%s1 + $0x20] sm:$0xff]
  %v1002 = vld [vmem:[%s1 + $0x28] sm:$0xff]
  %v1003 = vld [vmem:[%s1 + $0x30] sm:$0xff]
  %v1004 = vld [vmem:[%s1 + $0x38] sm:$0xff]
  %v1005 = vld [vmem:[%s1 + $0x40] sm:$0xff]
  %v1006 = vld [vmem:[%s1 + $0x48] sm:$0xff]
  %v1007 = vld [vmem:[%s1 + $0x50] sm:$0xff]
  %v1008 = vld [vmem:[%s1 + $0x58] sm:$0xff]
  %v1009 = vld [vmem:[%s1 + $0x60] sm:$0xff]
  %v1010 = vld [vmem:[%s1 + $0x68] sm:$0xff]
  %v1011 = vld [vmem:[%s1 + $0x70] sm:$0xff]
  %v1012 = vld [vmem:[%s1 + $0x78] sm:$0xff]
  %v1013 = vld [vmem:[%s1 + $0x80] sm:$0xff]
  %v1014 = vld [vmem:[%s1 + $0x88] sm:$0xff]
  %v1015 = vld [vmem:[%s1 + $0x90] sm:$0xff]
  %v1016 = vld [vmem:[%s1 + $0x98] sm:$0xff]
  %v1017 = vld [vmem:[%s1 + $0xa0] sm:$0xff]
  %v1018 = vld [vmem:[%s1 + $0xa8] sm:$0xff]
  %v1019 = vld [vmem:[%s1 + $0xb0] sm:$0xff]
  %v1020 = vld [vmem:[%s1 + $0xb8] sm:$0xff]
  %v1021 = vld [vmem:[%s1 + $0xc0] sm:$0xff]
  %v1022 = vld [vmem:[%s1 + $0xc8] sm:$0xff]
  %v1023 = vld [vmem:[%s1 + $0xd0] sm:$0xff]
  %v1024 = vld [vmem:[%s1 + $0xd8] sm:$0xff]
  %v1025 = vld [vmem:[%s1 + $0xe0] sm:$0xff]
  %v1026 = vld [vmem:[%s1 + $0xe8] sm:$0xff]
  %v1027 = vld [vmem:[%s1 + $0xf0] sm:$0xff]
  %v1028 = vld [vmem:[%s1 + $0xf8] sm:$0xff]
  %v1029 = vld [vmem:[%s1 + $0x100] sm:$0xff]
  %v1030 = vld [vmem:[%s1 + $0x108] sm:$0xff]
  %v1031 = vld [vmem:[%s1 + $0x110] sm:$0xff]
  %v1032 = vld [vmem:[%s1 + $0x118] sm:$0xff]
  %v1033 = vld [vmem:[%s1 + $0x120] sm:$0xff]
  %v1034 = vld [vmem:[%s1 + $0x128] sm:$0xff]
  %v1035 = vld [vmem:[%s1 + $0x130] sm:$0xff]
  %v1036 = vld [vmem:[%s1 + $0x138] sm:$0xff]
  %v1037 = vld [vmem:[%s1 + $0x140] sm:$0xff]
  %v1038 = vld [vmem:[%s1 + $0x148] sm:$0xff]
  %v1039 = vld [vmem:[%s1 + $0x150] sm:$0xff]
  %v1040 = vld [vmem:[%s1 + $0x158] sm:$0xff]
  %v1041 = vld [vmem:[%s1 + $0x160] sm:$0xff]
  %v1042 = vld [vmem:[%s1 + $0x168] sm:$0xff]
  %v1043 = vld [vmem:[%s1 + $0x170] sm:$0xff]
  %v1044 = vld [vmem:[%s1 + $0x178] sm:$0xff]
  %v1045 = vld [vmem:[%s1 + $0x180] sm:$0xff]
  %v1046 = vld [vmem:[%s1 + $0x188] sm:$0xff]
  %v1047 = vld [vmem:[%s1 + $0x190] sm:$0xff]
  %v1048 = vld [vmem:[%s1 + $0x198] sm:$0xff]
  %v1049 = vld [vmem:[%s1 + $0x1a0] sm:$0xff]
  %v1050 = vld [vmem:[%s1 + $0x1a8] sm:$0xff]
  %v1051 = vld [vmem:[%s1 + $0x1b0] sm:$0xff]
  %v1052 = vld [vmem:[%s1 + $0x1b8] sm:$0xff]
  %v1053 = vld [vmem:[%s1 + $0x1c0] sm:$0xff]
  %v1054 = vld [vmem:[%s1 + $0x1c8] sm:$0xff]
  %v1055 = vld [vmem:[%s1 + $0x1d0] sm:$0xff]
  %v1056 = vld [vmem:[%s1 + $0x1d8] sm:$0xff]
  %v1057 = vld [vmem:[%s1 + $0x1e0] sm:$0xff]
  %v1058 = vld [vmem:[%s1 + $0x1e8] sm:$0xff]
  %v1059 = vld [vmem:[%s1 + $0x1f0] sm:$0xff]
  %v1060 = vld [vmem:[%s1 + $0x1f8] sm:$0xff]
  %s1061 = scalar_lea.vmem %s0, 128
  %v1062 = vld [vmem:[%s1061] sm:$0xff]
  %v1063 = vld [vmem:[%s1061 + $0x8] sm:$0xff]
  %v1064 = vld [vmem:[%s1061 + $0x10] sm:$0xff]
  %v1065 = vld [vmem:[%s1061 + $0x18] sm:$0xff]
  %1066 = vmatprep.subr.mxu0 %v998
  %1067 = vmatpush1.msra.mxu0 %v997
  %1068 = vmatprep.subr.mxu0 %v1002
  %1069 = vmatpush1.msra.mxu0 %v1001
  %1070 = vmatprep.subr.mxu0 %v1006
  %1071 = vmatpush1.msra.mxu0 %v1005
  %1072 = vmatprep.subr.mxu0 %v1010
  %1073 = vmatpush1.msra.mxu0 %v1009
  %1074 = vmatprep.subr.mxu0 %v1014
  %1075 = vmatpush1.msra.mxu0 %v1013
  %1076 = vmatprep.subr.mxu0 %v1018
  %1077 = vmatpush1.msra.mxu0 %v1017
  %1078 = vmatprep.subr.mxu0 %v1022
  %1079 = vmatpush1.msra.mxu0 %v1021
  %1080 = vmatprep.subr.mxu0 %v1026
  %1081 = vmatpush1.msra.mxu0 %v1025
  %1082 = vmatprep.subr.mxu0 %v1030
  %1083 = vmatpush1.msra.mxu0 %v1029
  %1084 = vmatprep.subr.mxu0 %v1034
  %1085 = vmatpush1.msra.mxu0 %v1033
  %1086 = vmatprep.subr.mxu0 %v1038
  %1087 = vmatpush1.msra.mxu0 %v1037
  %1088 = vmatprep.subr.mxu0 %v1042
  %1089 = vmatpush1.msra.mxu0 %v1041
  %1090 = vmatprep.subr.mxu0 %v1046
  %1091 = vmatpush1.msra.mxu0 %v1045
  %1092 = vmatprep.subr.mxu0 %v1050
  %1093 = vmatpush1.msra.mxu0 %v1049
  %1094 = vmatprep.subr.mxu0 %v1054
  %1095 = vmatpush1.msra.mxu0 %v1053
  %1096 = vmatprep.subr.mxu0 %v1058
  %1097 = vmatpush1.msra.mxu0 %v1057
  %1098 = vmatprep.subr.mxu0 0.0
  %1099 = vmatpush1.msra.mxu0 0.0
  %1100 = vmatprep.subr.mxu0 0.0
  %1101 = vmatpush1.msra.mxu0 0.0
  %1102 = vmatprep.subr.mxu0 0.0
  %1103 = vmatpush1.msra.mxu0 0.0
  %1104 = vmatprep.subr.mxu0 0.0
  %1105 = vmatpush1.msra.mxu0 0.0
  %1106 = vmatprep.subr.mxu0 0.0
  %1107 = vmatpush1.msra.mxu0 0.0
  %1108 = vmatprep.subr.mxu0 0.0
  %1109 = vmatpush1.msra.mxu0 0.0
  %1110 = vmatprep.subr.mxu0 0.0
  %1111 = vmatpush1.msra.mxu0 0.0
  %1112 = vmatprep.subr.mxu0 0.0
  %1113 = vmatpush1.msra.mxu0 0.0
  %1114 = vmatprep.subr.mxu0 0.0
  %1115 = vmatpush1.msra.mxu0 0.0
  %1116 = vmatprep.subr.mxu0 0.0
  %1117 = vmatpush1.msra.mxu0 0.0
  %1118 = vmatprep.subr.mxu0 0.0
  %1119 = vmatpush1.msra.mxu0 0.0
  %1120 = vmatprep.subr.mxu0 0.0
  %1121 = vmatpush1.msra.mxu0 0.0
  %1122 = vmatprep.subr.mxu0 0.0
  %1123 = vmatpush1.msra.mxu0 0.0
  %1124 = vmatprep.subr.mxu0 0.0
  %1125 = vmatpush1.msra.mxu0 0.0
  %1126 = vmatprep.subr.mxu0 0.0
  %1127 = vmatpush1.msra.mxu0 0.0
  %1128 = vmatprep.subr.mxu0 0.0
  %1129 = vmatpush1.msra.mxu0 0.0
  %1130 = vmatprep.mubr.f32.mxu0 0.0
  %1131 = vmatmul.mubr.f32.gmra.mrb[0].mxu0 %v996
  %v1132 = vpop.f32.mrb[0].mxu0
  %v1133 = vadd.f32 %v1062, %v1132
  %v1134 = vpop.f32.mrb[0].mxu0
  %v1135 = vadd.f32 %v1063, %v1134
  %1136 = vdwg.mxu0
  %1137 = vmatprep.subr.mxu0 %v1000
  %1138 = vmatpush1.msra.mxu0 %v999
  %1139 = vmatprep.subr.mxu0 %v1004
  %1140 = vmatpush1.msra.mxu0 %v1003
  %1141 = vmatprep.subr.mxu0 %v1008
  %1142 = vmatpush1.msra.mxu0 %v1007
  %1143 = vmatprep.subr.mxu0 %v1012
  %1144 = vmatpush1.msra.mxu0 %v1011
  %1145 = vmatprep.subr.mxu0 %v1016
  %1146 = vmatpush1.msra.mxu0 %v1015
  %1147 = vmatprep.subr.mxu0 %v1020
  %1148 = vmatpush1.msra.mxu0 %v1019
  %1149 = vmatprep.subr.mxu0 %v1024
  %1150 = vmatpush1.msra.mxu0 %v1023
  %1151 = vmatprep.subr.mxu0 %v1028
  %1152 = vmatpush1.msra.mxu0 %v1027
  %1153 = vmatprep.subr.mxu0 %v1032
  %1154 = vmatpush1.msra.mxu0 %v1031
  %1155 = vmatprep.subr.mxu0 %v1036
  %1156 = vmatpush1.msra.mxu0 %v1035
  %1157 = vmatprep.subr.mxu0 %v1040
  %1158 = vmatpush1.msra.mxu0 %v1039
  %1159 = vmatprep.subr.mxu0 %v1044
  %1160 = vmatpush1.msra.mxu0 %v1043
  %1161 = vmatprep.subr.mxu0 %v1048
  %1162 = vmatpush1.msra.mxu0 %v1047
  %1163 = vmatprep.subr.mxu0 %v1052
  %1164 = vmatpush1.msra.mxu0 %v1051
  %1165 = vmatprep.subr.mxu0 %v1056
  %1166 = vmatpush1.msra.mxu0 %v1055
  %1167 = vmatprep.subr.mxu0 %v1060
  %1168 = vmatpush1.msra.mxu0 %v1059
  %1169 = vmatprep.subr.mxu0 0.0
  %1170 = vmatpush1.msra.mxu0 0.0
  %1171 = vmatprep.subr.mxu0 0.0
  %1172 = vmatpush1.msra.mxu0 0.0
  %1173 = vmatprep.subr.mxu0 0.0
  %1174 = vmatpush1.msra.mxu0 0.0
  %1175 = vmatprep.subr.mxu0 0.0
  %1176 = vmatpush1.msra.mxu0 0.0
  %1177 = vmatprep.subr.mxu0 0.0
  %1178 = vmatpush1.msra.mxu0 0.0
  %1179 = vmatprep.subr.mxu0 0.0
  %1180 = vmatpush1.msra.mxu0 0.0
  %1181 = vmatprep.subr.mxu0 0.0
  %1182 = vmatpush1.msra.mxu0 0.0
  %1183 = vmatprep.subr.mxu0 0.0
  %1184 = vmatpush1.msra.mxu0 0.0
  %1185 = vmatprep.subr.mxu0 0.0
  %1186 = vmatpush1.msra.mxu0 0.0
  %1187 = vmatprep.subr.mxu0 0.0
  %1188 = vmatpush1.msra.mxu0 0.0
  %1189 = vmatprep.subr.mxu0 0.0
  %1190 = vmatpush1.msra.mxu0 0.0
  %1191 = vmatprep.subr.mxu0 0.0
  %1192 = vmatpush1.msra.mxu0 0.0
  %1193 = vmatprep.subr.mxu0 0.0
  %1194 = vmatpush1.msra.mxu0 0.0
  %1195 = vmatprep.subr.mxu0 0.0
  %1196 = vmatpush1.msra.mxu0 0.0
  %1197 = vmatprep.subr.mxu0 0.0
  %1198 = vmatpush1.msra.mxu0 0.0
  %1199 = vmatprep.subr.mxu0 0.0
  %1200 = vmatpush1.msra.mxu0 0.0
  %1201 = vmatprep.mubr.f32.mxu0 0.0
  %1202 = vmatmul.mubr.f32.gmra.mrb[0].mxu0 %v996
  %v1203 = vpop.f32.mrb[0].mxu0
  %v1204 = vadd.f32 %v1064, %v1203
  %v1205 = vpop.f32.mrb[0].mxu0
  %v1206 = vadd.f32 %v1065, %v1205
  %1207 = vdwg.mxu0
  %v1208 = vxor.u32 %v1133, 2147483648
  %v1209 = vmul.f32 %v1208, 1.442695
  %v1210 = vpow.pop %v1209
  %v1211 = vadd.f32 %v1210, 1.0
  %v1212 = vrcp.pop %v1211
  %v1213 = vmul.f32 1.0, %v1212
  %v1214 = vxor.u32 %v1135, 2147483648
  %v1215 = vmul.f32 %v1214, 1.442695
  %v1216 = vpow.pop %v1215
  %v1217 = vadd.f32 %v1216, 1.0
  %v1218 = vrcp.pop %v1217
  %v1219 = vmul.f32 1.0, %v1218
  %v1220 = vtanh.pop %v1204
  %v1221 = vxor.u32 %v1206, 2147483648
  %v1222 = vmul.f32 %v1221, 1.442695
  %v1223 = vpow.pop %v1222
  %v1224 = vadd.f32 %v1223, 1.0
  %v1225 = vrcp.pop %v1224
  %v1226 = vmul.f32 1.0, %v1225
  %v1227 = vld [vmem:[#allocation3] sm:$0xff]
  %v1228 = vmul.f32 %v1219, %v1227
  %v1229 = vmul.f32 %v1213, %v1220
  %v1230 = vadd.f32 %v1228, %v1229
  %v1231 = vtanh.pop %v1230
  %v1232 = vmul.f32 %v1226, %v1231
  %1233 = vst [vmem:[#allocation3] sm:$0xff] %v1230
  %1234 = vst [vmem:[#allocation2] sm:$0xff] %v1232
  %s1235 = scalar_lea.vmem [#allocation4], 32
  %1236 = vst [vmem:[%s1235] sm:$0xff] %v1232
  %v1237 = vld [vmem:[#allocation2] sm:$0xff]
  %v1238 = vld [vmem:[%s1] sm:$0xff]
  %v1239 = vld [vmem:[%s1 + $0x8] sm:$0xff]
  %v1240 = vld [vmem:[%s1 + $0x10] sm:$0xff]
  %v1241 = vld [vmem:[%s1 + $0x18] sm:$0xff]
  %v1242 = vld [vmem:[%s1 + $0x20] sm:$0xff]
  %v1243 = vld [vmem:[%s1 + $0x28] sm:$0xff]
  %v1244 = vld [vmem:[%s1 + $0x30] sm:$0xff]
  %v1245 = vld [vmem:[%s1 + $0x38] sm:$0xff]
  %v1246 = vld [vmem:[%s1 + $0x40] sm:$0xff]
  %v1247 = vld [vmem:[%s1 + $0x48] sm:$0xff]
  %v1248 = vld [vmem:[%s1 + $0x50] sm:$0xff]
  %v1249 = vld [vmem:[%s1 + $0x58] sm:$0xff]
  %v1250 = vld [vmem:[%s1 + $0x60] sm:$0xff]
  %v1251 = vld [vmem:[%s1 + $0x68] sm:$0xff]
  %v1252 = vld [vmem:[%s1 + $0x70] sm:$0xff]
  %v1253 = vld [vmem:[%s1 + $0x78] sm:$0xff]
  %v1254 = vld [vmem:[%s1 + $0x80] sm:$0xff]
  %v1255 = vld [vmem:[%s1 + $0x88] sm:$0xff]
  %v1256 = vld [vmem:[%s1 + $0x90] sm:$0xff]
  %v1257 = vld [vmem:[%s1 + $0x98] sm:$0xff]
  %v1258 = vld [vmem:[%s1 + $0xa0] sm:$0xff]
  %v1259 = vld [vmem:[%s1 + $0xa8] sm:$0xff]
  %v1260 = vld [vmem:[%s1 + $0xb0] sm:$0xff]
  %v1261 = vld [vmem:[%s1 + $0xb8] sm:$0xff]
  %v1262 = vld [vmem:[%s1 + $0xc0] sm:$0xff]
  %v1263 = vld [vmem:[%s1 + $0xc8] sm:$0xff]
  %v1264 = vld [vmem:[%s1 + $0xd0] sm:$0xff]
  %v1265 = vld [vmem:[%s1 + $0xd8] sm:$0xff]
  %v1266 = vld [vmem:[%s1 + $0xe0] sm:$0xff]
  %v1267 = vld [vmem:[%s1 + $0xe8] sm:$0xff]
  %v1268 = vld [vmem:[%s1 + $0xf0] sm:$0xff]
  %v1269 = vld [vmem:[%s1 + $0xf8] sm:$0xff]
  %v1270 = vld [vmem:[%s1 + $0x100] sm:$0xff]
  %v1271 = vld [vmem:[%s1 + $0x108] sm:$0xff]
  %v1272 = vld [vmem:[%s1 + $0x110] sm:$0xff]
  %v1273 = vld [vmem:[%s1 + $0x118] sm:$0xff]
  %v1274 = vld [vmem:[%s1 + $0x120] sm:$0xff]
  %v1275 = vld [vmem:[%s1 + $0x128] sm:$0xff]
  %v1276 = vld [vmem:[%s1 + $0x130] sm:$0xff]
  %v1277 = vld [vmem:[%s1 + $0x138] sm:$0xff]
  %v1278 = vld [vmem:[%s1 + $0x140] sm:$0xff]
  %v1279 = vld [vmem:[%s1 + $0x148] sm:$0xff]
  %v1280 = vld [vmem:[%s1 + $0x150] sm:$0xff]
  %v1281 = vld [vmem:[%s1 + $0x158] sm:$0xff]
  %v1282 = vld [vmem:[%s1 + $0x160] sm:$0xff]
  %v1283 = vld [vmem:[%s1 + $0x168] sm:$0xff]
  %v1284 = vld [vmem:[%s1 + $0x170] sm:$0xff]
  %v1285 = vld [vmem:[%s1 + $0x178] sm:$0xff]
  %v1286 = vld [vmem:[%s1 + $0x180] sm:$0xff]
  %v1287 = vld [vmem:[%s1 + $0x188] sm:$0xff]
  %v1288 = vld [vmem:[%s1 + $0x190] sm:$0xff]
  %v1289 = vld [vmem:[%s1 + $0x198] sm:$0xff]
  %v1290 = vld [vmem:[%s1 + $0x1a0] sm:$0xff]
  %v1291 = vld [vmem:[%s1 + $0x1a8] sm:$0xff]
  %v1292 = vld [vmem:[%s1 + $0x1b0] sm:$0xff]
  %v1293 = vld [vmem:[%s1 + $0x1b8] sm:$0xff]
  %v1294 = vld [vmem:[%s1 + $0x1c0] sm:$0xff]
  %v1295 = vld [vmem:[%s1 + $0x1c8] sm:$0xff]
  %v1296 = vld [vmem:[%s1 + $0x1d0] sm:$0xff]
  %v1297 = vld [vmem:[%s1 + $0x1d8] sm:$0xff]
  %v1298 = vld [vmem:[%s1 + $0x1e0] sm:$0xff]
  %v1299 = vld [vmem:[%s1 + $0x1e8] sm:$0xff]
  %v1300 = vld [vmem:[%s1 + $0x1f0] sm:$0xff]
  %v1301 = vld [vmem:[%s1 + $0x1f8] sm:$0xff]
  %s1302 = scalar_lea.vmem %s0, 160
  %v1303 = vld [vmem:[%s1302] sm:$0xff]
  %v1304 = vld [vmem:[%s1302 + $0x8] sm:$0xff]
  %v1305 = vld [vmem:[%s1302 + $0x10] sm:$0xff]
  %v1306 = vld [vmem:[%s1302 + $0x18] sm:$0xff]
  %1307 = vmatprep.subr.mxu0 %v1239
  %1308 = vmatpush1.msra.mxu0 %v1238
  %1309 = vmatprep.subr.mxu0 %v1243
  %1310 = vmatpush1.msra.mxu0 %v1242
  %1311 = vmatprep.subr.mxu0 %v1247
  %1312 = vmatpush1.msra.mxu0 %v1246
  %1313 = vmatprep.subr.mxu0 %v1251
  %1314 = vmatpush1.msra.mxu0 %v1250
  %1315 = vmatprep.subr.mxu0 %v1255
  %1316 = vmatpush1.msra.mxu0 %v1254
  %1317 = vmatprep.subr.mxu0 %v1259
  %1318 = vmatpush1.msra.mxu0 %v1258
  %1319 = vmatprep.subr.mxu0 %v1263
  %1320 = vmatpush1.msra.mxu0 %v1262
  %1321 = vmatprep.subr.mxu0 %v1267
  %1322 = vmatpush1.msra.mxu0 %v1266
  %1323 = vmatprep.subr.mxu0 %v1271
  %1324 = vmatpush1.msra.mxu0 %v1270
  %1325 = vmatprep.subr.mxu0 %v1275
  %1326 = vmatpush1.msra.mxu0 %v1274
  %1327 = vmatprep.subr.mxu0 %v1279
  %1328 = vmatpush1.msra.mxu0 %v1278
  %1329 = vmatprep.subr.mxu0 %v1283
  %1330 = vmatpush1.msra.mxu0 %v1282
  %1331 = vmatprep.subr.mxu0 %v1287
  %1332 = vmatpush1.msra.mxu0 %v1286
  %1333 = vmatprep.subr.mxu0 %v1291
  %1334 = vmatpush1.msra.mxu0 %v1290
  %1335 = vmatprep.subr.mxu0 %v1295
  %1336 = vmatpush1.msra.mxu0 %v1294
  %1337 = vmatprep.subr.mxu0 %v1299
  %1338 = vmatpush1.msra.mxu0 %v1298
  %1339 = vmatprep.subr.mxu0 0.0
  %1340 = vmatpush1.msra.mxu0 0.0
  %1341 = vmatprep.subr.mxu0 0.0
  %1342 = vmatpush1.msra.mxu0 0.0
  %1343 = vmatprep.subr.mxu0 0.0
  %1344 = vmatpush1.msra.mxu0 0.0
  %1345 = vmatprep.subr.mxu0 0.0
  %1346 = vmatpush1.msra.mxu0 0.0
  %1347 = vmatprep.subr.mxu0 0.0
  %1348 = vmatpush1.msra.mxu0 0.0
  %1349 = vmatprep.subr.mxu0 0.0
  %1350 = vmatpush1.msra.mxu0 0.0
  %1351 = vmatprep.subr.mxu0 0.0
  %1352 = vmatpush1.msra.mxu0 0.0
  %1353 = vmatprep.subr.mxu0 0.0
  %1354 = vmatpush1.msra.mxu0 0.0
  %1355 = vmatprep.subr.mxu0 0.0
  %1356 = vmatpush1.msra.mxu0 0.0
  %1357 = vmatprep.subr.mxu0 0.0
  %1358 = vmatpush1.msra.mxu0 0.0
  %1359 = vmatprep.subr.mxu0 0.0
  %1360 = vmatpush1.msra.mxu0 0.0
  %1361 = vmatprep.subr.mxu0 0.0
  %1362 = vmatpush1.msra.mxu0 0.0
  %1363 = vmatprep.subr.mxu0 0.0
  %1364 = vmatpush1.msra.mxu0 0.0
  %1365 = vmatprep.subr.mxu0 0.0
  %1366 = vmatpush1.msra.mxu0 0.0
  %1367 = vmatprep.subr.mxu0 0.0
  %1368 = vmatpush1.msra.mxu0 0.0
  %1369 = vmatprep.subr.mxu0 0.0
  %1370 = vmatpush1.msra.mxu0 0.0
  %1371 = vmatprep.mubr.f32.mxu0 0.0
  %1372 = vmatmul.mubr.f32.gmra.mrb[0].mxu0 %v1237
  %v1373 = vpop.f32.mrb[0].mxu0
  %v1374 = vadd.f32 %v1303, %v1373
  %v1375 = vpop.f32.mrb[0].mxu0
  %v1376 = vadd.f32 %v1304, %v1375
  %1377 = vdwg.mxu0
  %1378 = vmatprep.subr.mxu0 %v1241
  %1379 = vmatpush1.msra.mxu0 %v1240
  %1380 = vmatprep.subr.mxu0 %v1245
  %1381 = vmatpush1.msra.mxu0 %v1244
  %1382 = vmatprep.subr.mxu0 %v1249
  %1383 = vmatpush1.msra.mxu0 %v1248
  %1384 = vmatprep.subr.mxu0 %v1253
  %1385 = vmatpush1.msra.mxu0 %v1252
  %1386 = vmatprep.subr.mxu0 %v1257
  %1387 = vmatpush1.msra.mxu0 %v1256
  %1388 = vmatprep.subr.mxu0 %v1261
  %1389 = vmatpush1.msra.mxu0 %v1260
  %1390 = vmatprep.subr.mxu0 %v1265
  %1391 = vmatpush1.msra.mxu0 %v1264
  %1392 = vmatprep.subr.mxu0 %v1269
  %1393 = vmatpush1.msra.mxu0 %v1268
  %1394 = vmatprep.subr.mxu0 %v1273
  %1395 = vmatpush1.msra.mxu0 %v1272
  %1396 = vmatprep.subr.mxu0 %v1277
  %1397 = vmatpush1.msra.mxu0 %v1276
  %1398 = vmatprep.subr.mxu0 %v1281
  %1399 = vmatpush1.msra.mxu0 %v1280
  %1400 = vmatprep.subr.mxu0 %v1285
  %1401 = vmatpush1.msra.mxu0 %v1284
  %1402 = vmatprep.subr.mxu0 %v1289
  %1403 = vmatpush1.msra.mxu0 %v1288
  %1404 = vmatprep.subr.mxu0 %v1293
  %1405 = vmatpush1.msra.mxu0 %v1292
  %1406 = vmatprep.subr.mxu0 %v1297
  %1407 = vmatpush1.msra.mxu0 %v1296
  %1408 = vmatprep.subr.mxu0 %v1301
  %1409 = vmatpush1.msra.mxu0 %v1300
  %1410 = vmatprep.subr.mxu0 0.0
  %1411 = vmatpush1.msra.mxu0 0.0
  %1412 = vmatprep.subr.mxu0 0.0
  %1413 = vmatpush1.msra.mxu0 0.0
  %1414 = vmatprep.subr.mxu0 0.0
  %1415 = vmatpush1.msra.mxu0 0.0
  %1416 = vmatprep.subr.mxu0 0.0
  %1417 = vmatpush1.msra.mxu0 0.0
  %1418 = vmatprep.subr.mxu0 0.0
  %1419 = vmatpush1.msra.mxu0 0.0
  %1420 = vmatprep.subr.mxu0 0.0
  %1421 = vmatpush1.msra.mxu0 0.0
  %1422 = vmatprep.subr.mxu0 0.0
  %1423 = vmatpush1.msra.mxu0 0.0
  %1424 = vmatprep.subr.mxu0 0.0
  %1425 = vmatpush1.msra.mxu0 0.0
  %1426 = vmatprep.subr.mxu0 0.0
  %1427 = vmatpush1.msra.mxu0 0.0
  %1428 = vmatprep.subr.mxu0 0.0
  %1429 = vmatpush1.msra.mxu0 0.0
  %1430 = vmatprep.subr.mxu0 0.0
  %1431 = vmatpush1.msra.mxu0 0.0
  %1432 = vmatprep.subr.mxu0 0.0
  %1433 = vmatpush1.msra.mxu0 0.0
  %1434 = vmatprep.subr.mxu0 0.0
  %1435 = vmatpush1.msra.mxu0 0.0
  %1436 = vmatprep.subr.mxu0 0.0
  %1437 = vmatpush1.msra.mxu0 0.0
  %1438 = vmatprep.subr.mxu0 0.0
  %1439 = vmatpush1.msra.mxu0 0.0
  %1440 = vmatprep.subr.mxu0 0.0
  %1441 = vmatpush1.msra.mxu0 0.0
  %1442 = vmatprep.mubr.f32.mxu0 0.0
  %1443 = vmatmul.mubr.f32.gmra.mrb[0].mxu0 %v1237
  %v1444 = vpop.f32.mrb[0].mxu0
  %v1445 = vadd.f32 %v1305, %v1444
  %v1446 = vpop.f32.mrb[0].mxu0
  %v1447 = vadd.f32 %v1306, %v1446
  %1448 = vdwg.mxu0
  %v1449 = vxor.u32 %v1374, 2147483648
  %v1450 = vmul.f32 %v1449, 1.442695
  %v1451 = vpow.pop %v1450
  %v1452 = vadd.f32 %v1451, 1.0
  %v1453 = vrcp.pop %v1452
  %v1454 = vmul.f32 1.0, %v1453
  %v1455 = vxor.u32 %v1376, 2147483648
  %v1456 = vmul.f32 %v1455, 1.442695
  %v1457 = vpow.pop %v1456
  %v1458 = vadd.f32 %v1457, 1.0
  %v1459 = vrcp.pop %v1458
  %v1460 = vmul.f32 1.0, %v1459
  %v1461 = vtanh.pop %v1445
  %v1462 = vxor.u32 %v1447, 2147483648
  %v1463 = vmul.f32 %v1462, 1.442695
  %v1464 = vpow.pop %v1463
  %v1465 = vadd.f32 %v1464, 1.0
  %v1466 = vrcp.pop %v1465
  %v1467 = vmul.f32 1.0, %v1466
  %v1468 = vld [vmem:[#allocation3] sm:$0xff]
  %v1469 = vmul.f32 %v1460, %v1468
  %v1470 = vmul.f32 %v1454, %v1461
  %v1471 = vadd.f32 %v1469, %v1470
  %v1472 = vtanh.pop %v1471
  %v1473 = vmul.f32 %v1467, %v1472
  %1474 = vst [vmem:[#allocation3] sm:$0xff] %v1471
  %1475 = vst [vmem:[#allocation2] sm:$0xff] %v1473
  %s1476 = scalar_lea.vmem [#allocation4], 40
  %1477 = vst [vmem:[%s1476] sm:$0xff] %v1473
  %v1478 = vld [vmem:[#allocation2] sm:$0xff]
  %v1479 = vld [vmem:[%s1] sm:$0xff]
  %v1480 = vld [vmem:[%s1 + $0x8] sm:$0xff]
  %v1481 = vld [vmem:[%s1 + $0x10] sm:$0xff]
  %v1482 = vld [vmem:[%s1 + $0x18] sm:$0xff]
  %v1483 = vld [vmem:[%s1 + $0x20] sm:$0xff]
  %v1484 = vld [vmem:[%s1 + $0x28] sm:$0xff]
  %v1485 = vld [vmem:[%s1 + $0x30] sm:$0xff]
  %v1486 = vld [vmem:[%s1 + $0x38] sm:$0xff]
  %v1487 = vld [vmem:[%s1 + $0x40] sm:$0xff]
  %v1488 = vld [vmem:[%s1 + $0x48] sm:$0xff]
  %v1489 = vld [vmem:[%s1 + $0x50] sm:$0xff]
  %v1490 = vld [vmem:[%s1 + $0x58] sm:$0xff]
  %v1491 = vld [vmem:[%s1 + $0x60] sm:$0xff]
  %v1492 = vld [vmem:[%s1 + $0x68] sm:$0xff]
  %v1493 = vld [vmem:[%s1 + $0x70] sm:$0xff]
  %v1494 = vld [vmem:[%s1 + $0x78] sm:$0xff]
  %v1495 = vld [vmem:[%s1 + $0x80] sm:$0xff]
  %v1496 = vld [vmem:[%s1 + $0x88] sm:$0xff]
  %v1497 = vld [vmem:[%s1 + $0x90] sm:$0xff]
  %v1498 = vld [vmem:[%s1 + $0x98] sm:$0xff]
  %v1499 = vld [vmem:[%s1 + $0xa0] sm:$0xff]
  %v1500 = vld [vmem:[%s1 + $0xa8] sm:$0xff]
  %v1501 = vld [vmem:[%s1 + $0xb0] sm:$0xff]
  %v1502 = vld [vmem:[%s1 + $0xb8] sm:$0xff]
  %v1503 = vld [vmem:[%s1 + $0xc0] sm:$0xff]
  %v1504 = vld [vmem:[%s1 + $0xc8] sm:$0xff]
  %v1505 = vld [vmem:[%s1 + $0xd0] sm:$0xff]
  %v1506 = vld [vmem:[%s1 + $0xd8] sm:$0xff]
  %v1507 = vld [vmem:[%s1 + $0xe0] sm:$0xff]
  %v1508 = vld [vmem:[%s1 + $0xe8] sm:$0xff]
  %v1509 = vld [vmem:[%s1 + $0xf0] sm:$0xff]
  %v1510 = vld [vmem:[%s1 + $0xf8] sm:$0xff]
  %v1511 = vld [vmem:[%s1 + $0x100] sm:$0xff]
  %v1512 = vld [vmem:[%s1 + $0x108] sm:$0xff]
  %v1513 = vld [vmem:[%s1 + $0x110] sm:$0xff]
  %v1514 = vld [vmem:[%s1 + $0x118] sm:$0xff]
  %v1515 = vld [vmem:[%s1 + $0x120] sm:$0xff]
  %v1516 = vld [vmem:[%s1 + $0x128] sm:$0xff]
  %v1517 = vld [vmem:[%s1 + $0x130] sm:$0xff]
  %v1518 = vld [vmem:[%s1 + $0x138] sm:$0xff]
  %v1519 = vld [vmem:[%s1 + $0x140] sm:$0xff]
  %v1520 = vld [vmem:[%s1 + $0x148] sm:$0xff]
  %v1521 = vld [vmem:[%s1 + $0x150] sm:$0xff]
  %v1522 = vld [vmem:[%s1 + $0x158] sm:$0xff]
  %v1523 = vld [vmem:[%s1 + $0x160] sm:$0xff]
  %v1524 = vld [vmem:[%s1 + $0x168] sm:$0xff]
  %v1525 = vld [vmem:[%s1 + $0x170] sm:$0xff]
  %v1526 = vld [vmem:[%s1 + $0x178] sm:$0xff]
  %v1527 = vld [vmem:[%s1 + $0x180] sm:$0xff]
  %v1528 = vld [vmem:[%s1 + $0x188] sm:$0xff]
  %v1529 = vld [vmem:[%s1 + $0x190] sm:$0xff]
  %v1530 = vld [vmem:[%s1 + $0x198] sm:$0xff]
  %v1531 = vld [vmem:[%s1 + $0x1a0] sm:$0xff]
  %v1532 = vld [vmem:[%s1 + $0x1a8] sm:$0xff]
  %v1533 = vld [vmem:[%s1 + $0x1b0] sm:$0xff]
  %v1534 = vld [vmem:[%s1 + $0x1b8] sm:$0xff]
  %v1535 = vld [vmem:[%s1 + $0x1c0] sm:$0xff]
  %v1536 = vld [vmem:[%s1 + $0x1c8] sm:$0xff]
  %v1537 = vld [vmem:[%s1 + $0x1d0] sm:$0xff]
  %v1538 = vld [vmem:[%s1 + $0x1d8] sm:$0xff]
  %v1539 = vld [vmem:[%s1 + $0x1e0] sm:$0xff]
  %v1540 = vld [vmem:[%s1 + $0x1e8] sm:$0xff]
  %v1541 = vld [vmem:[%s1 + $0x1f0] sm:$0xff]
  %v1542 = vld [vmem:[%s1 + $0x1f8] sm:$0xff]
  %s1543 = scalar_lea.vmem %s0, 192
  %v1544 = vld [vmem:[%s1543] sm:$0xff]
  %v1545 = vld [vmem:[%s1543 + $0x8] sm:$0xff]
  %v1546 = vld [vmem:[%s1543 + $0x10] sm:$0xff]
  %v1547 = vld [vmem:[%s1543 + $0x18] sm:$0xff]
  %1548 = vmatprep.subr.mxu0 %v1480
  %1549 = vmatpush1.msra.mxu0 %v1479
  %1550 = vmatprep.subr.mxu0 %v1484
  %1551 = vmatpush1.msra.mxu0 %v1483
  %1552 = vmatprep.subr.mxu0 %v1488
  %1553 = vmatpush1.msra.mxu0 %v1487
  %1554 = vmatprep.subr.mxu0 %v1492
  %1555 = vmatpush1.msra.mxu0 %v1491
  %1556 = vmatprep.subr.mxu0 %v1496
  %1557 = vmatpush1.msra.mxu0 %v1495
  %1558 = vmatprep.subr.mxu0 %v1500
  %1559 = vmatpush1.msra.mxu0 %v1499
  %1560 = vmatprep.subr.mxu0 %v1504
  %1561 = vmatpush1.msra.mxu0 %v1503
  %1562 = vmatprep.subr.mxu0 %v1508
  %1563 = vmatpush1.msra.mxu0 %v1507
  %1564 = vmatprep.subr.mxu0 %v1512
  %1565 = vmatpush1.msra.mxu0 %v1511
  %1566 = vmatprep.subr.mxu0 %v1516
  %1567 = vmatpush1.msra.mxu0 %v1515
  %1568 = vmatprep.subr.mxu0 %v1520
  %1569 = vmatpush1.msra.mxu0 %v1519
  %1570 = vmatprep.subr.mxu0 %v1524
  %1571 = vmatpush1.msra.mxu0 %v1523
  %1572 = vmatprep.subr.mxu0 %v1528
  %1573 = vmatpush1.msra.mxu0 %v1527
  %1574 = vmatprep.subr.mxu0 %v1532
  %1575 = vmatpush1.msra.mxu0 %v1531
  %1576 = vmatprep.subr.mxu0 %v1536
  %1577 = vmatpush1.msra.mxu0 %v1535
  %1578 = vmatprep.subr.mxu0 %v1540
  %1579 = vmatpush1.msra.mxu0 %v1539
  %1580 = vmatprep.subr.mxu0 0.0
  %1581 = vmatpush1.msra.mxu0 0.0
  %1582 = vmatprep.subr.mxu0 0.0
  %1583 = vmatpush1.msra.mxu0 0.0
  %1584 = vmatprep.subr.mxu0 0.0
  %1585 = vmatpush1.msra.mxu0 0.0
  %1586 = vmatprep.subr.mxu0 0.0
  %1587 = vmatpush1.msra.mxu0 0.0
  %1588 = vmatprep.subr.mxu0 0.0
  %1589 = vmatpush1.msra.mxu0 0.0
  %1590 = vmatprep.subr.mxu0 0.0
  %1591 = vmatpush1.msra.mxu0 0.0
  %1592 = vmatprep.subr.mxu0 0.0
  %1593 = vmatpush1.msra.mxu0 0.0
  %1594 = vmatprep.subr.mxu0 0.0
  %1595 = vmatpush1.msra.mxu0 0.0
  %1596 = vmatprep.subr.mxu0 0.0
  %1597 = vmatpush1.msra.mxu0 0.0
  %1598 = vmatprep.subr.mxu0 0.0
  %1599 = vmatpush1.msra.mxu0 0.0
  %1600 = vmatprep.subr.mxu0 0.0
  %1601 = vmatpush1.msra.mxu0 0.0
  %1602 = vmatprep.subr.mxu0 0.0
  %1603 = vmatpush1.msra.mxu0 0.0
  %1604 = vmatprep.subr.mxu0 0.0
  %1605 = vmatpush1.msra.mxu0 0.0
  %1606 = vmatprep.subr.mxu0 0.0
  %1607 = vmatpush1.msra.mxu0 0.0
  %1608 = vmatprep.subr.mxu0 0.0
  %1609 = vmatpush1.msra.mxu0 0.0
  %1610 = vmatprep.subr.mxu0 0.0
  %1611 = vmatpush1.msra.mxu0 0.0
  %1612 = vmatprep.mubr.f32.mxu0 0.0
  %1613 = vmatmul.mubr.f32.gmra.mrb[0].mxu0 %v1478
  %v1614 = vpop.f32.mrb[0].mxu0
  %v1615 = vadd.f32 %v1544, %v1614
  %v1616 = vpop.f32.mrb[0].mxu0
  %v1617 = vadd.f32 %v1545, %v1616
  %1618 = vdwg.mxu0
  %1619 = vmatprep.subr.mxu0 %v1482
  %1620 = vmatpush1.msra.mxu0 %v1481
  %1621 = vmatprep.subr.mxu0 %v1486
  %1622 = vmatpush1.msra.mxu0 %v1485
  %1623 = vmatprep.subr.mxu0 %v1490
  %1624 = vmatpush1.msra.mxu0 %v1489
  %1625 = vmatprep.subr.mxu0 %v1494
  %1626 = vmatpush1.msra.mxu0 %v1493
  %1627 = vmatprep.subr.mxu0 %v1498
  %1628 = vmatpush1.msra.mxu0 %v1497
  %1629 = vmatprep.subr.mxu0 %v1502
  %1630 = vmatpush1.msra.mxu0 %v1501
  %1631 = vmatprep.subr.mxu0 %v1506
  %1632 = vmatpush1.msra.mxu0 %v1505
  %1633 = vmatprep.subr.mxu0 %v1510
  %1634 = vmatpush1.msra.mxu0 %v1509
  %1635 = vmatprep.subr.mxu0 %v1514
  %1636 = vmatpush1.msra.mxu0 %v1513
  %1637 = vmatprep.subr.mxu0 %v1518
  %1638 = vmatpush1.msra.mxu0 %v1517
  %1639 = vmatprep.subr.mxu0 %v1522
  %1640 = vmatpush1.msra.mxu0 %v1521
  %1641 = vmatprep.subr.mxu0 %v1526
  %1642 = vmatpush1.msra.mxu0 %v1525
  %1643 = vmatprep.subr.mxu0 %v1530
  %1644 = vmatpush1.msra.mxu0 %v1529
  %1645 = vmatprep.subr.mxu0 %v1534
  %1646 = vmatpush1.msra.mxu0 %v1533
  %1647 = vmatprep.subr.mxu0 %v1538
  %1648 = vmatpush1.msra.mxu0 %v1537
  %1649 = vmatprep.subr.mxu0 %v1542
  %1650 = vmatpush1.msra.mxu0 %v1541
  %1651 = vmatprep.subr.mxu0 0.0
  %1652 = vmatpush1.msra.mxu0 0.0
  %1653 = vmatprep.subr.mxu0 0.0
  %1654 = vmatpush1.msra.mxu0 0.0
  %1655 = vmatprep.subr.mxu0 0.0
  %1656 = vmatpush1.msra.mxu0 0.0
  %1657 = vmatprep.subr.mxu0 0.0
  %1658 = vmatpush1.msra.mxu0 0.0
  %1659 = vmatprep.subr.mxu0 0.0
  %1660 = vmatpush1.msra.mxu0 0.0
  %1661 = vmatprep.subr.mxu0 0.0
  %1662 = vmatpush1.msra.mxu0 0.0
  %1663 = vmatprep.subr.mxu0 0.0
  %1664 = vmatpush1.msra.mxu0 0.0
  %1665 = vmatprep.subr.mxu0 0.0
  %1666 = vmatpush1.msra.mxu0 0.0
  %1667 = vmatprep.subr.mxu0 0.0
  %1668 = vmatpush1.msra.mxu0 0.0
  %1669 = vmatprep.subr.mxu0 0.0
  %1670 = vmatpush1.msra.mxu0 0.0
  %1671 = vmatprep.subr.mxu0 0.0
  %1672 = vmatpush1.msra.mxu0 0.0
  %1673 = vmatprep.subr.mxu0 0.0
  %1674 = vmatpush1.msra.mxu0 0.0
  %1675 = vmatprep.subr.mxu0 0.0
  %1676 = vmatpush1.msra.mxu0 0.0
  %1677 = vmatprep.subr.mxu0 0.0
  %1678 = vmatpush1.msra.mxu0 0.0
  %1679 = vmatprep.subr.mxu0 0.0
  %1680 = vmatpush1.msra.mxu0 0.0
  %1681 = vmatprep.subr.mxu0 0.0
  %1682 = vmatpush1.msra.mxu0 0.0
  %1683 = vmatprep.mubr.f32.mxu0 0.0
  %1684 = vmatmul.mubr.f32.gmra.mrb[0].mxu0 %v1478
  %v1685 = vpop.f32.mrb[0].mxu0
  %v1686 = vadd.f32 %v1546, %v1685
  %v1687 = vpop.f32.mrb[0].mxu0
  %v1688 = vadd.f32 %v1547, %v1687
  %1689 = vdwg.mxu0
  %v1690 = vxor.u32 %v1615, 2147483648
  %v1691 = vmul.f32 %v1690, 1.442695
  %v1692 = vpow.pop %v1691
  %v1693 = vadd.f32 %v1692, 1.0
  %v1694 = vrcp.pop %v1693
  %v1695 = vmul.f32 1.0, %v1694
  %v1696 = vxor.u32 %v1617, 2147483648
  %v1697 = vmul.f32 %v1696, 1.442695
  %v1698 = vpow.pop %v1697
  %v1699 = vadd.f32 %v1698, 1.0
  %v1700 = vrcp.pop %v1699
  %v1701 = vmul.f32 1.0, %v1700
  %v1702 = vtanh.pop %v1686
  %v1703 = vxor.u32 %v1688, 2147483648
  %v1704 = vmul.f32 %v1703, 1.442695
  %v1705 = vpow.pop %v1704
  %v1706 = vadd.f32 %v1705, 1.0
  %v1707 = vrcp.pop %v1706
  %v1708 = vmul.f32 1.0, %v1707
  %v1709 = vld [vmem:[#allocation3] sm:$0xff]
  %v1710 = vmul.f32 %v1701, %v1709
  %v1711 = vmul.f32 %v1695, %v1702
  %v1712 = vadd.f32 %v1710, %v1711
  %v1713 = vtanh.pop %v1712
  %v1714 = vmul.f32 %v1708, %v1713
  %1715 = vst [vmem:[#allocation3] sm:$0xff] %v1712
  %1716 = vst [vmem:[#allocation2] sm:$0xff] %v1714
  %s1717 = scalar_lea.vmem [#allocation4], 48
  %1718 = vst [vmem:[%s1717] sm:$0xff] %v1714
  %v1719 = vld [vmem:[#allocation2] sm:$0xff]
  %v1720 = vld [vmem:[%s1] sm:$0xff]
  %v1721 = vld [vmem:[%s1 + $0x8] sm:$0xff]
  %v1722 = vld [vmem:[%s1 + $0x10] sm:$0xff]
  %v1723 = vld [vmem:[%s1 + $0x18] sm:$0xff]
  %v1724 = vld [vmem:[%s1 + $0x20] sm:$0xff]
  %v1725 = vld [vmem:[%s1 + $0x28] sm:$0xff]
  %v1726 = vld [vmem:[%s1 + $0x30] sm:$0xff]
  %v1727 = vld [vmem:[%s1 + $0x38] sm:$0xff]
  %v1728 = vld [vmem:[%s1 + $0x40] sm:$0xff]
  %v1729 = vld [vmem:[%s1 + $0x48] sm:$0xff]
  %v1730 = vld [vmem:[%s1 + $0x50] sm:$0xff]
  %v1731 = vld [vmem:[%s1 + $0x58] sm:$0xff]
  %v1732 = vld [vmem:[%s1 + $0x60] sm:$0xff]
  %v1733 = vld [vmem:[%s1 + $0x68] sm:$0xff]
  %v1734 = vld [vmem:[%s1 + $0x70] sm:$0xff]
  %v1735 = vld [vmem:[%s1 + $0x78] sm:$0xff]
  %v1736 = vld [vmem:[%s1 + $0x80] sm:$0xff]
  %v1737 = vld [vmem:[%s1 + $0x88] sm:$0xff]
  %v1738 = vld [vmem:[%s1 + $0x90] sm:$0xff]
  %v1739 = vld [vmem:[%s1 + $0x98] sm:$0xff]
  %v1740 = vld [vmem:[%s1 + $0xa0] sm:$0xff]
  %v1741 = vld [vmem:[%s1 + $0xa8] sm:$0xff]
  %v1742 = vld [vmem:[%s1 + $0xb0] sm:$0xff]
  %v1743 = vld [vmem:[%s1 + $0xb8] sm:$0xff]
  %v1744 = vld [vmem:[%s1 + $0xc0] sm:$0xff]
  %v1745 = vld [vmem:[%s1 + $0xc8] sm:$0xff]
  %v1746 = vld [vmem:[%s1 + $0xd0] sm:$0xff]
  %v1747 = vld [vmem:[%s1 + $0xd8] sm:$0xff]
  %v1748 = vld [vmem:[%s1 + $0xe0] sm:$0xff]
  %v1749 = vld [vmem:[%s1 + $0xe8] sm:$0xff]
  %v1750 = vld [vmem:[%s1 + $0xf0] sm:$0xff]
  %v1751 = vld [vmem:[%s1 + $0xf8] sm:$0xff]
  %v1752 = vld [vmem:[%s1 + $0x100] sm:$0xff]
  %v1753 = vld [vmem:[%s1 + $0x108] sm:$0xff]
  %v1754 = vld [vmem:[%s1 + $0x110] sm:$0xff]
  %v1755 = vld [vmem:[%s1 + $0x118] sm:$0xff]
  %v1756 = vld [vmem:[%s1 + $0x120] sm:$0xff]
  %v1757 = vld [vmem:[%s1 + $0x128] sm:$0xff]
  %v1758 = vld [vmem:[%s1 + $0x130] sm:$0xff]
  %v1759 = vld [vmem:[%s1 + $0x138] sm:$0xff]
  %v1760 = vld [vmem:[%s1 + $0x140] sm:$0xff]
  %v1761 = vld [vmem:[%s1 + $0x148] sm:$0xff]
  %v1762 = vld [vmem:[%s1 + $0x150] sm:$0xff]
  %v1763 = vld [vmem:[%s1 + $0x158] sm:$0xff]
  %v1764 = vld [vmem:[%s1 + $0x160] sm:$0xff]
  %v1765 = vld [vmem:[%s1 + $0x168] sm:$0xff]
  %v1766 = vld [vmem:[%s1 + $0x170] sm:$0xff]
  %v1767 = vld [vmem:[%s1 + $0x178] sm:$0xff]
  %v1768 = vld [vmem:[%s1 + $0x180] sm:$0xff]
  %v1769 = vld [vmem:[%s1 + $0x188] sm:$0xff]
  %v1770 = vld [vmem:[%s1 + $0x190] sm:$0xff]
  %v1771 = vld [vmem:[%s1 + $0x198] sm:$0xff]
  %v1772 = vld [vmem:[%s1 + $0x1a0] sm:$0xff]
  %v1773 = vld [vmem:[%s1 + $0x1a8] sm:$0xff]
  %v1774 = vld [vmem:[%s1 + $0x1b0] sm:$0xff]
  %v1775 = vld [vmem:[%s1 + $0x1b8] sm:$0xff]
  %v1776 = vld [vmem:[%s1 + $0x1c0] sm:$0xff]
  %v1777 = vld [vmem:[%s1 + $0x1c8] sm:$0xff]
  %v1778 = vld [vmem:[%s1 + $0x1d0] sm:$0xff]
  %v1779 = vld [vmem:[%s1 + $0x1d8] sm:$0xff]
  %v1780 = vld [vmem:[%s1 + $0x1e0] sm:$0xff]
  %v1781 = vld [vmem:[%s1 + $0x1e8] sm:$0xff]
  %v1782 = vld [vmem:[%s1 + $0x1f0] sm:$0xff]
  %v1783 = vld [vmem:[%s1 + $0x1f8] sm:$0xff]
  %s1784 = scalar_lea.vmem %s0, 224
  %v1785 = vld [vmem:[%s1784] sm:$0xff]
  %v1786 = vld [vmem:[%s1784 + $0x8] sm:$0xff]
  %v1787 = vld [vmem:[%s1784 + $0x10] sm:$0xff]
  %v1788 = vld [vmem:[%s1784 + $0x18] sm:$0xff]
  %1789 = vmatprep.subr.mxu0 %v1721
  %1790 = vmatpush1.msra.mxu0 %v1720
  %1791 = vmatprep.subr.mxu0 %v1725
  %1792 = vmatpush1.msra.mxu0 %v1724
  %1793 = vmatprep.subr.mxu0 %v1729
  %1794 = vmatpush1.msra.mxu0 %v1728
  %1795 = vmatprep.subr.mxu0 %v1733
  %1796 = vmatpush1.msra.mxu0 %v1732
  %1797 = vmatprep.subr.mxu0 %v1737
  %1798 = vmatpush1.msra.mxu0 %v1736
  %1799 = vmatprep.subr.mxu0 %v1741
  %1800 = vmatpush1.msra.mxu0 %v1740
  %1801 = vmatprep.subr.mxu0 %v1745
  %1802 = vmatpush1.msra.mxu0 %v1744
  %1803 = vmatprep.subr.mxu0 %v1749
  %1804 = vmatpush1.msra.mxu0 %v1748
  %1805 = vmatprep.subr.mxu0 %v1753
  %1806 = vmatpush1.msra.mxu0 %v1752
  %1807 = vmatprep.subr.mxu0 %v1757
  %1808 = vmatpush1.msra.mxu0 %v1756
  %1809 = vmatprep.subr.mxu0 %v1761
  %1810 = vmatpush1.msra.mxu0 %v1760
  %1811 = vmatprep.subr.mxu0 %v1765
  %1812 = vmatpush1.msra.mxu0 %v1764
  %1813 = vmatprep.subr.mxu0 %v1769
  %1814 = vmatpush1.msra.mxu0 %v1768
  %1815 = vmatprep.subr.mxu0 %v1773
  %1816 = vmatpush1.msra.mxu0 %v1772
  %1817 = vmatprep.subr.mxu0 %v1777
  %1818 = vmatpush1.msra.mxu0 %v1776
  %1819 = vmatprep.subr.mxu0 %v1781
  %1820 = vmatpush1.msra.mxu0 %v1780
  %1821 = vmatprep.subr.mxu0 0.0
  %1822 = vmatpush1.msra.mxu0 0.0
  %1823 = vmatprep.subr.mxu0 0.0
  %1824 = vmatpush1.msra.mxu0 0.0
  %1825 = vmatprep.subr.mxu0 0.0
  %1826 = vmatpush1.msra.mxu0 0.0
  %1827 = vmatprep.subr.mxu0 0.0
  %1828 = vmatpush1.msra.mxu0 0.0
  %1829 = vmatprep.subr.mxu0 0.0
  %1830 = vmatpush1.msra.mxu0 0.0
  %1831 = vmatprep.subr.mxu0 0.0
  %1832 = vmatpush1.msra.mxu0 0.0
  %1833 = vmatprep.subr.mxu0 0.0
  %1834 = vmatpush1.msra.mxu0 0.0
  %1835 = vmatprep.subr.mxu0 0.0
  %1836 = vmatpush1.msra.mxu0 0.0
  %1837 = vmatprep.subr.mxu0 0.0
  %1838 = vmatpush1.msra.mxu0 0.0
  %1839 = vmatprep.subr.mxu0 0.0
  %1840 = vmatpush1.msra.mxu0 0.0
  %1841 = vmatprep.subr.mxu0 0.0
  %1842 = vmatpush1.msra.mxu0 0.0
  %1843 = vmatprep.subr.mxu0 0.0
  %1844 = vmatpush1.msra.mxu0 0.0
  %1845 = vmatprep.subr.mxu0 0.0
  %1846 = vmatpush1.msra.mxu0 0.0
  %1847 = vmatprep.subr.mxu0 0.0
  %1848 = vmatpush1.msra.mxu0 0.0
  %1849 = vmatprep.subr.mxu0 0.0
  %1850 = vmatpush1.msra.mxu0 0.0
  %1851 = vmatprep.subr.mxu0 0.0
  %1852 = vmatpush1.msra.mxu0 0.0
  %1853 = vmatprep.mubr.f32.mxu0 0.0
  %1854 = vmatmul.mubr.f32.gmra.mrb[0].mxu0 %v1719
  %v1855 = vpop.f32.mrb[0].mxu0
  %v1856 = vadd.f32 %v1785, %v1855
  %v1857 = vpop.f32.mrb[0].mxu0
  %v1858 = vadd.f32 %v1786, %v1857
  %1859 = vdwg.mxu0
  %1860 = vmatprep.subr.mxu0 %v1723
  %1861 = vmatpush1.msra.mxu0 %v1722
  %1862 = vmatprep.subr.mxu0 %v1727
  %1863 = vmatpush1.msra.mxu0 %v1726
  %1864 = vmatprep.subr.mxu0 %v1731
  %1865 = vmatpush1.msra.mxu0 %v1730
  %1866 = vmatprep.subr.mxu0 %v1735
  %1867 = vmatpush1.msra.mxu0 %v1734
  %1868 = vmatprep.subr.mxu0 %v1739
  %1869 = vmatpush1.msra.mxu0 %v1738
  %1870 = vmatprep.subr.mxu0 %v1743
  %1871 = vmatpush1.msra.mxu0 %v1742
  %1872 = vmatprep.subr.mxu0 %v1747
  %1873 = vmatpush1.msra.mxu0 %v1746
  %1874 = vmatprep.subr.mxu0 %v1751
  %1875 = vmatpush1.msra.mxu0 %v1750
  %1876 = vmatprep.subr.mxu0 %v1755
  %1877 = vmatpush1.msra.mxu0 %v1754
  %1878 = vmatprep.subr.mxu0 %v1759
  %1879 = vmatpush1.msra.mxu0 %v1758
  %1880 = vmatprep.subr.mxu0 %v1763
  %1881 = vmatpush1.msra.mxu0 %v1762
  %1882 = vmatprep.subr.mxu0 %v1767
  %1883 = vmatpush1.msra.mxu0 %v1766
  %1884 = vmatprep.subr.mxu0 %v1771
  %1885 = vmatpush1.msra.mxu0 %v1770
  %1886 = vmatprep.subr.mxu0 %v1775
  %1887 = vmatpush1.msra.mxu0 %v1774
  %1888 = vmatprep.subr.mxu0 %v1779
  %1889 = vmatpush1.msra.mxu0 %v1778
  %1890 = vmatprep.subr.mxu0 %v1783
  %1891 = vmatpush1.msra.mxu0 %v1782
  %1892 = vmatprep.subr.mxu0 0.0
  %1893 = vmatpush1.msra.mxu0 0.0
  %1894 = vmatprep.subr.mxu0 0.0
  %1895 = vmatpush1.msra.mxu0 0.0
  %1896 = vmatprep.subr.mxu0 0.0
  %1897 = vmatpush1.msra.mxu0 0.0
  %1898 = vmatprep.subr.mxu0 0.0
  %1899 = vmatpush1.msra.mxu0 0.0
  %1900 = vmatprep.subr.mxu0 0.0
  %1901 = vmatpush1.msra.mxu0 0.0
  %1902 = vmatprep.subr.mxu0 0.0
  %1903 = vmatpush1.msra.mxu0 0.0
  %1904 = vmatprep.subr.mxu0 0.0
  %1905 = vmatpush1.msra.mxu0 0.0
  %1906 = vmatprep.subr.mxu0 0.0
  %1907 = vmatpush1.msra.mxu0 0.0
  %1908 = vmatprep.subr.mxu0 0.0
  %1909 = vmatpush1.msra.mxu0 0.0
  %1910 = vmatprep.subr.mxu0 0.0
  %1911 = vmatpush1.msra.mxu0 0.0
  %1912 = vmatprep.subr.mxu0 0.0
  %1913 = vmatpush1.msra.mxu0 0.0
  %1914 = vmatprep.subr.mxu0 0.0
  %1915 = vmatpush1.msra.mxu0 0.0
  %1916 = vmatprep.subr.mxu0 0.0
  %1917 = vmatpush1.msra.mxu0 0.0
  %1918 = vmatprep.subr.mxu0 0.0
  %1919 = vmatpush1.msra.mxu0 0.0
  %1920 = vmatprep.subr.mxu0 0.0
  %1921 = vmatpush1.msra.mxu0 0.0
  %1922 = vmatprep.subr.mxu0 0.0
  %1923 = vmatpush1.msra.mxu0 0.0
  %1924 = vmatprep.mubr.f32.mxu0 0.0
  %1925 = vmatmul.mubr.f32.gmra.mrb[0].mxu0 %v1719
  %v1926 = vpop.f32.mrb[0].mxu0
  %v1927 = vadd.f32 %v1787, %v1926
  %v1928 = vpop.f32.mrb[0].mxu0
  %v1929 = vadd.f32 %v1788, %v1928
  %1930 = vdwg.mxu0
  %v1931 = vxor.u32 %v1856, 2147483648
  %v1932 = vmul.f32 %v1931, 1.442695
  %v1933 = vpow.pop %v1932
  %v1934 = vadd.f32 %v1933, 1.0
  %v1935 = vrcp.pop %v1934
  %v1936 = vmul.f32 1.0, %v1935
  %v1937 = vxor.u32 %v1858, 2147483648
  %v1938 = vmul.f32 %v1937, 1.442695
  %v1939 = vpow.pop %v1938
  %v1940 = vadd.f32 %v1939, 1.0
  %v1941 = vrcp.pop %v1940
  %v1942 = vmul.f32 1.0, %v1941
  %v1943 = vtanh.pop %v1927
  %v1944 = vxor.u32 %v1929, 2147483648
  %v1945 = vmul.f32 %v1944, 1.442695
  %v1946 = vpow.pop %v1945
  %v1947 = vadd.f32 %v1946, 1.0
  %v1948 = vrcp.pop %v1947
  %v1949 = vmul.f32 1.0, %v1948
  %v1950 = vld [vmem:[#allocation3] sm:$0xff]
  %v1951 = vmul.f32 %v1942, %v1950
  %v1952 = vmul.f32 %v1936, %v1943
  %v1953 = vadd.f32 %v1951, %v1952
  %v1954 = vtanh.pop %v1953
  %v1955 = vmul.f32 %v1949, %v1954
  %1956 = vst [vmem:[#allocation3] sm:$0xff] %v1953
  %1957 = vst [vmem:[#allocation2] sm:$0xff] %v1955
  %s1958 = scalar_lea.vmem [#allocation4], 56
  %1959 = vst [vmem:[%s1958] sm:$0xff] %v1955
  %v1960 = vld [vmem:[#allocation4] sm:$0xff]
  %v1961 = vld [vmem:[#allocation4 + $0x8] sm:$0xff]
  %v1962 = vld [vmem:[#allocation4 + $0x10] sm:$0xff]
  %v1963 = vld [vmem:[#allocation4 + $0x18] sm:$0xff]
  %v1964 = vld [vmem:[#allocation4 + $0x20] sm:$0xff]
  %v1965 = vld [vmem:[#allocation4 + $0x28] sm:$0xff]
  %v1966 = vld [vmem:[#allocation4 + $0x30] sm:$0xff]
  %v1967 = vld [vmem:[#allocation4 + $0x38] sm:$0xff]
  %v1968 = vld [vmem:[%s4] sm:$0xff]
  %v1969 = vld [vmem:[%s4 + $0x8] sm:$0xff]
  %v1970 = vld [vmem:[%s4 + $0x10] sm:$0xff]
  %v1971 = vld [vmem:[%s4 + $0x18] sm:$0xff]
  %v1972 = vld [vmem:[%s4 + $0x20] sm:$0xff]
  %v1973 = vld [vmem:[%s4 + $0x28] sm:$0xff]
  %v1974 = vld [vmem:[%s4 + $0x30] sm:$0xff]
  %v1975 = vld [vmem:[%s4 + $0x38] sm:$0xff]
  %v1976 = vld [vmem:[%s4 + $0x40] sm:$0xff]
  %v1977 = vld [vmem:[%s4 + $0x48] sm:$0xff]
  %v1978 = vld [vmem:[%s4 + $0x50] sm:$0xff]
  %v1979 = vld [vmem:[%s4 + $0x58] sm:$0xff]
  %v1980 = vld [vmem:[%s4 + $0x60] sm:$0xff]
  %v1981 = vld [vmem:[%s4 + $0x68] sm:$0xff]
  %v1982 = vld [vmem:[%s4 + $0x70] sm:$0xff]
  %v1983 = vld [vmem:[%s4 + $0x78] sm:$0xff]
  %v1984 = vld [vmem:[%s5] sm:$0x1]
  %v1986 = vlaneseq
  %v1987 = vshrl.u32 %v1986, 7
  %v1988 = vsub.s32 0, %v1987
  %v1989 = vrot.slane %v1984, %v1988
  %1991 = vmatprep.subr.mxu0 0.0
  %1992 = vmatpush1.msra.mxu0 %v1968
  %1993 = vmatprep.subr.mxu0 0.0
  %1994 = vmatpush1.msra.mxu0 %v1969
  %1995 = vmatprep.subr.mxu0 0.0
  %1996 = vmatpush1.msra.mxu0 %v1970
  %1997 = vmatprep.subr.mxu0 0.0
  %1998 = vmatpush1.msra.mxu0 %v1971
  %1999 = vmatprep.subr.mxu0 0.0
  %2000 = vmatpush1.msra.mxu0 %v1972
  %2001 = vmatprep.subr.mxu0 0.0
  %2002 = vmatpush1.msra.mxu0 %v1973
  %2003 = vmatprep.subr.mxu0 0.0
  %2004 = vmatpush1.msra.mxu0 %v1974
  %2005 = vmatprep.subr.mxu0 0.0
  %2006 = vmatpush1.msra.mxu0 %v1975
  %2007 = vmatprep.subr.mxu0 0.0
  %2008 = vmatpush1.msra.mxu0 %v1976
  %2009 = vmatprep.subr.mxu0 0.0
  %2010 = vmatpush1.msra.mxu0 %v1977
  %2011 = vmatprep.subr.mxu0 0.0
  %2012 = vmatpush1.msra.mxu0 %v1978
  %2013 = vmatprep.subr.mxu0 0.0
  %2014 = vmatpush1.msra.mxu0 %v1979
  %2015 = vmatprep.subr.mxu0 0.0
  %2016 = vmatpush1.msra.mxu0 %v1980
  %2017 = vmatprep.subr.mxu0 0.0
  %2018 = vmatpush1.msra.mxu0 %v1981
  %2019 = vmatprep.subr.mxu0 0.0
  %2020 = vmatpush1.msra.mxu0 %v1982
  %2021 = vmatprep.subr.mxu0 0.0
  %2022 = vmatpush1.msra.mxu0 %v1983
  %2023 = vmatprep.subr.mxu0 0.0
  %2024 = vmatpush1.msra.mxu0 0.0
  %2025 = vmatprep.subr.mxu0 0.0
  %2026 = vmatpush1.msra.mxu0 0.0
  %2027 = vmatprep.subr.mxu0 0.0
  %2028 = vmatpush1.msra.mxu0 0.0
  %2029 = vmatprep.subr.mxu0 0.0
  %2030 = vmatpush1.msra.mxu0 0.0
  %2031 = vmatprep.subr.mxu0 0.0
  %2032 = vmatpush1.msra.mxu0 0.0
  %2033 = vmatprep.subr.mxu0 0.0
  %2034 = vmatpush1.msra.mxu0 0.0
  %2035 = vmatprep.subr.mxu0 0.0
  %2036 = vmatpush1.msra.mxu0 0.0
  %2037 = vmatprep.subr.mxu0 0.0
  %2038 = vmatpush1.msra.mxu0 0.0
  %2039 = vmatprep.subr.mxu0 0.0
  %2040 = vmatpush1.msra.mxu0 0.0
  %2041 = vmatprep.subr.mxu0 0.0
  %2042 = vmatpush1.msra.mxu0 0.0
  %2043 = vmatprep.subr.mxu0 0.0
  %2044 = vmatpush1.msra.mxu0 0.0
  %2045 = vmatprep.subr.mxu0 0.0
  %2046 = vmatpush1.msra.mxu0 0.0
  %2047 = vmatprep.subr.mxu0 0.0
  %2048 = vmatpush1.msra.mxu0 0.0
  %2049 = vmatprep.subr.mxu0 0.0
  %2050 = vmatpush1.msra.mxu0 0.0
  %2051 = vmatprep.subr.mxu0 0.0
  %2052 = vmatpush1.msra.mxu0 0.0
  %2053 = vmatprep.subr.mxu0 0.0
  %2054 = vmatpush1.msra.mxu0 0.0
  %2055 = vmatprep.mubr.f32.mxu0 0.0
  %2056 = vmatmul.mubr.f32.gmra.mrb[0].mxu0 %v1960
  %v2057 = vpop.f32.mrb[0].mxu0
  %v2058 = vadd.f32 %v1989, %v2057
  %v2059 = vpop.f32.mrb[0].mxu0
  %2060 = vmatprep.mubr.f32.mxu0 0.0
  %2061 = vmatmul.mubr.f32.gmra.mrb[0].mxu0 %v1961
  %v2062 = vpop.f32.mrb[0].mxu0
  %v2063 = vadd.f32 %v1989, %v2062
  %v2064 = vpop.f32.mrb[0].mxu0
  %2065 = vmatprep.mubr.f32.mxu0 0.0
  %2066 = vmatmul.mubr.f32.gmra.mrb[0].mxu0 %v1962
  %v2067 = vpop.f32.mrb[0].mxu0
  %v2068 = vadd.f32 %v1989, %v2067
  %v2069 = vpop.f32.mrb[0].mxu0
  %2070 = vmatprep.mubr.f32.mxu0 0.0
  %2071 = vmatmul.mubr.f32.gmra.mrb[0].mxu0 %v1963
  %v2072 = vpop.f32.mrb[0].mxu0
  %v2073 = vadd.f32 %v1989, %v2072
  %v2074 = vpop.f32.mrb[0].mxu0
  %2075 = vmatprep.mubr.f32.mxu0 0.0
  %2076 = vmatmul.mubr.f32.gmra.mrb[0].mxu0 %v1964
  %v2077 = vpop.f32.mrb[0].mxu0
  %v2078 = vadd.f32 %v1989, %v2077
  %v2079 = vpop.f32.mrb[0].mxu0
  %2080 = vmatprep.mubr.f32.mxu0 0.0
  %2081 = vmatmul.mubr.f32.gmra.mrb[0].mxu0 %v1965
  %v2082 = vpop.f32.mrb[0].mxu0
  %v2083 = vadd.f32 %v1989, %v2082
  %v2084 = vpop.f32.mrb[0].mxu0
  %2085 = vmatprep.mubr.f32.mxu0 0.0
  %2086 = vmatmul.mubr.f32.gmra.mrb[0].mxu0 %v1966
  %v2087 = vpop.f32.mrb[0].mxu0
  %v2088 = vadd.f32 %v1989, %v2087
  %v2089 = vpop.f32.mrb[0].mxu0
  %2090 = vmatprep.mubr.f32.mxu0 0.0
  %2091 = vmatmul.mubr.f32.gmra.mrb[0].mxu0 %v1967
  %v2092 = vpop.f32.mrb[0].mxu0
  %v2093 = vadd.f32 %v1989, %v2092
  %v2094 = vpop.f32.mrb[0].mxu0
  %2095 = vdwg.mxu0
  %2096 = vmax.xlane.f32.xlu0 %v2058
  %v2097 = vpop.xlane.xlu0 %2096
  %2098 = vmax.xlane.f32.xlu0 %v2063
  %v2099 = vpop.xlane.xlu0 %2098
  %2100 = vmax.xlane.f32.xlu0 %v2068
  %v2101 = vpop.xlane.xlu0 %2100
  %2102 = vmax.xlane.f32.xlu0 %v2073
  %v2103 = vpop.xlane.xlu0 %2102
  %2104 = vmax.xlane.f32.xlu0 %v2078
  %v2105 = vpop.xlane.xlu0 %2104
  %2106 = vmax.xlane.f32.xlu0 %v2083
  %v2107 = vpop.xlane.xlu0 %2106
  %2108 = vmax.xlane.f32.xlu0 %v2088
  %v2109 = vpop.xlane.xlu0 %2108
  %2110 = vmax.xlane.f32.xlu0 %v2093
  %v2111 = vpop.xlane.xlu0 %2110
  %v2112 = vsub.f32 %v2058, %v2097
  %v2113 = vsub.f32 %v2063, %v2099
  %v2114 = vsub.f32 %v2068, %v2101
  %v2115 = vsub.f32 %v2073, %v2103
  %v2116 = vsub.f32 %v2078, %v2105
  %v2117 = vsub.f32 %v2083, %v2107
  %v2118 = vsub.f32 %v2088, %v2109
  %v2119 = vsub.f32 %v2093, %v2111
  %v2120 = vmul.f32 %v2112, 1.442695
  %v2121 = vpow.pop %v2120
  %v2122 = vmul.f32 %v2113, 1.442695
  %v2123 = vpow.pop %v2122
  %v2124 = vmul.f32 %v2114, 1.442695
  %v2125 = vpow.pop %v2124
  %v2126 = vmul.f32 %v2115, 1.442695
  %v2127 = vpow.pop %v2126
  %v2128 = vmul.f32 %v2116, 1.442695
  %v2129 = vpow.pop %v2128
  %v2130 = vmul.f32 %v2117, 1.442695
  %v2131 = vpow.pop %v2130
  %v2132 = vmul.f32 %v2118, 1.442695
  %v2133 = vpow.pop %v2132
  %v2134 = vmul.f32 %v2119, 1.442695
  %v2135 = vpow.pop %v2134
  %2136 = vadd.xlane.f32.xlu0 %v2121
  %v2137 = vpop.xlane.xlu0 %2136
  %2138 = vadd.xlane.f32.xlu0 %v2123
  %v2139 = vpop.xlane.xlu0 %2138
  %2140 = vadd.xlane.f32.xlu0 %v2125
  %v2141 = vpop.xlane.xlu0 %2140
  %2142 = vadd.xlane.f32.xlu0 %v2127
  %v2143 = vpop.xlane.xlu0 %2142
  %2144 = vadd.xlane.f32.xlu0 %v2129
  %v2145 = vpop.xlane.xlu0 %2144
  %2146 = vadd.xlane.f32.xlu0 %v2131
  %v2147 = vpop.xlane.xlu0 %2146
  %2148 = vadd.xlane.f32.xlu0 %v2133
  %v2149 = vpop.xlane.xlu0 %2148
  %2150 = vadd.xlane.f32.xlu0 %v2135
  %v2151 = vpop.xlane.xlu0 %2150
  %v2152 = vlog2.pop %v2137
  %v2153 = vmul.f32 %v2152, 0.6931472
  %v2154 = vlog2.pop %v2139
  %v2155 = vmul.f32 %v2154, 0.6931472
  %v2156 = vlog2.pop %v2141
  %v2157 = vmul.f32 %v2156, 0.6931472
  %v2158 = vlog2.pop %v2143
  %v2159 = vmul.f32 %v2158, 0.6931472
  %v2160 = vlog2.pop %v2145
  %v2161 = vmul.f32 %v2160, 0.6931472
  %v2162 = vlog2.pop %v2147
  %v2163 = vmul.f32 %v2162, 0.6931472
  %v2164 = vlog2.pop %v2149
  %v2165 = vmul.f32 %v2164, 0.6931472
  %v2166 = vlog2.pop %v2151
  %v2167 = vmul.f32 %v2166, 0.6931472
  %v2168 = vsub.f32 %v2112, %v2153
  %v2169 = vsub.f32 %v2113, %v2155
  %v2170 = vsub.f32 %v2114, %v2157
  %v2171 = vsub.f32 %v2115, %v2159
  %v2172 = vsub.f32 %v2116, %v2161
  %v2173 = vsub.f32 %v2117, %v2163
  %v2174 = vsub.f32 %v2118, %v2165
  %v2175 = vsub.f32 %v2119, %v2167
  %2176 = vst [vmem:[%s6] sm:$0xff] %v2168
  %2177 = vst [vmem:[%s6 + $0x8] sm:$0xff] %v2169
  %2178 = vst [vmem:[%s6 + $0x10] sm:$0xff] %v2170
  %2179 = vst [vmem:[%s6 + $0x18] sm:$0xff] %v2171
  %2180 = vst [vmem:[%s6 + $0x20] sm:$0xff] %v2172
  %2181 = vst [vmem:[%s6 + $0x28] sm:$0xff] %v2173
  %2182 = vst [vmem:[%s6 + $0x30] sm:$0xff] %v2174
  %2183 = vst [vmem:[%s6 + $0x38] sm:$0xff] %v2175
  // Predicated region
  $region30: #{_lambda_.1} parent=0 // pred_check
    %p2184 = pneg %p26
  $region31: #{_lambda_.1} parent=0 // pred_check_branch
    %2186 = sbr.rel (%p2184) target = $region33
  $region32: #{_lambda_.1} parent=0 // pred_region
    %v2187 = vld [vmem:[#allocation2] sm:$0xff]
    %2188 = vst [vmem:[%s7] sm:$0xff] %v2187
    %v2189 = vld [vmem:[#allocation3] sm:$0xff]
    %2190 = vst [vmem:[%s8] sm:$0xff] %v2189
  $region33: #{_lambda_.1} parent=0 // pred_fallthru
    _
  // Predicated region
  $region34: #{_lambda_.1} parent=0 // pred_check
    _
  $region35: #{_lambda_.1} parent=0 // pred_check_branch
    %2192 = sbr.rel (0) target = $region37
  $region36: #{_lambda_.1} parent=0 // pred_region
    _
  $region37: #{_lambda_.1} parent=0 // pred_fallthru
    _
  // Predicated region
  $region38: #{_lambda_.1} parent=0 // pred_check
    _
  $region39: #{_lambda_.1} parent=0 // pred_check_branch
    %2194 = sbr.rel (0) target = $region41
  $region40: #{_lambda_.1} parent=0 // pred_region
    _
  $region41: #{_lambda_.1} parent=0 // pred_fallthru
    _
  // Predicated region
  $region42: #{_lambda_.1} parent=0 // pred_check
    _
  $region43: #{_lambda_.1} parent=0 // pred_check_branch
    %2196 = sbr.rel (0) target = $region45
  $region44: #{_lambda_.1} parent=0 // pred_region
    _
  $region45: #{_lambda_.1} parent=0 // pred_fallthru
    _
  // Predicated region
  $region46: #{_lambda_.1} parent=0 // pred_check
    _
  $region47: #{_lambda_.1} parent=0 // pred_check_branch
    %2198 = sbr.rel (0) target = $region49
  $region48: #{_lambda_.1} parent=0 // pred_region
    _
  $region49: #{_lambda_.1} parent=0 // pred_fallthru
    _
  // Predicated region
  $region50: #{_lambda_.1} parent=0 // pred_check
    _
  $region51: #{_lambda_.1} parent=0 // pred_check_branch
    %2200 = sbr.rel (0) target = $region53
  $region52: #{_lambda_.1} parent=0 // pred_region
    _
  $region53: #{_lambda_.1} parent=0 // pred_fallthru
    _
  // Predicated region
  $region54: #{_lambda_.1} parent=0 // pred_check
    _
  $region55: #{_lambda_.1} parent=0 // pred_check_branch
    %2202 = sbr.rel (0) target = $region57
  $region56: #{_lambda_.1} parent=0 // pred_region
    _
  $region57: #{_lambda_.1} parent=0 // pred_fallthru
    _

</llo_original>
